<compile_context>
chip_gen: v5e
topology: v5e:2x2
jax: 0.10.0
libtpu: 0.0.40
codegen_flags: <defaults>
</compile_context>

<pallas_src>
import jax
import jax.numpy as jnp
from jax.experimental import pallas as pl
from jax.experimental.pallas import tpu as pltpu

FILTER_SIZE = 3
PADDING = FILTER_SIZE - 1          # nn.Conv1d(padding=filter_size-1) -> 2
N_CONV_LAYERS = 4
LP_ALIGN = 16                      # per-layer row-stride granule (bf16 reshape granule)
TILE_ALIGN = 16                    # row-tile granule (bf16 output tiling granule)


def _round_up(x, m):
    return (x + m - 1) // m * m


def _layer_plan(s0):
    """Static (s_in, s_out, do_pool, lp) per conv layer, mirroring the PyTorch stack."""
    plan = []
    s_in = s0
    for l in range(N_CONV_LAYERS):
        s_out = s_in + 2 * PADDING - FILTER_SIZE + 1      # = s_in + 2
        do_pool = l <= 1
        lp = _round_up(s_in + 2 * PADDING, LP_ALIGN)      # per-layer flat row stride
        plan.append((s_in, s_out, do_pool, lp))
        s_in = s_out // 2 if do_pool else s_out           # MaxPool1d(2,2), floor
    return plan


def _multi_core_chip():
    """True on chips that shard a 'parallel' grid axis across >1 TensorCore."""
    try:
        kind = jax.devices()[0].device_kind.lower()
    except Exception:
        return False
    return any(t in kind for t in ('v7', '7x', 'v4', 'v5p'))


def sec_encoder_kernel(x_ref, wc_ref, bc_ref, wh_ref, bh_ref, out_ref,
                       pad_ref, pool_ref):
    tn, s0, ce = x_ref.shape
    pad_rows = pad_ref.shape[1]
    zdt = pad_ref.dtype                                   # bf16 activation scratch

    # Per-step scratch seeding: zero only the leading PADDING strip and the
    # rows past the embedding interior (instead of the whole scratch); the
    # interior is overwritten with the embeddings.  Every row the conv taps can
    # read is freshly written each step, so no cross-step / cross-core
    # (megacore) assumptions are needed.
    pad_ref[:, :PADDING, :] = jnp.zeros((tn, PADDING, ce), zdt)
    pad_ref[:, PADDING:PADDING + s0, :] = x_ref[...]
    pad_ref[:, PADDING + s0:, :] = jnp.zeros(
        (tn, pad_rows - PADDING - s0, ce), zdt)

    feat = None
    for l, (s_in, s_out, do_pool, lp) in enumerate(_layer_plan(s0)):
        # Conv1d(E, E, k=3, padding=2) as three accumulating tap matmuls
        # (bf16 operands straight from the scratch, f32 accumulation); no
        # materialized im2col concat and no per-tap casts.
        acc = None
        for j in range(FILTER_SIZE):
            tap = pad_ref[:, j:j + lp, :].reshape(tn * lp, ce)
            part = jnp.dot(tap, wc_ref[l * FILTER_SIZE + j],
                           preferred_element_type=jnp.float32)
            acc = part if acc is None else acc + part
        y = jnp.maximum(acc + bc_ref[pl.ds(l, 1), :], 0.0)   # bias + ReLU, f32
        y3 = y.reshape(tn, lp, ce)

        if l == N_CONV_LAYERS - 1:
            feat = jnp.max(y3[:, :s_out, :], axis=1)         # global max over seq
        else:
            if do_pool:                                      # MaxPool1d(2, 2)
                s_next = s_out // 2
                # Even/odd extraction stays on the strided-*load* path (sublane
                # strides are a load-unit feature); value-level stride-2 slices
                # / sublane-splitting reshapes do not lower reliably.  The f32
                # staging buffer is only ~s_out rows per sample.
                pool_ref[:, :s_out, :] = y3[:, :s_out, :]
                y_next = jnp.maximum(
                    pool_ref[:, pl.ds(0, s_next, stride=2), :],
                    pool_ref[:, pl.ds(1, s_next, stride=2), :])
            else:
                s_next = s_out
                y_next = y3[:, :s_out, :]
            # Single f32->bf16 cast per layer at the writeback; re-zero the
            # trailing PADDING rows the next layer's conv reads.
            pad_ref[:, PADDING:PADDING + s_next, :] = y_next.astype(zdt)
            pad_ref[:, PADDING + s_next:PADDING + s_next + PADDING, :] = (
                jnp.zeros((tn, PADDING, ce), zdt))

    # Fused heads (per lane group: columns [0:T] = trans_layer, column T =
    # trans_layer_score), block-diagonal over the PACK groups, lane-padded so
    # the output store is dense and unmasked.
    # TODO(synk): Dropout(0.25) on the score head is identity (eval semantics).
    h = jnp.dot(feat.astype(jnp.bfloat16), wh_ref[...],
                preferred_element_type=jnp.float32) + bh_ref[...]
    out_ref[...] = jnp.tanh(h).astype(out_ref.dtype)


def sec_encoder_forward(input_ids, params, B, L, *, row_tile=None):
    # Embedding gather (no clean tiled-matmul form) kept as plain-JAX glue.
    x = params['embed'][input_ids].astype(jnp.bfloat16)      # (N, S, E)
    N, S, E = x.shape
    T = params['trans_w'].shape[1]
    assert N == B * L

    # Lane-pack PACK batch rows into the channel axis so activations are
    # 128-lane dense; weights become block-diagonal over the groups.
    pack = 128 // E if (E <= 128 and 128 % E == 0) else 1
    ce = pack * E

    plan = _layer_plan(S)
    lp_max = max(lp for _, _, _, lp in plan)
    pool_rows = _round_up(max(s_out for _, s_out, dp, _ in plan if dp), 8)
    hp = _round_up(T + 1, 128)                               # fused head, lane padded

    # --- grid / row-tile policy --------------------------------------------
    R = -(-N // pack)                                        # rows, packed units
    # Per-packed-row VMEM estimate (bf16 scratch + f32 pool buffer +
    # double-buffered tiles + f32 temporaries); keeps per-step footprint far
    # below the 32 MiB scoped default on every generation, so no
    # vmem_limit_bytes override is needed.
    row_bytes = ce * (2 * (lp_max + PADDING) + 4 * pool_rows
                      + 2 * 2 * S + 4 * 4 * lp_max) + 2 * 2 * pack * hp
    budget = 10 * 1024 * 1024
    max_tile = max(TILE_ALIGN, budget // row_bytes // TILE_ALIGN * TILE_ALIGN)
    if row_tile is None:
        # Single grid step on single-TensorCore chips (v5e/v6e); >=2 steps on
        # megacore chips (v7x/v4/v5p) so both TensorCores get work.
        steps = 2 if (_multi_core_chip() and R > TILE_ALIGN) else 1
        row_tile = _round_up(-(-R // steps), TILE_ALIGN)
    row_tile = min(_round_up(row_tile, TILE_ALIGN), max_tile)
    r_pad = _round_up(R, row_tile)

    # Pack: (N, S, E) -> (r_pad, S, pack*E), group g = original row r*pack + g.
    n_rows = r_pad * pack
    if n_rows != N:
        x = jnp.pad(x, ((0, n_rows - N), (0, 0), (0, 0)))
    xp = x.reshape(r_pad, pack, S, E).transpose(0, 2, 1, 3).reshape(r_pad, S, ce)

    eye_p = jnp.eye(pack, dtype=jnp.float32)
    # Conv weights (layer, tap, E_in, E_out) -> block-diag (layer*tap, CE, CE).
    wc = jnp.einsum('ab,ltij->ltaibj', eye_p, params['conv_w']).reshape(
        N_CONV_LAYERS * FILTER_SIZE, ce, ce).astype(jnp.bfloat16)
    bc = jnp.tile(params['conv_b'], (1, pack)).astype(jnp.float32)    # (layers, CE)

    # Fused + lane-padded heads, block-diagonal over the packed groups.
    wh = jnp.concatenate([params['trans_w'], params['score_w']], axis=1)
    wh = jnp.pad(wh, ((0, 0), (0, hp - (T + 1))))
    wh = jnp.einsum('ab,ij->aibj', eye_p, wh).reshape(ce, pack * hp)
    wh = wh.astype(jnp.bfloat16)
    bh = jnp.concatenate([params['trans_b'], params['score_b']], axis=1)
    bh = jnp.pad(bh, ((0, 0), (0, hp - (T + 1))))
    bh = jnp.tile(bh, (1, pack)).astype(jnp.float32)

    fused = pl.pallas_call(
        sec_encoder_kernel,
        out_shape=jax.ShapeDtypeStruct((r_pad, pack * hp), jnp.bfloat16),
        grid=(r_pad // row_tile,),
        in_specs=[
            pl.BlockSpec((row_tile, S, ce), lambda i: (i, 0, 0)),   # packed embeddings
            pl.BlockSpec(wc.shape, lambda i: (0, 0, 0)),            # conv weights (full)
            pl.BlockSpec(bc.shape, lambda i: (0, 0)),               # conv biases (full)
            pl.BlockSpec(wh.shape, lambda i: (0, 0)),               # fused head W
            pl.BlockSpec(bh.shape, lambda i: (0, 0)),               # fused head b
        ],
        out_specs=pl.BlockSpec((row_tile, pack * hp), lambda i: (i, 0)),
        scratch_shapes=[
            pltpu.VMEM((row_tile, lp_max + PADDING, ce), jnp.bfloat16),  # activations
            pltpu.VMEM((row_tile, pool_rows, ce), jnp.float32),          # pool staging
        ],
        compiler_params=pltpu.CompilerParams(
            dimension_semantics=("parallel",)),
    )(xp, wc, bc, wh, bh)

    # Unpack: group g of packed row r -> original row r*pack + g; bf16 -> f32.
    flat = fused.reshape(r_pad * pack, hp)[:N].astype(jnp.float32)
    out = flat[:, :T].reshape(B, L, T)
    score = flat[:, T].reshape(B, L)
    return out, score


def sec_encoder_ref(input_ids, params, B, L):
    """Pure-JAX f32 reference mirroring the PyTorch forward (eval mode)."""
    x = params['embed'][input_ids].astype(jnp.float32)       # (N, S, E)
    wc, bc = params['conv_w'], params['conv_b']
    for l in range(N_CONV_LAYERS):
        s_in = x.shape[1]
        s_out = s_in + 2 * PADDING - FILTER_SIZE + 1
        xp = jnp.pad(x, ((0, 0), (PADDING, PADDING), (0, 0)))
        acc = bc[l][None, None, :]
        for j in range(FILTER_SIZE):
            acc = acc + jnp.einsum('nse,ef->nsf', xp[:, j:j + s_out, :], wc[l, j])
        y = jnp.maximum(acc, 0.0)
        if l <= 1:
            s_p = s_out // 2
            y = jnp.max(y[:, :2 * s_p].reshape(y.shape[0], s_p, 2, y.shape[2]), axis=2)
        x = y
    feat = jnp.max(x, axis=1)
    score = jnp.tanh(feat @ params['score_w'] + params['score_b'])
    out = jnp.tanh(feat @ params['trans_w'] + params['trans_b'])
    return out.reshape(B, L, -1), score.reshape(B, L)


if __name__ == "__main__":
    B, L = 4, 8                  # batch of titles, L strings per sample -> N = 32 rows
    SEQ = 8                      # padded/truncated token sequence length
    VOCAB = 64                   # tokenizer.vocab_size (synthetic)
    CONTEXT_EMB_DIM = 32         # config.context_emb_dim
    TITLE_EMB_DIM = 16           # config.title_emb_dim

    key = jax.random.PRNGKey(0)
    keys = jax.random.split(key, 8)
    kc = (CONTEXT_EMB_DIM * FILTER_SIZE) ** -0.5
    kl = CONTEXT_EMB_DIM ** -0.5
    params = {
        'embed':   jax.random.normal(keys[0], (VOCAB, CONTEXT_EMB_DIM), jnp.float32),
        'conv_w':  jax.random.uniform(keys[1], (N_CONV_LAYERS, FILTER_SIZE,
                                                CONTEXT_EMB_DIM, CONTEXT_EMB_DIM),
                                      jnp.float32, -kc, kc),
        'conv_b':  jax.random.uniform(keys[2], (N_CONV_LAYERS, CONTEXT_EMB_DIM),
                                      jnp.float32, -kc, kc),
        'trans_w': jax.random.uniform(keys[3], (CONTEXT_EMB_DIM, TITLE_EMB_DIM),
                                      jnp.float32, -kl, kl),
        'trans_b': jax.random.uniform(keys[4], (1, TITLE_EMB_DIM), jnp.float32, -kl, kl),
        'score_w': jax.random.uniform(keys[5], (CONTEXT_EMB_DIM, 1), jnp.float32, -kl, kl),
        'score_b': jax.random.uniform(keys[6], (1, 1), jnp.float32, -kl, kl),
    }
    # TODO(synk): HF tokenizer (strings -> ids) has no Pallas/JAX equivalent;
    # synthesize integer token ids directly.
    input_ids = jax.random.randint(keys[7], (B * L, SEQ), 0, VOCAB, jnp.int32)

    x_out, score_out = sec_encoder_forward(input_ids, params, B, L)
    jax.block_until_ready((x_out, score_out))

    x_ref, score_ref = sec_encoder_ref(input_ids, params, B, L)
    assert x_out.shape == (B, L, TITLE_EMB_DIM)
    assert score_out.shape == (B, L)
    # bf16 MXU operands / bf16 inter-layer activations vs. pure-f32 reference.
    assert jnp.allclose(x_out, x_ref, atol=2e-2, rtol=2e-2)
    assert jnp.allclose(score_out, score_ref, atol=2e-2, rtol=2e-2)
    print("KERNEL_OK")
</pallas_src>

<mosaic_0001>
module attributes {stable_mosaic.version = 11 : i64} {
  func.func @sec_encoder_kernel(%arg0: i32, %arg1: memref<16x8x128xbf16, #tpu.memory_space<vmem>>, %arg2: memref<12x128x128xbf16, #tpu.memory_space<vmem>>, %arg3: memref<4x128xf32, #tpu.memory_space<vmem>>, %arg4: memref<128x512xbf16, #tpu.memory_space<vmem>>, %arg5: memref<1x512xf32, #tpu.memory_space<vmem>>, %arg6: memref<16x512xbf16, #tpu.memory_space<vmem>>, %arg7: memref<16x18x128xbf16, #tpu.memory_space<vmem>>, %arg8: memref<16x16x128xf32, #tpu.memory_space<vmem>>) attributes {dimension_semantics = [#tpu.dimension_semantics<parallel>], iteration_bounds = array<i64: 1>, scalar_prefetch = 0 : i64, scratch_operands = 2 : i64, tpu.core_type = #tpu.core_type<tc>, window_params = [{transform_indices = @transform_0, window_bounds = array<i64: 16, 8, 128>}, {pipeline_mode = #tpu.pipeline_mode<synchronous>, transform_indices = @transform_1, window_bounds = array<i64: 12, 128, 128>}, {pipeline_mode = #tpu.pipeline_mode<synchronous>, transform_indices = @transform_2, window_bounds = array<i64: 4, 128>}, {pipeline_mode = #tpu.pipeline_mode<synchronous>, transform_indices = @transform_3, window_bounds = array<i64: 128, 512>}, {pipeline_mode = #tpu.pipeline_mode<synchronous>, transform_indices = @transform_4, window_bounds = array<i64: 1, 512>}, {transform_indices = @transform_5, window_bounds = array<i64: 16, 512>}]} {
    %cst = arith.constant 0.000000e+00 : bf16
    %0 = vector.broadcast %cst : bf16 to vector<16x2x128xbf16>
    %c0 = arith.constant 0 : index
    %c0_0 = arith.constant 0 : index
    %c0_1 = arith.constant 0 : index
    %1 = vector.load %arg7[%c0, %c0_0, %c0_1] : memref<16x18x128xbf16, #tpu.memory_space<vmem>>, vector<16x2x128xbf16>
    tpu.vector_store %arg7[%c0, %c0_0, %c0_1], %0 {strides = array<i32>} : memref<16x18x128xbf16, #tpu.memory_space<vmem>>, vector<16x2x128xbf16>,
    %c0_2 = arith.constant 0 : index
    %c0_3 = arith.constant 0 : index
    %c0_4 = arith.constant 0 : index
    %2 = vector.load %arg1[%c0_2, %c0_3, %c0_4] : memref<16x8x128xbf16, #tpu.memory_space<vmem>>, vector<16x8x128xbf16>
    %c0_5 = arith.constant 0 : index
    %c2 = arith.constant 2 : index
    %c0_6 = arith.constant 0 : index
    %3 = vector.load %arg7[%c0_5, %c2, %c0_6] : memref<16x18x128xbf16, #tpu.memory_space<vmem>>, vector<16x8x128xbf16>
    tpu.vector_store %arg7[%c0_5, %c2, %c0_6], %2 {strides = array<i32>} : memref<16x18x128xbf16, #tpu.memory_space<vmem>>, vector<16x8x128xbf16>,
    %cst_7 = arith.constant 0.000000e+00 : bf16
    %4 = vector.broadcast %cst_7 : bf16 to vector<16x8x128xbf16>
    %c0_8 = arith.constant 0 : index
    %c10 = arith.constant 10 : index
    %c0_9 = arith.constant 0 : index
    %5 = vector.load %arg7[%c0_8, %c10, %c0_9] : memref<16x18x128xbf16, #tpu.memory_space<vmem>>, vector<16x8x128xbf16>
    tpu.vector_store %arg7[%c0_8, %c10, %c0_9], %4 {strides = array<i32>} : memref<16x18x128xbf16, #tpu.memory_space<vmem>>, vector<16x8x128xbf16>,
    %c0_10 = arith.constant 0 : index
    %c0_11 = arith.constant 0 : index
    %c0_12 = arith.constant 0 : index
    %6 = vector.load %arg7[%c0_10, %c0_11, %c0_12] : memref<16x18x128xbf16, #tpu.memory_space<vmem>>, vector<16x16x128xbf16>
    %7 = vector.shape_cast %6 : vector<16x16x128xbf16> to vector<256x128xbf16>
    %c0_13 = arith.constant 0 : index
    %c0_14 = arith.constant 0 : index
    %c0_15 = arith.constant 0 : index
    %8 = vector.load %arg2[%c0_13, %c0_14, %c0_15] : memref<12x128x128xbf16, #tpu.memory_space<vmem>>, vector<1x128x128xbf16>
    %9 = vector.shape_cast %8 : vector<1x128x128xbf16> to vector<128x128xbf16>
    %cst_16 = arith.constant dense<0.000000e+00> : vector<256x128xf32>
    %10 = tpu.matmul %7, %9, %cst_16 {dimension_numbers = #tpu.dot_dimension_numbers<[1], [0], [0], [1], [0, 0, 1, 1], [], []>} : vector<256x128xbf16>, vector<128x128xbf16>, vector<256x128xf32> -> vector<256x128xf32>
    %c0_17 = arith.constant 0 : index
    %c1 = arith.constant 1 : index
    %c0_18 = arith.constant 0 : index
    %11 = vector.load %arg7[%c0_17, %c1, %c0_18] : memref<16x18x128xbf16, #tpu.memory_space<vmem>>, vector<16x16x128xbf16>
    %12 = vector.shape_cast %11 : vector<16x16x128xbf16> to vector<256x128xbf16>
    %c1_19 = arith.constant 1 : index
    %c0_20 = arith.constant 0 : index
    %c0_21 = arith.constant 0 : index
    %13 = vector.load %arg2[%c1_19, %c0_20, %c0_21] : memref<12x128x128xbf16, #tpu.memory_space<vmem>>, vector<1x128x128xbf16>
    %14 = vector.shape_cast %13 : vector<1x128x128xbf16> to vector<128x128xbf16>
    %cst_22 = arith.constant dense<0.000000e+00> : vector<256x128xf32>
    %15 = tpu.matmul %12, %14, %cst_22 {dimension_numbers = #tpu.dot_dimension_numbers<[1], [0], [0], [1], [0, 0, 1, 1], [], []>} : vector<256x128xbf16>, vector<128x128xbf16>, vector<256x128xf32> -> vector<256x128xf32>
    %16 = arith.addf %10, %15 : vector<256x128xf32>
    %c0_23 = arith.constant 0 : index
    %c2_24 = arith.constant 2 : index
    %c0_25 = arith.constant 0 : index
    %17 = vector.load %arg7[%c0_23, %c2_24, %c0_25] : memref<16x18x128xbf16, #tpu.memory_space<vmem>>, vector<16x16x128xbf16>
    %18 = vector.shape_cast %17 : vector<16x16x128xbf16> to vector<256x128xbf16>
    %c2_26 = arith.constant 2 : index
    %c0_27 = arith.constant 0 : index
    %c0_28 = arith.constant 0 : index
    %19 = vector.load %arg2[%c2_26, %c0_27, %c0_28] : memref<12x128x128xbf16, #tpu.memory_space<vmem>>, vector<1x128x128xbf16>
    %20 = vector.shape_cast %19 : vector<1x128x128xbf16> to vector<128x128xbf16>
    %cst_29 = arith.constant dense<0.000000e+00> : vector<256x128xf32>
    %21 = tpu.matmul %18, %20, %cst_29 {dimension_numbers = #tpu.dot_dimension_numbers<[1], [0], [0], [1], [0, 0, 1, 1], [], []>} : vector<256x128xbf16>, vector<128x128xbf16>, vector<256x128xf32> -> vector<256x128xf32>
    %22 = arith.addf %16, %21 : vector<256x128xf32>
    %c0_30 = arith.constant 0 : index
    %c0_31 = arith.constant 0 : index
    %23 = vector.load %arg3[%c0_30, %c0_31] : memref<4x128xf32, #tpu.memory_space<vmem>>, vector<1x128xf32>
    %24 = vector.broadcast %23 : vector<1x128xf32> to vector<256x128xf32>
    %25 = arith.addf %22, %24 : vector<256x128xf32>
    %cst_32 = arith.constant 0.000000e+00 : f32
    %26 = vector.broadcast %cst_32 : f32 to vector<256x128xf32>
    %27 = arith.maximumf %25, %26 : vector<256x128xf32>
    %28 = vector.shape_cast %27 : vector<256x128xf32> to vector<16x16x128xf32>
    %29 = vector.extract_strided_slice %28 {offsets = [0, 0, 0], sizes = [16, 10, 128], strides = [1, 1, 1]} : vector<16x16x128xf32> to vector<16x10x128xf32>
    %c0_33 = arith.constant 0 : index
    %c0_34 = arith.constant 0 : index
    %c0_35 = arith.constant 0 : index
    %30 = vector.load %arg8[%c0_33, %c0_34, %c0_35] : memref<16x16x128xf32, #tpu.memory_space<vmem>>, vector<16x10x128xf32>
    tpu.vector_store %arg8[%c0_33, %c0_34, %c0_35], %29 {strides = array<i32>} : memref<16x16x128xf32, #tpu.memory_space<vmem>>, vector<16x10x128xf32>,
    %c0_36 = arith.constant 0 : index
    %c0_37 = arith.constant 0 : index
    %c0_38 = arith.constant 0 : index
    %31 = tpu.strided_load %arg8[%c0_36, %c0_37, %c0_38] {strides = array<i32: 1, 2, 1>} : memref<16x16x128xf32, #tpu.memory_space<vmem>>, vector<16x5x128xf32>
    %c0_39 = arith.constant 0 : index
    %c1_40 = arith.constant 1 : index
    %c0_41 = arith.constant 0 : index
    %32 = tpu.strided_load %arg8[%c0_39, %c1_40, %c0_41] {strides = array<i32: 1, 2, 1>} : memref<16x16x128xf32, #tpu.memory_space<vmem>>, vector<16x5x128xf32>
    %33 = arith.maximumf %31, %32 : vector<16x5x128xf32>
    %34 = arith.truncf %33 : vector<16x5x128xf32> to vector<16x5x128xbf16>
    %c0_42 = arith.constant 0 : index
    %c2_43 = arith.constant 2 : index
    %c0_44 = arith.constant 0 : index
    %35 = vector.load %arg7[%c0_42, %c2_43, %c0_44] : memref<16x18x128xbf16, #tpu.memory_space<vmem>>, vector<16x5x128xbf16>
    tpu.vector_store %arg7[%c0_42, %c2_43, %c0_44], %34 {strides = array<i32>} : memref<16x18x128xbf16, #tpu.memory_space<vmem>>, vector<16x5x128xbf16>,
    %cst_45 = arith.constant 0.000000e+00 : bf16
    %36 = vector.broadcast %cst_45 : bf16 to vector<16x2x128xbf16>
    %c0_46 = arith.constant 0 : index
    %c7 = arith.constant 7 : index
    %c0_47 = arith.constant 0 : index
    %37 = vector.load %arg7[%c0_46, %c7, %c0_47] : memref<16x18x128xbf16, #tpu.memory_space<vmem>>, vector<16x2x128xbf16>
    tpu.vector_store %arg7[%c0_46, %c7, %c0_47], %36 {strides = array<i32>} : memref<16x18x128xbf16, #tpu.memory_space<vmem>>, vector<16x2x128xbf16>,
    %c0_48 = arith.constant 0 : index
    %c0_49 = arith.constant 0 : index
    %c0_50 = arith.constant 0 : index
    %38 = vector.load %arg7[%c0_48, %c0_49, %c0_50] : memref<16x18x128xbf16, #tpu.memory_space<vmem>>, vector<16x16x128xbf16>
    %39 = vector.shape_cast %38 : vector<16x16x128xbf16> to vector<256x128xbf16>
    %c3 = arith.constant 3 : index
    %c0_51 = arith.constant 0 : index
    %c0_52 = arith.constant 0 : index
    %40 = vector.load %arg2[%c3, %c0_51, %c0_52] : memref<12x128x128xbf16, #tpu.memory_space<vmem>>, vector<1x128x128xbf16>
    %41 = vector.shape_cast %40 : vector<1x128x128xbf16> to vector<128x128xbf16>
    %cst_53 = arith.constant dense<0.000000e+00> : vector<256x128xf32>
    %42 = tpu.matmul %39, %41, %cst_53 {dimension_numbers = #tpu.dot_dimension_numbers<[1], [0], [0], [1], [0, 0, 1, 1], [], []>} : vector<256x128xbf16>, vector<128x128xbf16>, vector<256x128xf32> -> vector<256x128xf32>
    %c0_54 = arith.constant 0 : index
    %c1_55 = arith.constant 1 : index
    %c0_56 = arith.constant 0 : index
    %43 = vector.load %arg7[%c0_54, %c1_55, %c0_56] : memref<16x18x128xbf16, #tpu.memory_space<vmem>>, vector<16x16x128xbf16>
    %44 = vector.shape_cast %43 : vector<16x16x128xbf16> to vector<256x128xbf16>
    %c4 = arith.constant 4 : index
    %c0_57 = arith.constant 0 : index
    %c0_58 = arith.constant 0 : index
    %45 = vector.load %arg2[%c4, %c0_57, %c0_58] : memref<12x128x128xbf16, #tpu.memory_space<vmem>>, vector<1x128x128xbf16>
    %46 = vector.shape_cast %45 : vector<1x128x128xbf16> to vector<128x128xbf16>
    %cst_59 = arith.constant dense<0.000000e+00> : vector<256x128xf32>
    %47 = tpu.matmul %44, %46, %cst_59 {dimension_numbers = #tpu.dot_dimension_numbers<[1], [0], [0], [1], [0, 0, 1, 1], [], []>} : vector<256x128xbf16>, vector<128x128xbf16>, vector<256x128xf32> -> vector<256x128xf32>
    %48 = arith.addf %42, %47 : vector<256x128xf32>
    %c0_60 = arith.constant 0 : index
    %c2_61 = arith.constant 2 : index
    %c0_62 = arith.constant 0 : index
    %49 = vector.load %arg7[%c0_60, %c2_61, %c0_62] : memref<16x18x128xbf16, #tpu.memory_space<vmem>>, vector<16x16x128xbf16>
    %50 = vector.shape_cast %49 : vector<16x16x128xbf16> to vector<256x128xbf16>
    %c5 = arith.constant 5 : index
    %c0_63 = arith.constant 0 : index
    %c0_64 = arith.constant 0 : index
    %51 = vector.load %arg2[%c5, %c0_63, %c0_64] : memref<12x128x128xbf16, #tpu.memory_space<vmem>>, vector<1x128x128xbf16>
    %52 = vector.shape_cast %51 : vector<1x128x128xbf16> to vector<128x128xbf16>
    %cst_65 = arith.constant dense<0.000000e+00> : vector<256x128xf32>
    %53 = tpu.matmul %50, %52, %cst_65 {dimension_numbers = #tpu.dot_dimension_numbers<[1], [0], [0], [1], [0, 0, 1, 1], [], []>} : vector<256x128xbf16>, vector<128x128xbf16>, vector<256x128xf32> -> vector<256x128xf32>
    %54 = arith.addf %48, %53 : vector<256x128xf32>
    %c1_66 = arith.constant 1 : index
    %c0_67 = arith.constant 0 : index
    %55 = vector.load %arg3[%c1_66, %c0_67] : memref<4x128xf32, #tpu.memory_space<vmem>>, vector<1x128xf32>
    %56 = vector.broadcast %55 : vector<1x128xf32> to vector<256x128xf32>
    %57 = arith.addf %54, %56 : vector<256x128xf32>
    %cst_68 = arith.constant 0.000000e+00 : f32
    %58 = vector.broadcast %cst_68 : f32 to vector<256x128xf32>
    %59 = arith.maximumf %57, %58 : vector<256x128xf32>
    %60 = vector.shape_cast %59 : vector<256x128xf32> to vector<16x16x128xf32>
    %61 = vector.extract_strided_slice %60 {offsets = [0, 0, 0], sizes = [16, 7, 128], strides = [1, 1, 1]} : vector<16x16x128xf32> to vector<16x7x128xf32>
    %c0_69 = arith.constant 0 : index
    %c0_70 = arith.constant 0 : index
    %c0_71 = arith.constant 0 : index
    %62 = vector.load %arg8[%c0_69, %c0_70, %c0_71] : memref<16x16x128xf32, #tpu.memory_space<vmem>>, vector<16x7x128xf32>
    tpu.vector_store %arg8[%c0_69, %c0_70, %c0_71], %61 {strides = array<i32>} : memref<16x16x128xf32, #tpu.memory_space<vmem>>, vector<16x7x128xf32>,
    %c0_72 = arith.constant 0 : index
    %c0_73 = arith.constant 0 : index
    %c0_74 = arith.constant 0 : index
    %63 = tpu.strided_load %arg8[%c0_72, %c0_73, %c0_74] {strides = array<i32: 1, 2, 1>} : memref<16x16x128xf32, #tpu.memory_space<vmem>>, vector<16x3x128xf32>
    %c0_75 = arith.constant 0 : index
    %c1_76 = arith.constant 1 : index
    %c0_77 = arith.constant 0 : index
    %64 = tpu.strided_load %arg8[%c0_75, %c1_76, %c0_77] {strides = array<i32: 1, 2, 1>} : memref<16x16x128xf32, #tpu.memory_space<vmem>>, vector<16x3x128xf32>
    %65 = arith.maximumf %63, %64 : vector<16x3x128xf32>
    %66 = arith.truncf %65 : vector<16x3x128xf32> to vector<16x3x128xbf16>
    %c0_78 = arith.constant 0 : index
    %c2_79 = arith.constant 2 : index
    %c0_80 = arith.constant 0 : index
    %67 = vector.load %arg7[%c0_78, %c2_79, %c0_80] : memref<16x18x128xbf16, #tpu.memory_space<vmem>>, vector<16x3x128xbf16>
    tpu.vector_store %arg7[%c0_78, %c2_79, %c0_80], %66 {strides = array<i32>} : memref<16x18x128xbf16, #tpu.memory_space<vmem>>, vector<16x3x128xbf16>,
    %cst_81 = arith.constant 0.000000e+00 : bf16
    %68 = vector.broadcast %cst_81 : bf16 to vector<16x2x128xbf16>
    %c0_82 = arith.constant 0 : index
    %c5_83 = arith.constant 5 : index
    %c0_84 = arith.constant 0 : index
    %69 = vector.load %arg7[%c0_82, %c5_83, %c0_84] : memref<16x18x128xbf16, #tpu.memory_space<vmem>>, vector<16x2x128xbf16>
    tpu.vector_store %arg7[%c0_82, %c5_83, %c0_84], %68 {strides = array<i32>} : memref<16x18x128xbf16, #tpu.memory_space<vmem>>, vector<16x2x128xbf16>,
    %c0_85 = arith.constant 0 : index
    %c0_86 = arith.constant 0 : index
    %c0_87 = arith.constant 0 : index
    %70 = vector.load %arg7[%c0_85, %c0_86, %c0_87] : memref<16x18x128xbf16, #tpu.memory_space<vmem>>, vector<16x16x128xbf16>
    %71 = vector.shape_cast %70 : vector<16x16x128xbf16> to vector<256x128xbf16>
    %c6 = arith.constant 6 : index
    %c0_88 = arith.constant 0 : index
    %c0_89 = arith.constant 0 : index
    %72 = vector.load %arg2[%c6, %c0_88, %c0_89] : memref<12x128x128xbf16, #tpu.memory_space<vmem>>, vector<1x128x128xbf16>
    %73 = vector.shape_cast %72 : vector<1x128x128xbf16> to vector<128x128xbf16>
    %cst_90 = arith.constant dense<0.000000e+00> : vector<256x128xf32>
    %74 = tpu.matmul %71, %73, %cst_90 {dimension_numbers = #tpu.dot_dimension_numbers<[1], [0], [0], [1], [0, 0, 1, 1], [], []>} : vector<256x128xbf16>, vector<128x128xbf16>, vector<256x128xf32> -> vector<256x128xf32>
    %c0_91 = arith.constant 0 : index
    %c1_92 = arith.constant 1 : index
    %c0_93 = arith.constant 0 : index
    %75 = vector.load %arg7[%c0_91, %c1_92, %c0_93] : memref<16x18x128xbf16, #tpu.memory_space<vmem>>, vector<16x16x128xbf16>
    %76 = vector.shape_cast %75 : vector<16x16x128xbf16> to vector<256x128xbf16>
    %c7_94 = arith.constant 7 : index
    %c0_95 = arith.constant 0 : index
    %c0_96 = arith.constant 0 : index
    %77 = vector.load %arg2[%c7_94, %c0_95, %c0_96] : memref<12x128x128xbf16, #tpu.memory_space<vmem>>, vector<1x128x128xbf16>
    %78 = vector.shape_cast %77 : vector<1x128x128xbf16> to vector<128x128xbf16>
    %cst_97 = arith.constant dense<0.000000e+00> : vector<256x128xf32>
    %79 = tpu.matmul %76, %78, %cst_97 {dimension_numbers = #tpu.dot_dimension_numbers<[1], [0], [0], [1], [0, 0, 1, 1], [], []>} : vector<256x128xbf16>, vector<128x128xbf16>, vector<256x128xf32> -> vector<256x128xf32>
    %80 = arith.addf %74, %79 : vector<256x128xf32>
    %c0_98 = arith.constant 0 : index
    %c2_99 = arith.constant 2 : index
    %c0_100 = arith.constant 0 : index
    %81 = vector.load %arg7[%c0_98, %c2_99, %c0_100] : memref<16x18x128xbf16, #tpu.memory_space<vmem>>, vector<16x16x128xbf16>
    %82 = vector.shape_cast %81 : vector<16x16x128xbf16> to vector<256x128xbf16>
    %c8 = arith.constant 8 : index
    %c0_101 = arith.constant 0 : index
    %c0_102 = arith.constant 0 : index
    %83 = vector.load %arg2[%c8, %c0_101, %c0_102] : memref<12x128x128xbf16, #tpu.memory_space<vmem>>, vector<1x128x128xbf16>
    %84 = vector.shape_cast %83 : vector<1x128x128xbf16> to vector<128x128xbf16>
    %cst_103 = arith.constant dense<0.000000e+00> : vector<256x128xf32>
    %85 = tpu.matmul %82, %84, %cst_103 {dimension_numbers = #tpu.dot_dimension_numbers<[1], [0], [0], [1], [0, 0, 1, 1], [], []>} : vector<256x128xbf16>, vector<128x128xbf16>, vector<256x128xf32> -> vector<256x128xf32>
    %86 = arith.addf %80, %85 : vector<256x128xf32>
    %c2_104 = arith.constant 2 : index
    %c0_105 = arith.constant 0 : index
    %87 = vector.load %arg3[%c2_104, %c0_105] : memref<4x128xf32, #tpu.memory_space<vmem>>, vector<1x128xf32>
    %88 = vector.broadcast %87 : vector<1x128xf32> to vector<256x128xf32>
    %89 = arith.addf %86, %88 : vector<256x128xf32>
    %cst_106 = arith.constant 0.000000e+00 : f32
    %90 = vector.broadcast %cst_106 : f32 to vector<256x128xf32>
    %91 = arith.maximumf %89, %90 : vector<256x128xf32>
    %92 = vector.shape_cast %91 : vector<256x128xf32> to vector<16x16x128xf32>
    %93 = vector.extract_strided_slice %92 {offsets = [0, 0, 0], sizes = [16, 5, 128], strides = [1, 1, 1]} : vector<16x16x128xf32> to vector<16x5x128xf32>
    %94 = arith.truncf %93 : vector<16x5x128xf32> to vector<16x5x128xbf16>
    %c0_107 = arith.constant 0 : index
    %c2_108 = arith.constant 2 : index
    %c0_109 = arith.constant 0 : index
    %95 = vector.load %arg7[%c0_107, %c2_108, %c0_109] : memref<16x18x128xbf16, #tpu.memory_space<vmem>>, vector<16x5x128xbf16>
    tpu.vector_store %arg7[%c0_107, %c2_108, %c0_109], %94 {strides = array<i32>} : memref<16x18x128xbf16, #tpu.memory_space<vmem>>, vector<16x5x128xbf16>,
    %cst_110 = arith.constant 0.000000e+00 : bf16
    %96 = vector.broadcast %cst_110 : bf16 to vector<16x2x128xbf16>
    %c0_111 = arith.constant 0 : index
    %c7_112 = arith.constant 7 : index
    %c0_113 = arith.constant 0 : index
    %97 = vector.load %arg7[%c0_111, %c7_112, %c0_113] : memref<16x18x128xbf16, #tpu.memory_space<vmem>>, vector<16x2x128xbf16>
    tpu.vector_store %arg7[%c0_111, %c7_112, %c0_113], %96 {strides = array<i32>} : memref<16x18x128xbf16, #tpu.memory_space<vmem>>, vector<16x2x128xbf16>,
    %c0_114 = arith.constant 0 : index
    %c0_115 = arith.constant 0 : index
    %c0_116 = arith.constant 0 : index
    %98 = vector.load %arg7[%c0_114, %c0_115, %c0_116] : memref<16x18x128xbf16, #tpu.memory_space<vmem>>, vector<16x16x128xbf16>
    %99 = vector.shape_cast %98 : vector<16x16x128xbf16> to vector<256x128xbf16>
    %c9 = arith.constant 9 : index
    %c0_117 = arith.constant 0 : index
    %c0_118 = arith.constant 0 : index
    %100 = vector.load %arg2[%c9, %c0_117, %c0_118] : memref<12x128x128xbf16, #tpu.memory_space<vmem>>, vector<1x128x128xbf16>
    %101 = vector.shape_cast %100 : vector<1x128x128xbf16> to vector<128x128xbf16>
    %cst_119 = arith.constant dense<0.000000e+00> : vector<256x128xf32>
    %102 = tpu.matmul %99, %101, %cst_119 {dimension_numbers = #tpu.dot_dimension_numbers<[1], [0], [0], [1], [0, 0, 1, 1], [], []>} : vector<256x128xbf16>, vector<128x128xbf16>, vector<256x128xf32> -> vector<256x128xf32>
    %c0_120 = arith.constant 0 : index
    %c1_121 = arith.constant 1 : index
    %c0_122 = arith.constant 0 : index
    %103 = vector.load %arg7[%c0_120, %c1_121, %c0_122] : memref<16x18x128xbf16, #tpu.memory_space<vmem>>, vector<16x16x128xbf16>
    %104 = vector.shape_cast %103 : vector<16x16x128xbf16> to vector<256x128xbf16>
    %c10_123 = arith.constant 10 : index
    %c0_124 = arith.constant 0 : index
    %c0_125 = arith.constant 0 : index
    %105 = vector.load %arg2[%c10_123, %c0_124, %c0_125] : memref<12x128x128xbf16, #tpu.memory_space<vmem>>, vector<1x128x128xbf16>
    %106 = vector.shape_cast %105 : vector<1x128x128xbf16> to vector<128x128xbf16>
    %cst_126 = arith.constant dense<0.000000e+00> : vector<256x128xf32>
    %107 = tpu.matmul %104, %106, %cst_126 {dimension_numbers = #tpu.dot_dimension_numbers<[1], [0], [0], [1], [0, 0, 1, 1], [], []>} : vector<256x128xbf16>, vector<128x128xbf16>, vector<256x128xf32> -> vector<256x128xf32>
    %108 = arith.addf %102, %107 : vector<256x128xf32>
    %c0_127 = arith.constant 0 : index
    %c2_128 = arith.constant 2 : index
    %c0_129 = arith.constant 0 : index
    %109 = vector.load %arg7[%c0_127, %c2_128, %c0_129] : memref<16x18x128xbf16, #tpu.memory_space<vmem>>, vector<16x16x128xbf16>
    %110 = vector.shape_cast %109 : vector<16x16x128xbf16> to vector<256x128xbf16>
    %c11 = arith.constant 11 : index
    %c0_130 = arith.constant 0 : index
    %c0_131 = arith.constant 0 : index
    %111 = vector.load %arg2[%c11, %c0_130, %c0_131] : memref<12x128x128xbf16, #tpu.memory_space<vmem>>, vector<1x128x128xbf16>
    %112 = vector.shape_cast %111 : vector<1x128x128xbf16> to vector<128x128xbf16>
    %cst_132 = arith.constant dense<0.000000e+00> : vector<256x128xf32>
    %113 = tpu.matmul %110, %112, %cst_132 {dimension_numbers = #tpu.dot_dimension_numbers<[1], [0], [0], [1], [0, 0, 1, 1], [], []>} : vector<256x128xbf16>, vector<128x128xbf16>, vector<256x128xf32> -> vector<256x128xf32>
    %114 = arith.addf %108, %113 : vector<256x128xf32>
    %c3_133 = arith.constant 3 : index
    %c0_134 = arith.constant 0 : index
    %115 = vector.load %arg3[%c3_133, %c0_134] : memref<4x128xf32, #tpu.memory_space<vmem>>, vector<1x128xf32>
    %116 = vector.broadcast %115 : vector<1x128xf32> to vector<256x128xf32>
    %117 = arith.addf %114, %116 : vector<256x128xf32>
    %cst_135 = arith.constant 0.000000e+00 : f32
    %118 = vector.broadcast %cst_135 : f32 to vector<256x128xf32>
    %119 = arith.maximumf %117, %118 : vector<256x128xf32>
    %120 = vector.shape_cast %119 : vector<256x128xf32> to vector<16x16x128xf32>
    %121 = vector.extract_strided_slice %120 {offsets = [0, 0, 0], sizes = [16, 7, 128], strides = [1, 1, 1]} : vector<16x16x128xf32> to vector<16x7x128xf32>
    %cst_136 = arith.constant dense<0xFF800000> : vector<16x128xf32>
    %122 = vector.multi_reduction <maximumf>, %121, %cst_136 [1] : vector<16x7x128xf32> to vector<16x128xf32>
    %123 = arith.truncf %122 : vector<16x128xf32> to vector<16x128xbf16>
    %c0_137 = arith.constant 0 : index
    %c0_138 = arith.constant 0 : index
    %124 = vector.load %arg4[%c0_137, %c0_138] : memref<128x512xbf16, #tpu.memory_space<vmem>>, vector<128x512xbf16>
    %cst_139 = arith.constant dense<0.000000e+00> : vector<16x512xf32>
    %125 = tpu.matmul %123, %124, %cst_139 {dimension_numbers = #tpu.dot_dimension_numbers<[1], [0], [0], [1], [0, 0, 1, 1], [], []>} : vector<16x128xbf16>, vector<128x512xbf16>, vector<16x512xf32> -> vector<16x512xf32>
    %c0_140 = arith.constant 0 : index
    %c0_141 = arith.constant 0 : index
    %126 = vector.load %arg5[%c0_140, %c0_141] : memref<1x512xf32, #tpu.memory_space<vmem>>, vector<1x512xf32>
    %127 = vector.broadcast %126 : vector<1x512xf32> to vector<16x512xf32>
    %128 = arith.addf %125, %127 : vector<16x512xf32>
    %129 = math.tanh %128 : vector<16x512xf32>
    %130 = arith.truncf %129 : vector<16x512xf32> to vector<16x512xbf16>
    %c0_142 = arith.constant 0 : index
    %c0_143 = arith.constant 0 : index
    %131 = vector.load %arg6[%c0_142, %c0_143] : memref<16x512xbf16, #tpu.memory_space<vmem>>, vector<16x512xbf16>
    tpu.vector_store %arg6[%c0_142, %c0_143], %130 {strides = array<i32>} : memref<16x512xbf16, #tpu.memory_space<vmem>>, vector<16x512xbf16>,
    return
  }
  func.func @transform_0(%arg0: i32) -> (i32, i32, i32) {
    %c0_i32 = arith.constant 0 : i32
    %c0_i32_0 = arith.constant 0 : i32
    %c0_i32_1 = arith.constant 0 : i32
    return %arg0, %c0_i32, %c0_i32_0 : i32, i32, i32
  }
  func.func @transform_1(%arg0: i32) -> (i32, i32, i32) {
    %c0_i32 = arith.constant 0 : i32
    %c0_i32_0 = arith.constant 0 : i32
    %c0_i32_1 = arith.constant 0 : i32
    %c0_i32_2 = arith.constant 0 : i32
    return %c0_i32, %c0_i32_0, %c0_i32_1 : i32, i32, i32
  }
  func.func @transform_2(%arg0: i32) -> (i32, i32) {
    %c0_i32 = arith.constant 0 : i32
    %c0_i32_0 = arith.constant 0 : i32
    %c0_i32_1 = arith.constant 0 : i32
    return %c0_i32, %c0_i32_0 : i32, i32
  }
  func.func @transform_3(%arg0: i32) -> (i32, i32) {
    %c0_i32 = arith.constant 0 : i32
    %c0_i32_0 = arith.constant 0 : i32
    %c0_i32_1 = arith.constant 0 : i32
    return %c0_i32, %c0_i32_0 : i32, i32
  }
  func.func @transform_4(%arg0: i32) -> (i32, i32) {
    %c0_i32 = arith.constant 0 : i32
    %c0_i32_0 = arith.constant 0 : i32
    %c0_i32_1 = arith.constant 0 : i32
    return %c0_i32, %c0_i32_0 : i32, i32
  }
  func.func @transform_5(%arg0: i32) -> (i32, i32) {
    %c0_i32 = arith.constant 0 : i32
    %c0_i32_0 = arith.constant 0 : i32
    return %arg0, %c0_i32 : i32, i32
  }
}

</mosaic_0001>

<llo_original>
// kernel: tpu_custom_call.1
$region0: #{tpu_custom_call.1}
  #allocation0 [shape = 'u32[]', space=smem, size = 0x4, offset = 0x4, fixed_abs, tag = 'smem constant byte address 0x4 - core index']
  #allocation1 [shape = 'u32[72,128]{1,0:T(1,128)}', space=vmem, size = 0x9000, scoped, tag = 'internal scratch']
  #allocation2 [shape = 'bf16[16,18,128]{2,1,0:T(8,128)(2,1)}', space=vmem, size = 0x18000, scoped, tag = 'scratch operand']
  #allocation3 [shape = 'f32[16,16,128]{2,1,0:T(8,128)}', space=vmem, size = 0x20000, scoped, tag = 'scratch operand']
  %s0 = inlined_call_operand.hbm [shape: bf16[16,8,128], index: 0, kind: input, shape index: {}]
  %s1 = inlined_call_operand.hbm [shape: bf16[12,128,128], index: 1, kind: input, shape index: {}]
  %s2 = inlined_call_operand.hbm [shape: f32[4,128], index: 2, kind: input, shape index: {}]
  %s3 = inlined_call_operand.hbm [shape: bf16[128,512], index: 3, kind: input, shape index: {}]
  %s4 = inlined_call_operand.hbm [shape: f32[1,512], index: 4, kind: input, shape index: {}]
  %s5 = inlined_call_operand.hbm [shape: bf16[16,512], index: 5, kind: output, shape index: {}]
  %s6 = sld [smem:[#allocation0]]
  $region50: #{tpu_custom_call.1} parent=0
    _
  %s8 = ssub.s32 1, %s6
  %s9 = scalar_select 0, %s8, %s6
  $region1: #{tpu_custom_call.1} parent=0
    #allocation4 [shape = 'u8[32768]{0}', space=vmem, size = 0x8000, scoped, tag = 'input window, operand 0, single buffered']
    #allocation5 [shape = 's32[1]{0}', space=sflag, size = 0x4, scoped, tag = 'scoped memory for tpu_custom_call.1']
    #allocation6 [shape = 's32[1]{0}', space=sflag, size = 0x4, scoped, tag = 'scoped memory for tpu_custom_call.1']
    #allocation7 [shape = 'u8[393216]{0}', space=vmem, size = 0x60000, scoped, tag = 'input window, operand 1, single buffered']
    #allocation8 [shape = 's32[1]{0}', space=sflag, size = 0x4, scoped, tag = 'scoped memory for tpu_custom_call.1']
    #allocation9 [shape = 'u8[2048]{0}', space=vmem, size = 0x800, scoped, tag = 'input window, operand 2, single buffered']
    #allocation10 [shape = 'u8[131072]{0}', space=vmem, size = 0x20000, scoped, tag = 'input window, operand 3, single buffered']
    #allocation11 [shape = 's32[1]{0}', space=sflag, size = 0x4, scoped, tag = 'scoped memory for tpu_custom_call.1']
    #allocation12 [shape = 'u8[2048]{0}', space=vmem, size = 0x800, scoped, tag = 'input window, operand 4, single buffered']
    #allocation13 [shape = 'u8[16384]{0}', space=vmem, size = 0x4000, scoped, tag = 'output window, operand 0, single buffered']
    %10 = vsyncpa [#allocation5], 0
    %11 = vsyncpa [#allocation8], 0
    %12 = vsyncpa [#allocation11], 0
    %13 = vsyncpa [#allocation6], 0
    // Predicated region
    $region2: #{tpu_custom_call.1} parent=1 // pred_check
      _
    $region3: #{tpu_custom_call.1} parent=1 // pred_check_branch
      %15 = sbr.rel (0) target = $region5
    $region4: #{tpu_custom_call.1} parent=1 // pred_region
      %17 = vsyncadd [#allocation5], 0
      %s18 = sshll.u32 %s0, 4
      %s19 = int_to_ptr.hbm [resolvable:$true] %s18
      %s20 = sshll.u32 [#allocation4], 4
      %s21 = int_to_ptr.vmem [resolvable:$true] %s20
      %26 = dma.hbm_to_vmem [thread:$0]  %s19, 1024, %s21, [#allocation5], 64, 64, 4
    $region5: #{tpu_custom_call.1} parent=1 // pred_fallthru
      _
    // Predicated region
    $region6: #{tpu_custom_call.1} parent=1 // pred_check
      _
    $region7: #{tpu_custom_call.1} parent=1 // pred_check_branch
      %28 = sbr.rel (0) target = $region9
    $region8: #{tpu_custom_call.1} parent=1 // pred_region
      %30 = vsyncadd [#allocation8], 0
      %s31 = sshll.u32 %s1, 4
      %s32 = int_to_ptr.hbm [resolvable:$true] %s31
      %s33 = sshll.u32 [#allocation7], 4
      %s34 = int_to_ptr.vmem [resolvable:$true] %s33
      %39 = dma.hbm_to_vmem [thread:$0]  %s32, 12288, %s34, [#allocation8], 64, 64, 4
    $region9: #{tpu_custom_call.1} parent=1 // pred_fallthru
      _
    // Predicated region
    $region10: #{tpu_custom_call.1} parent=1 // pred_check
      _
    $region11: #{tpu_custom_call.1} parent=1 // pred_check_branch
      %41 = sbr.rel (0) target = $region13
    $region12: #{tpu_custom_call.1} parent=1 // pred_region
      %43 = vsyncadd [#allocation8], 0
      %s45 = sshll.u32 %s2, 4
      %s46 = int_to_ptr.hbm [resolvable:$true] %s45
      %s47 = sshll.u32 [#allocation9], 4
      %s48 = int_to_ptr.vmem [resolvable:$true] %s47
      %50 = dma.hbm_to_vmem [thread:$0]  %s46, 64, %s48, [#allocation8]
    $region13: #{tpu_custom_call.1} parent=1 // pred_fallthru
      _
    // Predicated region
    $region14: #{tpu_custom_call.1} parent=1 // pred_check
      _
    $region15: #{tpu_custom_call.1} parent=1 // pred_check_branch
      %52 = sbr.rel (0) target = $region17
    $region16: #{tpu_custom_call.1} parent=1 // pred_region
      %54 = vsyncadd [#allocation11], 0
      %s55 = sshll.u32 %s3, 4
      %s56 = int_to_ptr.hbm [resolvable:$true] %s55
      %s57 = sshll.u32 [#allocation10], 4
      %s58 = int_to_ptr.vmem [resolvable:$true] %s57
      %63 = dma.hbm_to_vmem [thread:$0]  %s56, 4096, %s58, [#allocation11], 256, 256, 16
    $region17: #{tpu_custom_call.1} parent=1 // pred_fallthru
      _
    // Predicated region
    $region18: #{tpu_custom_call.1} parent=1 // pred_check
      _
    $region19: #{tpu_custom_call.1} parent=1 // pred_check_branch
      %65 = sbr.rel (0) target = $region21
    $region20: #{tpu_custom_call.1} parent=1 // pred_region
      %67 = vsyncadd [#allocation11], 0
      %s69 = sshll.u32 %s4, 4
      %s70 = int_to_ptr.hbm [resolvable:$true] %s69
      %s71 = sshll.u32 [#allocation12], 4
      %s72 = int_to_ptr.vmem [resolvable:$true] %s71
      %74 = dma.hbm_to_vmem [thread:$0]  %s70, 64, %s72, [#allocation11]
    $region21: #{tpu_custom_call.1} parent=1 // pred_fallthru
      _
    // Predicated region
    $region22: #{tpu_custom_call.1} parent=1 // pred_check
      _
    $region23: #{tpu_custom_call.1} parent=1 // pred_check_branch
      %76 = sbr.rel (0) target = $region25
    $region24: #{tpu_custom_call.1} parent=1 // pred_region
      %78 = dma.done [#allocation5], 1024
    $region25: #{tpu_custom_call.1} parent=1 // pred_fallthru
      _
    // Predicated region
    $region26: #{tpu_custom_call.1} parent=1 // pred_check
      _
    $region27: #{tpu_custom_call.1} parent=1 // pred_check_branch
      %80 = sbr.rel (0) target = $region29
    $region28: #{tpu_custom_call.1} parent=1 // pred_region
      %82 = dma.done [#allocation8], 12288
    $region29: #{tpu_custom_call.1} parent=1 // pred_fallthru
      _
    // Predicated region
    $region30: #{tpu_custom_call.1} parent=1 // pred_check
      _
    $region31: #{tpu_custom_call.1} parent=1 // pred_check_branch
      %84 = sbr.rel (0) target = $region33
    $region32: #{tpu_custom_call.1} parent=1 // pred_region
      %86 = dma.done [#allocation8], 64
    $region33: #{tpu_custom_call.1} parent=1 // pred_fallthru
      _
    // Predicated region
    $region34: #{tpu_custom_call.1} parent=1 // pred_check
      _
    $region35: #{tpu_custom_call.1} parent=1 // pred_check_branch
      %88 = sbr.rel (0) target = $region37
    $region36: #{tpu_custom_call.1} parent=1 // pred_region
      %90 = dma.done [#allocation11], 4096
    $region37: #{tpu_custom_call.1} parent=1 // pred_fallthru
      _
    // Predicated region
    $region38: #{tpu_custom_call.1} parent=1 // pred_check
      _
    $region39: #{tpu_custom_call.1} parent=1 // pred_check_branch
      %92 = sbr.rel (0) target = $region41
    $region40: #{tpu_custom_call.1} parent=1 // pred_region
      %94 = dma.done [#allocation11], 64
    $region41: #{tpu_custom_call.1} parent=1 // pred_fallthru
      _
    %96 = vst [vmem:[#allocation2] sm:$0x1] 0
    %97 = vst [vmem:[#allocation2 + $0xc] sm:$0x1] 0
    %98 = vst [vmem:[#allocation2 + $0x18] sm:$0x1] 0
    %99 = vst [vmem:[#allocation2 + $0x24] sm:$0x1] 0
    %100 = vst [vmem:[#allocation2 + $0x30] sm:$0x1] 0
    %101 = vst [vmem:[#allocation2 + $0x3c] sm:$0x1] 0
    %102 = vst [vmem:[#allocation2 + $0x48] sm:$0x1] 0
    %103 = vst [vmem:[#allocation2 + $0x54] sm:$0x1] 0
    %104 = vst [vmem:[#allocation2 + $0x60] sm:$0x1] 0
    %105 = vst [vmem:[#allocation2 + $0x6c] sm:$0x1] 0
    %106 = vst [vmem:[#allocation2 + $0x78] sm:$0x1] 0
    %107 = vst [vmem:[#allocation2 + $0x84] sm:$0x1] 0
    %108 = vst [vmem:[#allocation2 + $0x90] sm:$0x1] 0
    %109 = vst [vmem:[#allocation2 + $0x9c] sm:$0x1] 0
    %110 = vst [vmem:[#allocation2 + $0xa8] sm:$0x1] 0
    %111 = vst [vmem:[#allocation2 + $0xb4] sm:$0x1] 0
    %v112 = vld [vmem:[#allocation4] sm:$0xf]
    %v113 = vld [vmem:[#allocation4 + $0x4] sm:$0xf]
    %v114 = vld [vmem:[#allocation4 + $0x8] sm:$0xf]
    %v115 = vld [vmem:[#allocation4 + $0xc] sm:$0xf]
    %v116 = vld [vmem:[#allocation4 + $0x10] sm:$0xf]
    %v117 = vld [vmem:[#allocation4 + $0x14] sm:$0xf]
    %v118 = vld [vmem:[#allocation4 + $0x18] sm:$0xf]
    %v119 = vld [vmem:[#allocation4 + $0x1c] sm:$0xf]
    %v120 = vld [vmem:[#allocation4 + $0x20] sm:$0xf]
    %v121 = vld [vmem:[#allocation4 + $0x24] sm:$0xf]
    %v122 = vld [vmem:[#allocation4 + $0x28] sm:$0xf]
    %v123 = vld [vmem:[#allocation4 + $0x2c] sm:$0xf]
    %v124 = vld [vmem:[#allocation4 + $0x30] sm:$0xf]
    %v125 = vld [vmem:[#allocation4 + $0x34] sm:$0xf]
    %v126 = vld [vmem:[#allocation4 + $0x38] sm:$0xf]
    %v127 = vld [vmem:[#allocation4 + $0x3c] sm:$0xf]
    %v144 = vrot.slane %v112, 7
    %v145 = vrot.slane %v144, 4
    %v146 = vrot.slane %v113, 7
    %v147 = vrot.slane %v146, 4
    %v148 = vrot.slane %v114, 7
    %v149 = vrot.slane %v148, 4
    %v150 = vrot.slane %v115, 7
    %v151 = vrot.slane %v150, 4
    %v152 = vrot.slane %v116, 7
    %v153 = vrot.slane %v152, 4
    %v154 = vrot.slane %v117, 7
    %v155 = vrot.slane %v154, 4
    %v156 = vrot.slane %v118, 7
    %v157 = vrot.slane %v156, 4
    %v158 = vrot.slane %v119, 7
    %v159 = vrot.slane %v158, 4
    %v160 = vrot.slane %v120, 7
    %v161 = vrot.slane %v160, 4
    %v162 = vrot.slane %v121, 7
    %v163 = vrot.slane %v162, 4
    %v164 = vrot.slane %v122, 7
    %v165 = vrot.slane %v164, 4
    %v166 = vrot.slane %v123, 7
    %v167 = vrot.slane %v166, 4
    %v168 = vrot.slane %v124, 7
    %v169 = vrot.slane %v168, 4
    %v170 = vrot.slane %v125, 7
    %v171 = vrot.slane %v170, 4
    %v172 = vrot.slane %v126, 7
    %v173 = vrot.slane %v172, 4
    %v174 = vrot.slane %v127, 7
    %v175 = vrot.slane %v174, 4
    %208 = vst [vmem:[#allocation2] sm:$0xe] %v144
    %209 = vst [vmem:[#allocation2 + $0x4] sm:$0x1] %v145
    %210 = vst [vmem:[#allocation2 + $0xc] sm:$0xe] %v146
    %211 = vst [vmem:[#allocation2 + $0x10] sm:$0x1] %v147
    %212 = vst [vmem:[#allocation2 + $0x18] sm:$0xe] %v148
    %213 = vst [vmem:[#allocation2 + $0x1c] sm:$0x1] %v149
    %214 = vst [vmem:[#allocation2 + $0x24] sm:$0xe] %v150
    %215 = vst [vmem:[#allocation2 + $0x28] sm:$0x1] %v151
    %216 = vst [vmem:[#allocation2 + $0x30] sm:$0xe] %v152
    %217 = vst [vmem:[#allocation2 + $0x34] sm:$0x1] %v153
    %218 = vst [vmem:[#allocation2 + $0x3c] sm:$0xe] %v154
    %219 = vst [vmem:[#allocation2 + $0x40] sm:$0x1] %v155
    %220 = vst [vmem:[#allocation2 + $0x48] sm:$0xe] %v156
    %221 = vst [vmem:[#allocation2 + $0x4c] sm:$0x1] %v157
    %222 = vst [vmem:[#allocation2 + $0x54] sm:$0xe] %v158
    %223 = vst [vmem:[#allocation2 + $0x58] sm:$0x1] %v159
    %224 = vst [vmem:[#allocation2 + $0x60] sm:$0xe] %v160
    %225 = vst [vmem:[#allocation2 + $0x64] sm:$0x1] %v161
    %226 = vst [vmem:[#allocation2 + $0x6c] sm:$0xe] %v162
    %227 = vst [vmem:[#allocation2 + $0x70] sm:$0x1] %v163
    %228 = vst [vmem:[#allocation2 + $0x78] sm:$0xe] %v164
    %229 = vst [vmem:[#allocation2 + $0x7c] sm:$0x1] %v165
    %230 = vst [vmem:[#allocation2 + $0x84] sm:$0xe] %v166
    %231 = vst [vmem:[#allocation2 + $0x88] sm:$0x1] %v167
    %232 = vst [vmem:[#allocation2 + $0x90] sm:$0xe] %v168
    %233 = vst [vmem:[#allocation2 + $0x94] sm:$0x1] %v169
    %234 = vst [vmem:[#allocation2 + $0x9c] sm:$0xe] %v170
    %235 = vst [vmem:[#allocation2 + $0xa0] sm:$0x1] %v171
    %236 = vst [vmem:[#allocation2 + $0xa8] sm:$0xe] %v172
    %237 = vst [vmem:[#allocation2 + $0xac] sm:$0x1] %v173
    %238 = vst [vmem:[#allocation2 + $0xb4] sm:$0xe] %v174
    %239 = vst [vmem:[#allocation2 + $0xb8] sm:$0x1] %v175
    %240 = vst [vmem:[#allocation2 + $0x4] sm:$0xe] 0
    %241 = vst [vmem:[#allocation2 + $0x8] sm:$0x1] 0
    %242 = vst [vmem:[#allocation2 + $0x10] sm:$0xe] 0
    %243 = vst [vmem:[#allocation2 + $0x14] sm:$0x1] 0
    %244 = vst [vmem:[#allocation2 + $0x1c] sm:$0xe] 0
    %245 = vst [vmem:[#allocation2 + $0x20] sm:$0x1] 0
    %246 = vst [vmem:[#allocation2 + $0x28] sm:$0xe] 0
    %247 = vst [vmem:[#allocation2 + $0x2c] sm:$0x1] 0
    %248 = vst [vmem:[#allocation2 + $0x34] sm:$0xe] 0
    %249 = vst [vmem:[#allocation2 + $0x38] sm:$0x1] 0
    %250 = vst [vmem:[#allocation2 + $0x40] sm:$0xe] 0
    %251 = vst [vmem:[#allocation2 + $0x44] sm:$0x1] 0
    %252 = vst [vmem:[#allocation2 + $0x4c] sm:$0xe] 0
    %253 = vst [vmem:[#allocation2 + $0x50] sm:$0x1] 0
    %254 = vst [vmem:[#allocation2 + $0x58] sm:$0xe] 0
    %255 = vst [vmem:[#allocation2 + $0x5c] sm:$0x1] 0
    %256 = vst [vmem:[#allocation2 + $0x64] sm:$0xe] 0
    %257 = vst [vmem:[#allocation2 + $0x68] sm:$0x1] 0
    %258 = vst [vmem:[#allocation2 + $0x70] sm:$0xe] 0
    %259 = vst [vmem:[#allocation2 + $0x74] sm:$0x1] 0
    %260 = vst [vmem:[#allocation2 + $0x7c] sm:$0xe] 0
    %261 = vst [vmem:[#allocation2 + $0x80] sm:$0x1] 0
    %262 = vst [vmem:[#allocation2 + $0x88] sm:$0xe] 0
    %263 = vst [vmem:[#allocation2 + $0x8c] sm:$0x1] 0
    %264 = vst [vmem:[#allocation2 + $0x94] sm:$0xe] 0
    %265 = vst [vmem:[#allocation2 + $0x98] sm:$0x1] 0
    %266 = vst [vmem:[#allocation2 + $0xa0] sm:$0xe] 0
    %267 = vst [vmem:[#allocation2 + $0xa4] sm:$0x1] 0
    %268 = vst [vmem:[#allocation2 + $0xac] sm:$0xe] 0
    %269 = vst [vmem:[#allocation2 + $0xb0] sm:$0x1] 0
    %270 = vst [vmem:[#allocation2 + $0xb8] sm:$0xe] 0
    %271 = vst [vmem:[#allocation2 + $0xbc] sm:$0x1] 0
    %v272 = vld [vmem:[#allocation2] sm:$0xf]
    %v273 = vld [vmem:[#allocation2 + $0x4] sm:$0xf]
    %v274 = vld [vmem:[#allocation2 + $0xc] sm:$0xf]
    %v275 = vld [vmem:[#allocation2 + $0x10] sm:$0xf]
    %v276 = vld [vmem:[#allocation2 + $0x18] sm:$0xf]
    %v277 = vld [vmem:[#allocation2 + $0x1c] sm:$0xf]
    %v278 = vld [vmem:[#allocation2 + $0x24] sm:$0xf]
    %v279 = vld [vmem:[#allocation2 + $0x28] sm:$0xf]
    %v280 = vld [vmem:[#allocation2 + $0x30] sm:$0xf]
    %v281 = vld [vmem:[#allocation2 + $0x34] sm:$0xf]
    %v282 = vld [vmem:[#allocation2 + $0x3c] sm:$0xf]
    %v283 = vld [vmem:[#allocation2 + $0x40] sm:$0xf]
    %v284 = vld [vmem:[#allocation2 + $0x48] sm:$0xf]
    %v285 = vld [vmem:[#allocation2 + $0x4c] sm:$0xf]
    %v286 = vld [vmem:[#allocation2 + $0x54] sm:$0xf]
    %v287 = vld [vmem:[#allocation2 + $0x58] sm:$0xf]
    %v288 = vld [vmem:[#allocation2 + $0x60] sm:$0xf]
    %v289 = vld [vmem:[#allocation2 + $0x64] sm:$0xf]
    %v290 = vld [vmem:[#allocation2 + $0x6c] sm:$0xf]
    %v291 = vld [vmem:[#allocation2 + $0x70] sm:$0xf]
    %v292 = vld [vmem:[#allocation2 + $0x78] sm:$0xf]
    %v293 = vld [vmem:[#allocation2 + $0x7c] sm:$0xf]
    %v294 = vld [vmem:[#allocation2 + $0x84] sm:$0xf]
    %v295 = vld [vmem:[#allocation2 + $0x88] sm:$0xf]
    %v296 = vld [vmem:[#allocation2 + $0x90] sm:$0xf]
    %v297 = vld [vmem:[#allocation2 + $0x94] sm:$0xf]
    %v298 = vld [vmem:[#allocation2 + $0x9c] sm:$0xf]
    %v299 = vld [vmem:[#allocation2 + $0xa0] sm:$0xf]
    %v300 = vld [vmem:[#allocation2 + $0xa8] sm:$0xf]
    %v301 = vld [vmem:[#allocation2 + $0xac] sm:$0xf]
    %v302 = vld [vmem:[#allocation2 + $0xb4] sm:$0xf]
    %v303 = vld [vmem:[#allocation2 + $0xb8] sm:$0xf]
    %v304 = vld [vmem:[#allocation7] sm:$0xf]
    %v305 = vld [vmem:[#allocation7 + $0x4] sm:$0xf]
    %v306 = vld [vmem:[#allocation7 + $0x8] sm:$0xf]
    %v307 = vld [vmem:[#allocation7 + $0xc] sm:$0xf]
    %v308 = vld [vmem:[#allocation7 + $0x10] sm:$0xf]
    %v309 = vld [vmem:[#allocation7 + $0x14] sm:$0xf]
    %v310 = vld [vmem:[#allocation7 + $0x18] sm:$0xf]
    %v311 = vld [vmem:[#allocation7 + $0x1c] sm:$0xf]
    %v312 = vld [vmem:[#allocation7 + $0x20] sm:$0xf]
    %v313 = vld [vmem:[#allocation7 + $0x24] sm:$0xf]
    %v314 = vld [vmem:[#allocation7 + $0x28] sm:$0xf]
    %v315 = vld [vmem:[#allocation7 + $0x2c] sm:$0xf]
    %v316 = vld [vmem:[#allocation7 + $0x30] sm:$0xf]
    %v317 = vld [vmem:[#allocation7 + $0x34] sm:$0xf]
    %v318 = vld [vmem:[#allocation7 + $0x38] sm:$0xf]
    %v319 = vld [vmem:[#allocation7 + $0x3c] sm:$0xf]
    %v320 = vld [vmem:[#allocation2 + $0x8] sm:$0x1]
    %v321 = vld [vmem:[#allocation2 + $0x14] sm:$0x1]
    %v322 = vld [vmem:[#allocation2 + $0x20] sm:$0x1]
    %v323 = vld [vmem:[#allocation2 + $0x2c] sm:$0x1]
    %v324 = vld [vmem:[#allocation2 + $0x38] sm:$0x1]
    %v325 = vld [vmem:[#allocation2 + $0x44] sm:$0x1]
    %v326 = vld [vmem:[#allocation2 + $0x50] sm:$0x1]
    %v327 = vld [vmem:[#allocation2 + $0x5c] sm:$0x1]
    %v328 = vld [vmem:[#allocation2 + $0x68] sm:$0x1]
    %v329 = vld [vmem:[#allocation2 + $0x74] sm:$0x1]
    %v330 = vld [vmem:[#allocation2 + $0x80] sm:$0x1]
    %v331 = vld [vmem:[#allocation2 + $0x8c] sm:$0x1]
    %v332 = vld [vmem:[#allocation2 + $0x98] sm:$0x1]
    %v333 = vld [vmem:[#allocation2 + $0xa4] sm:$0x1]
    %v334 = vld [vmem:[#allocation2 + $0xb0] sm:$0x1]
    %v335 = vld [vmem:[#allocation2 + $0xbc] sm:$0x1]
    %vm336 = vsmask.f32 3328
    %vm337 = vsmask.f32 7440
    %vm338 = vmor %vm336, %vm337
    %v340 = vshrl.u32 %v272, 16
    %v342 = vrot.slane %v340, 4
    %v343 = vshll.u32 %v272, 16
    %v345 = vrot.slane %v343, 5
    %v346 = vor.u32 %v342, %v345
    %v347 = vrot.slane %v346, 4
    %v349 = vshll.u32 %v273, 16
    %v351 = vrot.slane %v349, 5
    %v352 = vsel %vm338, %v347, %v351
    %v353 = vshrl.u32 %v273, 16
    %v355 = vrot.slane %v353, 4
    %v356 = vor.u32 %v355, %v351
    %v357 = vrot.slane %v356, 4
    %v359 = vshll.u32 %v320, 16
    %v361 = vrot.slane %v359, 5
    %v362 = vsel %vm338, %v357, %v361
    %v364 = vshrl.u32 %v274, 16
    %v366 = vrot.slane %v364, 4
    %v367 = vshll.u32 %v274, 16
    %v369 = vrot.slane %v367, 5
    %v370 = vor.u32 %v366, %v369
    %v371 = vrot.slane %v370, 4
    %v373 = vshll.u32 %v275, 16
    %v375 = vrot.slane %v373, 5
    %v376 = vsel %vm338, %v371, %v375
    %v377 = vshrl.u32 %v275, 16
    %v379 = vrot.slane %v377, 4
    %v380 = vor.u32 %v379, %v375
    %v381 = vrot.slane %v380, 4
    %v383 = vshll.u32 %v321, 16
    %v385 = vrot.slane %v383, 5
    %v386 = vsel %vm338, %v381, %v385
    %v388 = vshrl.u32 %v276, 16
    %v390 = vrot.slane %v388, 4
    %v391 = vshll.u32 %v276, 16
    %v393 = vrot.slane %v391, 5
    %v394 = vor.u32 %v390, %v393
    %v395 = vrot.slane %v394, 4
    %v397 = vshll.u32 %v277, 16
    %v399 = vrot.slane %v397, 5
    %v400 = vsel %vm338, %v395, %v399
    %v401 = vshrl.u32 %v277, 16
    %v403 = vrot.slane %v401, 4
    %v404 = vor.u32 %v403, %v399
    %v405 = vrot.slane %v404, 4
    %v407 = vshll.u32 %v322, 16
    %v409 = vrot.slane %v407, 5
    %v410 = vsel %vm338, %v405, %v409
    %v412 = vshrl.u32 %v278, 16
    %v414 = vrot.slane %v412, 4
    %v415 = vshll.u32 %v278, 16
    %v417 = vrot.slane %v415, 5
    %v418 = vor.u32 %v414, %v417
    %v419 = vrot.slane %v418, 4
    %v421 = vshll.u32 %v279, 16
    %v423 = vrot.slane %v421, 5
    %v424 = vsel %vm338, %v419, %v423
    %v425 = vshrl.u32 %v279, 16
    %v427 = vrot.slane %v425, 4
    %v428 = vor.u32 %v427, %v423
    %v429 = vrot.slane %v428, 4
    %v431 = vshll.u32 %v323, 16
    %v433 = vrot.slane %v431, 5
    %v434 = vsel %vm338, %v429, %v433
    %v436 = vshrl.u32 %v280, 16
    %v438 = vrot.slane %v436, 4
    %v439 = vshll.u32 %v280, 16
    %v441 = vrot.slane %v439, 5
    %v442 = vor.u32 %v438, %v441
    %v443 = vrot.slane %v442, 4
    %v445 = vshll.u32 %v281, 16
    %v447 = vrot.slane %v445, 5
    %v448 = vsel %vm338, %v443, %v447
    %v449 = vshrl.u32 %v281, 16
    %v451 = vrot.slane %v449, 4
    %v452 = vor.u32 %v451, %v447
    %v453 = vrot.slane %v452, 4
    %v455 = vshll.u32 %v324, 16
    %v457 = vrot.slane %v455, 5
    %v458 = vsel %vm338, %v453, %v457
    %v460 = vshrl.u32 %v282, 16
    %v462 = vrot.slane %v460, 4
    %v463 = vshll.u32 %v282, 16
    %v465 = vrot.slane %v463, 5
    %v466 = vor.u32 %v462, %v465
    %v467 = vrot.slane %v466, 4
    %v469 = vshll.u32 %v283, 16
    %v471 = vrot.slane %v469, 5
    %v472 = vsel %vm338, %v467, %v471
    %v473 = vshrl.u32 %v283, 16
    %v475 = vrot.slane %v473, 4
    %v476 = vor.u32 %v475, %v471
    %v477 = vrot.slane %v476, 4
    %v479 = vshll.u32 %v325, 16
    %v481 = vrot.slane %v479, 5
    %v482 = vsel %vm338, %v477, %v481
    %v484 = vshrl.u32 %v284, 16
    %v486 = vrot.slane %v484, 4
    %v487 = vshll.u32 %v284, 16
    %v489 = vrot.slane %v487, 5
    %v490 = vor.u32 %v486, %v489
    %v491 = vrot.slane %v490, 4
    %v493 = vshll.u32 %v285, 16
    %v495 = vrot.slane %v493, 5
    %v496 = vsel %vm338, %v491, %v495
    %v497 = vshrl.u32 %v285, 16
    %v499 = vrot.slane %v497, 4
    %v500 = vor.u32 %v499, %v495
    %v501 = vrot.slane %v500, 4
    %v503 = vshll.u32 %v326, 16
    %v505 = vrot.slane %v503, 5
    %v506 = vsel %vm338, %v501, %v505
    %v508 = vshrl.u32 %v286, 16
    %v510 = vrot.slane %v508, 4
    %v511 = vshll.u32 %v286, 16
    %v513 = vrot.slane %v511, 5
    %v514 = vor.u32 %v510, %v513
    %v515 = vrot.slane %v514, 4
    %v517 = vshll.u32 %v287, 16
    %v519 = vrot.slane %v517, 5
    %v520 = vsel %vm338, %v515, %v519
    %v521 = vshrl.u32 %v287, 16
    %v523 = vrot.slane %v521, 4
    %v524 = vor.u32 %v523, %v519
    %v525 = vrot.slane %v524, 4
    %v527 = vshll.u32 %v327, 16
    %v529 = vrot.slane %v527, 5
    %v530 = vsel %vm338, %v525, %v529
    %v532 = vshrl.u32 %v288, 16
    %v534 = vrot.slane %v532, 4
    %v535 = vshll.u32 %v288, 16
    %v537 = vrot.slane %v535, 5
    %v538 = vor.u32 %v534, %v537
    %v539 = vrot.slane %v538, 4
    %v541 = vshll.u32 %v289, 16
    %v543 = vrot.slane %v541, 5
    %v544 = vsel %vm338, %v539, %v543
    %v545 = vshrl.u32 %v289, 16
    %v547 = vrot.slane %v545, 4
    %v548 = vor.u32 %v547, %v543
    %v549 = vrot.slane %v548, 4
    %v551 = vshll.u32 %v328, 16
    %v553 = vrot.slane %v551, 5
    %v554 = vsel %vm338, %v549, %v553
    %v556 = vshrl.u32 %v290, 16
    %v558 = vrot.slane %v556, 4
    %v559 = vshll.u32 %v290, 16
    %v561 = vrot.slane %v559, 5
    %v562 = vor.u32 %v558, %v561
    %v563 = vrot.slane %v562, 4
    %v565 = vshll.u32 %v291, 16
    %v567 = vrot.slane %v565, 5
    %v568 = vsel %vm338, %v563, %v567
    %v569 = vshrl.u32 %v291, 16
    %v571 = vrot.slane %v569, 4
    %v572 = vor.u32 %v571, %v567
    %v573 = vrot.slane %v572, 4
    %v575 = vshll.u32 %v329, 16
    %v577 = vrot.slane %v575, 5
    %v578 = vsel %vm338, %v573, %v577
    %v580 = vshrl.u32 %v292, 16
    %v582 = vrot.slane %v580, 4
    %v583 = vshll.u32 %v292, 16
    %v585 = vrot.slane %v583, 5
    %v586 = vor.u32 %v582, %v585
    %v587 = vrot.slane %v586, 4
    %v589 = vshll.u32 %v293, 16
    %v591 = vrot.slane %v589, 5
    %v592 = vsel %vm338, %v587, %v591
    %v593 = vshrl.u32 %v293, 16
    %v595 = vrot.slane %v593, 4
    %v596 = vor.u32 %v595, %v591
    %v597 = vrot.slane %v596, 4
    %v599 = vshll.u32 %v330, 16
    %v601 = vrot.slane %v599, 5
    %v602 = vsel %vm338, %v597, %v601
    %v604 = vshrl.u32 %v294, 16
    %v606 = vrot.slane %v604, 4
    %v607 = vshll.u32 %v294, 16
    %v609 = vrot.slane %v607, 5
    %v610 = vor.u32 %v606, %v609
    %v611 = vrot.slane %v610, 4
    %v613 = vshll.u32 %v295, 16
    %v615 = vrot.slane %v613, 5
    %v616 = vsel %vm338, %v611, %v615
    %v617 = vshrl.u32 %v295, 16
    %v619 = vrot.slane %v617, 4
    %v620 = vor.u32 %v619, %v615
    %v621 = vrot.slane %v620, 4
    %v623 = vshll.u32 %v331, 16
    %v625 = vrot.slane %v623, 5
    %v626 = vsel %vm338, %v621, %v625
    %v628 = vshrl.u32 %v296, 16
    %v630 = vrot.slane %v628, 4
    %v631 = vshll.u32 %v296, 16
    %v633 = vrot.slane %v631, 5
    %v634 = vor.u32 %v630, %v633
    %v635 = vrot.slane %v634, 4
    %v637 = vshll.u32 %v297, 16
    %v639 = vrot.slane %v637, 5
    %v640 = vsel %vm338, %v635, %v639
    %v641 = vshrl.u32 %v297, 16
    %v643 = vrot.slane %v641, 4
    %v644 = vor.u32 %v643, %v639
    %v645 = vrot.slane %v644, 4
    %v647 = vshll.u32 %v332, 16
    %v649 = vrot.slane %v647, 5
    %v650 = vsel %vm338, %v645, %v649
    %v652 = vshrl.u32 %v298, 16
    %v654 = vrot.slane %v652, 4
    %v655 = vshll.u32 %v298, 16
    %v657 = vrot.slane %v655, 5
    %v658 = vor.u32 %v654, %v657
    %v659 = vrot.slane %v658, 4
    %v661 = vshll.u32 %v299, 16
    %v663 = vrot.slane %v661, 5
    %v664 = vsel %vm338, %v659, %v663
    %v665 = vshrl.u32 %v299, 16
    %v667 = vrot.slane %v665, 4
    %v668 = vor.u32 %v667, %v663
    %v669 = vrot.slane %v668, 4
    %v671 = vshll.u32 %v333, 16
    %v673 = vrot.slane %v671, 5
    %v674 = vsel %vm338, %v669, %v673
    %v676 = vshrl.u32 %v300, 16
    %v678 = vrot.slane %v676, 4
    %v679 = vshll.u32 %v300, 16
    %v681 = vrot.slane %v679, 5
    %v682 = vor.u32 %v678, %v681
    %v683 = vrot.slane %v682, 4
    %v685 = vshll.u32 %v301, 16
    %v687 = vrot.slane %v685, 5
    %v688 = vsel %vm338, %v683, %v687
    %v689 = vshrl.u32 %v301, 16
    %v691 = vrot.slane %v689, 4
    %v692 = vor.u32 %v691, %v687
    %v693 = vrot.slane %v692, 4
    %v695 = vshll.u32 %v334, 16
    %v697 = vrot.slane %v695, 5
    %v698 = vsel %vm338, %v693, %v697
    %v700 = vshrl.u32 %v302, 16
    %v702 = vrot.slane %v700, 4
    %v703 = vshll.u32 %v302, 16
    %v705 = vrot.slane %v703, 5
    %v706 = vor.u32 %v702, %v705
    %v707 = vrot.slane %v706, 4
    %v709 = vshll.u32 %v303, 16
    %v711 = vrot.slane %v709, 5
    %v712 = vsel %vm338, %v707, %v711
    %v713 = vshrl.u32 %v303, 16
    %v715 = vrot.slane %v713, 4
    %v716 = vor.u32 %v715, %v711
    %v717 = vrot.slane %v716, 4
    %v719 = vshll.u32 %v335, 16
    %v721 = vrot.slane %v719, 5
    %v722 = vsel %vm338, %v717, %v721
    %s723 = scalar_lea.vmem [#allocation7], 64
    %v724 = vld [vmem:[%s723] sm:$0xf]
    %v725 = vld [vmem:[%s723 + $0x4] sm:$0xf]
    %v726 = vld [vmem:[%s723 + $0x8] sm:$0xf]
    %v727 = vld [vmem:[%s723 + $0xc] sm:$0xf]
    %v728 = vld [vmem:[%s723 + $0x10] sm:$0xf]
    %v729 = vld [vmem:[%s723 + $0x14] sm:$0xf]
    %v730 = vld [vmem:[%s723 + $0x18] sm:$0xf]
    %v731 = vld [vmem:[%s723 + $0x1c] sm:$0xf]
    %v732 = vld [vmem:[%s723 + $0x20] sm:$0xf]
    %v733 = vld [vmem:[%s723 + $0x24] sm:$0xf]
    %v734 = vld [vmem:[%s723 + $0x28] sm:$0xf]
    %v735 = vld [vmem:[%s723 + $0x2c] sm:$0xf]
    %v736 = vld [vmem:[%s723 + $0x30] sm:$0xf]
    %v737 = vld [vmem:[%s723 + $0x34] sm:$0xf]
    %v738 = vld [vmem:[%s723 + $0x38] sm:$0xf]
    %v739 = vld [vmem:[%s723 + $0x3c] sm:$0xf]
    %v740 = vunpack.c.l.b16 %v352
    %v741 = vunpack.c.l.b16 %v362
    %v742 = vunpack.c.l.b16 %v376
    %v743 = vunpack.c.l.b16 %v386
    %v744 = vunpack.c.l.b16 %v400
    %v745 = vunpack.c.l.b16 %v410
    %v746 = vunpack.c.l.b16 %v424
    %v747 = vunpack.c.l.b16 %v434
    %v748 = vunpack.c.l.b16 %v448
    %v749 = vunpack.c.l.b16 %v458
    %v750 = vunpack.c.l.b16 %v472
    %v751 = vunpack.c.l.b16 %v482
    %v752 = vunpack.c.l.b16 %v496
    %v753 = vunpack.c.l.b16 %v506
    %v754 = vunpack.c.l.b16 %v520
    %v755 = vunpack.c.l.b16 %v530
    %v756 = vunpack.c.l.b16 %v544
    %v757 = vunpack.c.l.b16 %v554
    %v758 = vunpack.c.l.b16 %v568
    %v759 = vunpack.c.l.b16 %v578
    %v760 = vunpack.c.l.b16 %v592
    %v761 = vunpack.c.l.b16 %v602
    %v762 = vunpack.c.l.b16 %v616
    %v763 = vunpack.c.l.b16 %v626
    %v764 = vunpack.c.l.b16 %v640
    %v765 = vunpack.c.l.b16 %v650
    %v766 = vunpack.c.l.b16 %v664
    %v767 = vunpack.c.l.b16 %v674
    %v768 = vunpack.c.l.b16 %v688
    %v769 = vunpack.c.l.b16 %v698
    %v770 = vunpack.c.l.b16 %v712
    %v771 = vunpack.c.l.b16 %v722
    %v772 = vpack.c.b16 %v741, %v740
    %v773 = vpack.c.b16 %v743, %v742
    %v774 = vpack.c.b16 %v745, %v744
    %v775 = vpack.c.b16 %v747, %v746
    %v776 = vpack.c.b16 %v749, %v748
    %v777 = vpack.c.b16 %v751, %v750
    %v778 = vpack.c.b16 %v753, %v752
    %v779 = vpack.c.b16 %v755, %v754
    %v780 = vpack.c.b16 %v757, %v756
    %v781 = vpack.c.b16 %v759, %v758
    %v782 = vpack.c.b16 %v761, %v760
    %v783 = vpack.c.b16 %v763, %v762
    %v784 = vpack.c.b16 %v765, %v764
    %v785 = vpack.c.b16 %v767, %v766
    %v786 = vpack.c.b16 %v769, %v768
    %v787 = vpack.c.b16 %v771, %v770
    %v820 = vunpack.c.l.b16 %v724
    %v821 = vunpack.c.l.b16 %v725
    %v822 = vunpack.c.l.b16 %v726
    %v823 = vunpack.c.l.b16 %v727
    %v824 = vunpack.c.l.b16 %v728
    %v825 = vunpack.c.l.b16 %v729
    %v826 = vunpack.c.l.b16 %v730
    %v827 = vunpack.c.l.b16 %v731
    %v828 = vunpack.c.l.b16 %v732
    %v829 = vunpack.c.l.b16 %v733
    %v830 = vunpack.c.l.b16 %v734
    %v831 = vunpack.c.l.b16 %v735
    %v832 = vunpack.c.l.b16 %v736
    %v833 = vunpack.c.l.b16 %v737
    %v834 = vunpack.c.l.b16 %v738
    %v835 = vunpack.c.l.b16 %v739
    %v836 = vpack.c.b16 %v821, %v820
    %v837 = vpack.c.b16 %v823, %v822
    %v838 = vpack.c.b16 %v825, %v824
    %v839 = vpack.c.b16 %v827, %v826
    %v840 = vpack.c.b16 %v829, %v828
    %v841 = vpack.c.b16 %v831, %v830
    %v842 = vpack.c.b16 %v833, %v832
    %v843 = vpack.c.b16 %v835, %v834
    %852 = vmatpush.bf16.msra.mxu0 %v843
    %853 = vmatpush.bf16.msra.mxu0 %v842
    %854 = vmatpush.bf16.msra.mxu0 %v841
    %855 = vmatpush.bf16.msra.mxu0 %v840
    %856 = vmatpush.bf16.msra.mxu0 %v839
    %857 = vmatpush.bf16.msra.mxu0 %v838
    %858 = vmatpush.bf16.msra.mxu0 %v837
    %859 = vmatpush.bf16.msra.mxu0 %v836
    %860 = vmatmul.bf16.gmra.mxu0 %v772
    %v861 = vpop.f32.mrf.mxu0
    %v862 = vadd.f32 0.0, %v861
    %v863 = vpop.f32.mrf.mxu0
    %v864 = vadd.f32 0.0, %v863
    %865 = vmatmul.bf16.gmra.mxu0 %v773
    %v866 = vpop.f32.mrf.mxu0
    %v867 = vadd.f32 0.0, %v866
    %v868 = vpop.f32.mrf.mxu0
    %v869 = vadd.f32 0.0, %v868
    %870 = vmatmul.bf16.gmra.mxu0 %v774
    %v871 = vpop.f32.mrf.mxu0
    %v872 = vadd.f32 0.0, %v871
    %v873 = vpop.f32.mrf.mxu0
    %v874 = vadd.f32 0.0, %v873
    %875 = vmatmul.bf16.gmra.mxu0 %v775
    %v876 = vpop.f32.mrf.mxu0
    %v877 = vadd.f32 0.0, %v876
    %v878 = vpop.f32.mrf.mxu0
    %v879 = vadd.f32 0.0, %v878
    %880 = vmatmul.bf16.gmra.mxu0 %v776
    %v881 = vpop.f32.mrf.mxu0
    %v882 = vadd.f32 0.0, %v881
    %v883 = vpop.f32.mrf.mxu0
    %v884 = vadd.f32 0.0, %v883
    %885 = vmatmul.bf16.gmra.mxu0 %v777
    %v886 = vpop.f32.mrf.mxu0
    %v887 = vadd.f32 0.0, %v886
    %v888 = vpop.f32.mrf.mxu0
    %v889 = vadd.f32 0.0, %v888
    %890 = vmatmul.bf16.gmra.mxu0 %v778
    %v891 = vpop.f32.mrf.mxu0
    %v892 = vadd.f32 0.0, %v891
    %v893 = vpop.f32.mrf.mxu0
    %v894 = vadd.f32 0.0, %v893
    %895 = vmatmul.bf16.gmra.mxu0 %v779
    %v896 = vpop.f32.mrf.mxu0
    %v897 = vadd.f32 0.0, %v896
    %v898 = vpop.f32.mrf.mxu0
    %v899 = vadd.f32 0.0, %v898
    %900 = vmatmul.bf16.gmra.mxu0 %v780
    %v901 = vpop.f32.mrf.mxu0
    %v902 = vadd.f32 0.0, %v901
    %v903 = vpop.f32.mrf.mxu0
    %v904 = vadd.f32 0.0, %v903
    %905 = vmatmul.bf16.gmra.mxu0 %v781
    %v906 = vpop.f32.mrf.mxu0
    %v907 = vadd.f32 0.0, %v906
    %v908 = vpop.f32.mrf.mxu0
    %v909 = vadd.f32 0.0, %v908
    %910 = vmatmul.bf16.gmra.mxu0 %v782
    %v911 = vpop.f32.mrf.mxu0
    %v912 = vadd.f32 0.0, %v911
    %v913 = vpop.f32.mrf.mxu0
    %v914 = vadd.f32 0.0, %v913
    %915 = vmatmul.bf16.gmra.mxu0 %v783
    %v916 = vpop.f32.mrf.mxu0
    %v917 = vadd.f32 0.0, %v916
    %v918 = vpop.f32.mrf.mxu0
    %v919 = vadd.f32 0.0, %v918
    %920 = vmatmul.bf16.gmra.mxu0 %v784
    %v921 = vpop.f32.mrf.mxu0
    %v922 = vadd.f32 0.0, %v921
    %v923 = vpop.f32.mrf.mxu0
    %v924 = vadd.f32 0.0, %v923
    %925 = vmatmul.bf16.gmra.mxu0 %v785
    %v926 = vpop.f32.mrf.mxu0
    %v927 = vadd.f32 0.0, %v926
    %v928 = vpop.f32.mrf.mxu0
    %v929 = vadd.f32 0.0, %v928
    %930 = vmatmul.bf16.gmra.mxu0 %v786
    %v931 = vpop.f32.mrf.mxu0
    %v932 = vadd.f32 0.0, %v931
    %v933 = vpop.f32.mrf.mxu0
    %v934 = vadd.f32 0.0, %v933
    %935 = vmatmul.bf16.gmra.mxu0 %v787
    %v936 = vpop.f32.mrf.mxu0
    %v937 = vadd.f32 0.0, %v936
    %v938 = vpop.f32.mrf.mxu0
    %v939 = vadd.f32 0.0, %v938
    %940 = vdwg.mxu0
    %v973 = vunpack.c.l.b16 %v272
    %v974 = vunpack.c.l.b16 %v273
    %v975 = vunpack.c.l.b16 %v274
    %v976 = vunpack.c.l.b16 %v275
    %v977 = vunpack.c.l.b16 %v276
    %v978 = vunpack.c.l.b16 %v277
    %v979 = vunpack.c.l.b16 %v278
    %v980 = vunpack.c.l.b16 %v279
    %v981 = vunpack.c.l.b16 %v280
    %v982 = vunpack.c.l.b16 %v281
    %v983 = vunpack.c.l.b16 %v282
    %v984 = vunpack.c.l.b16 %v283
    %v985 = vunpack.c.l.b16 %v284
    %v986 = vunpack.c.l.b16 %v285
    %v987 = vunpack.c.l.b16 %v286
    %v988 = vunpack.c.l.b16 %v287
    %v989 = vunpack.c.l.b16 %v288
    %v990 = vunpack.c.l.b16 %v289
    %v991 = vunpack.c.l.b16 %v290
    %v992 = vunpack.c.l.b16 %v291
    %v993 = vunpack.c.l.b16 %v292
    %v994 = vunpack.c.l.b16 %v293
    %v995 = vunpack.c.l.b16 %v294
    %v996 = vunpack.c.l.b16 %v295
    %v997 = vunpack.c.l.b16 %v296
    %v998 = vunpack.c.l.b16 %v297
    %v999 = vunpack.c.l.b16 %v298
    %v1000 = vunpack.c.l.b16 %v299
    %v1001 = vunpack.c.l.b16 %v300
    %v1002 = vunpack.c.l.b16 %v301
    %v1003 = vunpack.c.l.b16 %v302
    %v1004 = vunpack.c.l.b16 %v303
    %v1005 = vpack.c.b16 %v974, %v973
    %v1006 = vpack.c.b16 %v976, %v975
    %v1007 = vpack.c.b16 %v978, %v977
    %v1008 = vpack.c.b16 %v980, %v979
    %v1009 = vpack.c.b16 %v982, %v981
    %v1010 = vpack.c.b16 %v984, %v983
    %v1011 = vpack.c.b16 %v986, %v985
    %v1012 = vpack.c.b16 %v988, %v987
    %v1013 = vpack.c.b16 %v990, %v989
    %v1014 = vpack.c.b16 %v992, %v991
    %v1015 = vpack.c.b16 %v994, %v993
    %v1016 = vpack.c.b16 %v996, %v995
    %v1017 = vpack.c.b16 %v998, %v997
    %v1018 = vpack.c.b16 %v1000, %v999
    %v1019 = vpack.c.b16 %v1002, %v1001
    %v1020 = vpack.c.b16 %v1004, %v1003
    %v1053 = vunpack.c.l.b16 %v304
    %v1054 = vunpack.c.l.b16 %v305
    %v1055 = vunpack.c.l.b16 %v306
    %v1056 = vunpack.c.l.b16 %v307
    %v1057 = vunpack.c.l.b16 %v308
    %v1058 = vunpack.c.l.b16 %v309
    %v1059 = vunpack.c.l.b16 %v310
    %v1060 = vunpack.c.l.b16 %v311
    %v1061 = vunpack.c.l.b16 %v312
    %v1062 = vunpack.c.l.b16 %v313
    %v1063 = vunpack.c.l.b16 %v314
    %v1064 = vunpack.c.l.b16 %v315
    %v1065 = vunpack.c.l.b16 %v316
    %v1066 = vunpack.c.l.b16 %v317
    %v1067 = vunpack.c.l.b16 %v318
    %v1068 = vunpack.c.l.b16 %v319
    %v1069 = vpack.c.b16 %v1054, %v1053
    %v1070 = vpack.c.b16 %v1056, %v1055
    %v1071 = vpack.c.b16 %v1058, %v1057
    %v1072 = vpack.c.b16 %v1060, %v1059
    %v1073 = vpack.c.b16 %v1062, %v1061
    %v1074 = vpack.c.b16 %v1064, %v1063
    %v1075 = vpack.c.b16 %v1066, %v1065
    %v1076 = vpack.c.b16 %v1068, %v1067
    %1085 = vmatpush.bf16.msra.mxu0 %v1076
    %1086 = vmatpush.bf16.msra.mxu0 %v1075
    %1087 = vmatpush.bf16.msra.mxu0 %v1074
    %1088 = vmatpush.bf16.msra.mxu0 %v1073
    %1089 = vmatpush.bf16.msra.mxu0 %v1072
    %1090 = vmatpush.bf16.msra.mxu0 %v1071
    %1091 = vmatpush.bf16.msra.mxu0 %v1070
    %1092 = vmatpush.bf16.msra.mxu0 %v1069
    %1093 = vmatmul.bf16.gmra.mxu0 %v1005
    %v1094 = vpop.f32.mrf.mxu0
    %v1095 = vadd.f32 %v862, %v1094
    %v1096 = vpop.f32.mrf.mxu0
    %v1097 = vadd.f32 %v864, %v1096
    %1098 = vmatmul.bf16.gmra.mxu0 %v1006
    %v1099 = vpop.f32.mrf.mxu0
    %v1100 = vadd.f32 %v867, %v1099
    %v1101 = vpop.f32.mrf.mxu0
    %v1102 = vadd.f32 %v869, %v1101
    %1103 = vmatmul.bf16.gmra.mxu0 %v1007
    %v1104 = vpop.f32.mrf.mxu0
    %v1105 = vadd.f32 %v872, %v1104
    %v1106 = vpop.f32.mrf.mxu0
    %v1107 = vadd.f32 %v874, %v1106
    %1108 = vmatmul.bf16.gmra.mxu0 %v1008
    %v1109 = vpop.f32.mrf.mxu0
    %v1110 = vadd.f32 %v877, %v1109
    %v1111 = vpop.f32.mrf.mxu0
    %v1112 = vadd.f32 %v879, %v1111
    %1113 = vmatmul.bf16.gmra.mxu0 %v1009
    %v1114 = vpop.f32.mrf.mxu0
    %v1115 = vadd.f32 %v882, %v1114
    %v1116 = vpop.f32.mrf.mxu0
    %v1117 = vadd.f32 %v884, %v1116
    %1118 = vmatmul.bf16.gmra.mxu0 %v1010
    %v1119 = vpop.f32.mrf.mxu0
    %v1120 = vadd.f32 %v887, %v1119
    %v1121 = vpop.f32.mrf.mxu0
    %v1122 = vadd.f32 %v889, %v1121
    %1123 = vmatmul.bf16.gmra.mxu0 %v1011
    %v1124 = vpop.f32.mrf.mxu0
    %v1125 = vadd.f32 %v892, %v1124
    %v1126 = vpop.f32.mrf.mxu0
    %v1127 = vadd.f32 %v894, %v1126
    %1128 = vmatmul.bf16.gmra.mxu0 %v1012
    %v1129 = vpop.f32.mrf.mxu0
    %v1130 = vadd.f32 %v897, %v1129
    %v1131 = vpop.f32.mrf.mxu0
    %v1132 = vadd.f32 %v899, %v1131
    %1133 = vmatmul.bf16.gmra.mxu0 %v1013
    %v1134 = vpop.f32.mrf.mxu0
    %v1135 = vadd.f32 %v902, %v1134
    %v1136 = vpop.f32.mrf.mxu0
    %v1137 = vadd.f32 %v904, %v1136
    %1138 = vmatmul.bf16.gmra.mxu0 %v1014
    %v1139 = vpop.f32.mrf.mxu0
    %v1140 = vadd.f32 %v907, %v1139
    %v1141 = vpop.f32.mrf.mxu0
    %v1142 = vadd.f32 %v909, %v1141
    %1143 = vmatmul.bf16.gmra.mxu0 %v1015
    %v1144 = vpop.f32.mrf.mxu0
    %v1145 = vadd.f32 %v912, %v1144
    %v1146 = vpop.f32.mrf.mxu0
    %v1147 = vadd.f32 %v914, %v1146
    %1148 = vmatmul.bf16.gmra.mxu0 %v1016
    %v1149 = vpop.f32.mrf.mxu0
    %v1150 = vadd.f32 %v917, %v1149
    %v1151 = vpop.f32.mrf.mxu0
    %v1152 = vadd.f32 %v919, %v1151
    %1153 = vmatmul.bf16.gmra.mxu0 %v1017
    %v1154 = vpop.f32.mrf.mxu0
    %v1155 = vadd.f32 %v922, %v1154
    %v1156 = vpop.f32.mrf.mxu0
    %v1157 = vadd.f32 %v924, %v1156
    %1158 = vmatmul.bf16.gmra.mxu0 %v1018
    %v1159 = vpop.f32.mrf.mxu0
    %v1160 = vadd.f32 %v927, %v1159
    %v1161 = vpop.f32.mrf.mxu0
    %v1162 = vadd.f32 %v929, %v1161
    %1163 = vmatmul.bf16.gmra.mxu0 %v1019
    %v1164 = vpop.f32.mrf.mxu0
    %v1165 = vadd.f32 %v932, %v1164
    %v1166 = vpop.f32.mrf.mxu0
    %v1167 = vadd.f32 %v934, %v1166
    %1168 = vmatmul.bf16.gmra.mxu0 %v1020
    %v1169 = vpop.f32.mrf.mxu0
    %v1170 = vadd.f32 %v937, %v1169
    %v1171 = vpop.f32.mrf.mxu0
    %v1172 = vadd.f32 %v939, %v1171
    %1173 = vdwg.mxu0
    %v1174 = vld [vmem:[#allocation2] sm:$0xe]
    %v1175 = vld [vmem:[#allocation2 + $0xc] sm:$0xe]
    %v1176 = vld [vmem:[#allocation2 + $0x18] sm:$0xe]
    %v1177 = vld [vmem:[#allocation2 + $0x24] sm:$0xe]
    %v1178 = vld [vmem:[#allocation2 + $0x30] sm:$0xe]
    %v1179 = vld [vmem:[#allocation2 + $0x3c] sm:$0xe]
    %v1180 = vld [vmem:[#allocation2 + $0x48] sm:$0xe]
    %v1181 = vld [vmem:[#allocation2 + $0x54] sm:$0xe]
    %v1182 = vld [vmem:[#allocation2 + $0x60] sm:$0xe]
    %v1183 = vld [vmem:[#allocation2 + $0x6c] sm:$0xe]
    %v1184 = vld [vmem:[#allocation2 + $0x78] sm:$0xe]
    %v1185 = vld [vmem:[#allocation2 + $0x84] sm:$0xe]
    %v1186 = vld [vmem:[#allocation2 + $0x90] sm:$0xe]
    %v1187 = vld [vmem:[#allocation2 + $0x9c] sm:$0xe]
    %v1188 = vld [vmem:[#allocation2 + $0xa8] sm:$0xe]
    %v1189 = vld [vmem:[#allocation2 + $0xb4] sm:$0xe]
    %vm1222 = vcmask 1042432
    %vm1223 = vcmask 1046532
    %vm1224 = vmor %vm1222, %vm1223
    %v1225 = vrot.slane %v1174, 5
    %v1226 = vrot.slane %v1225, 4
    %v1227 = vrot.slane %v273, 5
    %v1228 = vsel %vm1224, %v1226, %v1227
    %v1229 = vrot.slane %v1227, 4
    %v1230 = vrot.slane %v320, 5
    %v1231 = vsel %vm1224, %v1229, %v1230
    %v1232 = vrot.slane %v1175, 5
    %v1233 = vrot.slane %v1232, 4
    %v1234 = vrot.slane %v275, 5
    %v1235 = vsel %vm1224, %v1233, %v1234
    %v1236 = vrot.slane %v1234, 4
    %v1237 = vrot.slane %v321, 5
    %v1238 = vsel %vm1224, %v1236, %v1237
    %v1239 = vrot.slane %v1176, 5
    %v1240 = vrot.slane %v1239, 4
    %v1241 = vrot.slane %v277, 5
    %v1242 = vsel %vm1224, %v1240, %v1241
    %v1243 = vrot.slane %v1241, 4
    %v1244 = vrot.slane %v322, 5
    %v1245 = vsel %vm1224, %v1243, %v1244
    %v1246 = vrot.slane %v1177, 5
    %v1247 = vrot.slane %v1246, 4
    %v1248 = vrot.slane %v279, 5
    %v1249 = vsel %vm1224, %v1247, %v1248
    %v1250 = vrot.slane %v1248, 4
    %v1251 = vrot.slane %v323, 5
    %v1252 = vsel %vm1224, %v1250, %v1251
    %v1253 = vrot.slane %v1178, 5
    %v1254 = vrot.slane %v1253, 4
    %v1255 = vrot.slane %v281, 5
    %v1256 = vsel %vm1224, %v1254, %v1255
    %v1257 = vrot.slane %v1255, 4
    %v1258 = vrot.slane %v324, 5
    %v1259 = vsel %vm1224, %v1257, %v1258
    %v1260 = vrot.slane %v1179, 5
    %v1261 = vrot.slane %v1260, 4
    %v1262 = vrot.slane %v283, 5
    %v1263 = vsel %vm1224, %v1261, %v1262
    %v1264 = vrot.slane %v1262, 4
    %v1265 = vrot.slane %v325, 5
    %v1266 = vsel %vm1224, %v1264, %v1265
    %v1267 = vrot.slane %v1180, 5
    %v1268 = vrot.slane %v1267, 4
    %v1269 = vrot.slane %v285, 5
    %v1270 = vsel %vm1224, %v1268, %v1269
    %v1271 = vrot.slane %v1269, 4
    %v1272 = vrot.slane %v326, 5
    %v1273 = vsel %vm1224, %v1271, %v1272
    %v1274 = vrot.slane %v1181, 5
    %v1275 = vrot.slane %v1274, 4
    %v1276 = vrot.slane %v287, 5
    %v1277 = vsel %vm1224, %v1275, %v1276
    %v1278 = vrot.slane %v1276, 4
    %v1279 = vrot.slane %v327, 5
    %v1280 = vsel %vm1224, %v1278, %v1279
    %v1281 = vrot.slane %v1182, 5
    %v1282 = vrot.slane %v1281, 4
    %v1283 = vrot.slane %v289, 5
    %v1284 = vsel %vm1224, %v1282, %v1283
    %v1285 = vrot.slane %v1283, 4
    %v1286 = vrot.slane %v328, 5
    %v1287 = vsel %vm1224, %v1285, %v1286
    %v1288 = vrot.slane %v1183, 5
    %v1289 = vrot.slane %v1288, 4
    %v1290 = vrot.slane %v291, 5
    %v1291 = vsel %vm1224, %v1289, %v1290
    %v1292 = vrot.slane %v1290, 4
    %v1293 = vrot.slane %v329, 5
    %v1294 = vsel %vm1224, %v1292, %v1293
    %v1295 = vrot.slane %v1184, 5
    %v1296 = vrot.slane %v1295, 4
    %v1297 = vrot.slane %v293, 5
    %v1298 = vsel %vm1224, %v1296, %v1297
    %v1299 = vrot.slane %v1297, 4
    %v1300 = vrot.slane %v330, 5
    %v1301 = vsel %vm1224, %v1299, %v1300
    %v1302 = vrot.slane %v1185, 5
    %v1303 = vrot.slane %v1302, 4
    %v1304 = vrot.slane %v295, 5
    %v1305 = vsel %vm1224, %v1303, %v1304
    %v1306 = vrot.slane %v1304, 4
    %v1307 = vrot.slane %v331, 5
    %v1308 = vsel %vm1224, %v1306, %v1307
    %v1309 = vrot.slane %v1186, 5
    %v1310 = vrot.slane %v1309, 4
    %v1311 = vrot.slane %v297, 5
    %v1312 = vsel %vm1224, %v1310, %v1311
    %v1313 = vrot.slane %v1311, 4
    %v1314 = vrot.slane %v332, 5
    %v1315 = vsel %vm1224, %v1313, %v1314
    %v1316 = vrot.slane %v1187, 5
    %v1317 = vrot.slane %v1316, 4
    %v1318 = vrot.slane %v299, 5
    %v1319 = vsel %vm1224, %v1317, %v1318
    %v1320 = vrot.slane %v1318, 4
    %v1321 = vrot.slane %v333, 5
    %v1322 = vsel %vm1224, %v1320, %v1321
    %v1323 = vrot.slane %v1188, 5
    %v1324 = vrot.slane %v1323, 4
    %v1325 = vrot.slane %v301, 5
    %v1326 = vsel %vm1224, %v1324, %v1325
    %v1327 = vrot.slane %v1325, 4
    %v1328 = vrot.slane %v334, 5
    %v1329 = vsel %vm1224, %v1327, %v1328
    %v1330 = vrot.slane %v1189, 5
    %v1331 = vrot.slane %v1330, 4
    %v1332 = vrot.slane %v303, 5
    %v1333 = vsel %vm1224, %v1331, %v1332
    %v1334 = vrot.slane %v1332, 4
    %v1335 = vrot.slane %v335, 5
    %v1336 = vsel %vm1224, %v1334, %v1335
    %s1337 = scalar_lea.vmem [#allocation7], 128
    %v1338 = vld [vmem:[%s1337] sm:$0xf]
    %v1339 = vld [vmem:[%s1337 + $0x4] sm:$0xf]
    %v1340 = vld [vmem:[%s1337 + $0x8] sm:$0xf]
    %v1341 = vld [vmem:[%s1337 + $0xc] sm:$0xf]
    %v1342 = vld [vmem:[%s1337 + $0x10] sm:$0xf]
    %v1343 = vld [vmem:[%s1337 + $0x14] sm:$0xf]
    %v1344 = vld [vmem:[%s1337 + $0x18] sm:$0xf]
    %v1345 = vld [vmem:[%s1337 + $0x1c] sm:$0xf]
    %v1346 = vld [vmem:[%s1337 + $0x20] sm:$0xf]
    %v1347 = vld [vmem:[%s1337 + $0x24] sm:$0xf]
    %v1348 = vld [vmem:[%s1337 + $0x28] sm:$0xf]
    %v1349 = vld [vmem:[%s1337 + $0x2c] sm:$0xf]
    %v1350 = vld [vmem:[%s1337 + $0x30] sm:$0xf]
    %v1351 = vld [vmem:[%s1337 + $0x34] sm:$0xf]
    %v1352 = vld [vmem:[%s1337 + $0x38] sm:$0xf]
    %v1353 = vld [vmem:[%s1337 + $0x3c] sm:$0xf]
    %v1354 = vunpack.c.l.b16 %v1228
    %v1355 = vunpack.c.l.b16 %v1231
    %v1356 = vunpack.c.l.b16 %v1235
    %v1357 = vunpack.c.l.b16 %v1238
    %v1358 = vunpack.c.l.b16 %v1242
    %v1359 = vunpack.c.l.b16 %v1245
    %v1360 = vunpack.c.l.b16 %v1249
    %v1361 = vunpack.c.l.b16 %v1252
    %v1362 = vunpack.c.l.b16 %v1256
    %v1363 = vunpack.c.l.b16 %v1259
    %v1364 = vunpack.c.l.b16 %v1263
    %v1365 = vunpack.c.l.b16 %v1266
    %v1366 = vunpack.c.l.b16 %v1270
    %v1367 = vunpack.c.l.b16 %v1273
    %v1368 = vunpack.c.l.b16 %v1277
    %v1369 = vunpack.c.l.b16 %v1280
    %v1370 = vunpack.c.l.b16 %v1284
    %v1371 = vunpack.c.l.b16 %v1287
    %v1372 = vunpack.c.l.b16 %v1291
    %v1373 = vunpack.c.l.b16 %v1294
    %v1374 = vunpack.c.l.b16 %v1298
    %v1375 = vunpack.c.l.b16 %v1301
    %v1376 = vunpack.c.l.b16 %v1305
    %v1377 = vunpack.c.l.b16 %v1308
    %v1378 = vunpack.c.l.b16 %v1312
    %v1379 = vunpack.c.l.b16 %v1315
    %v1380 = vunpack.c.l.b16 %v1319
    %v1381 = vunpack.c.l.b16 %v1322
    %v1382 = vunpack.c.l.b16 %v1326
    %v1383 = vunpack.c.l.b16 %v1329
    %v1384 = vunpack.c.l.b16 %v1333
    %v1385 = vunpack.c.l.b16 %v1336
    %v1386 = vpack.c.b16 %v1355, %v1354
    %v1387 = vpack.c.b16 %v1357, %v1356
    %v1388 = vpack.c.b16 %v1359, %v1358
    %v1389 = vpack.c.b16 %v1361, %v1360
    %v1390 = vpack.c.b16 %v1363, %v1362
    %v1391 = vpack.c.b16 %v1365, %v1364
    %v1392 = vpack.c.b16 %v1367, %v1366
    %v1393 = vpack.c.b16 %v1369, %v1368
    %v1394 = vpack.c.b16 %v1371, %v1370
    %v1395 = vpack.c.b16 %v1373, %v1372
    %v1396 = vpack.c.b16 %v1375, %v1374
    %v1397 = vpack.c.b16 %v1377, %v1376
    %v1398 = vpack.c.b16 %v1379, %v1378
    %v1399 = vpack.c.b16 %v1381, %v1380
    %v1400 = vpack.c.b16 %v1383, %v1382
    %v1401 = vpack.c.b16 %v1385, %v1384
    %v1434 = vunpack.c.l.b16 %v1338
    %v1435 = vunpack.c.l.b16 %v1339
    %v1436 = vunpack.c.l.b16 %v1340
    %v1437 = vunpack.c.l.b16 %v1341
    %v1438 = vunpack.c.l.b16 %v1342
    %v1439 = vunpack.c.l.b16 %v1343
    %v1440 = vunpack.c.l.b16 %v1344
    %v1441 = vunpack.c.l.b16 %v1345
    %v1442 = vunpack.c.l.b16 %v1346
    %v1443 = vunpack.c.l.b16 %v1347
    %v1444 = vunpack.c.l.b16 %v1348
    %v1445 = vunpack.c.l.b16 %v1349
    %v1446 = vunpack.c.l.b16 %v1350
    %v1447 = vunpack.c.l.b16 %v1351
    %v1448 = vunpack.c.l.b16 %v1352
    %v1449 = vunpack.c.l.b16 %v1353
    %v1450 = vpack.c.b16 %v1435, %v1434
    %v1451 = vpack.c.b16 %v1437, %v1436
    %v1452 = vpack.c.b16 %v1439, %v1438
    %v1453 = vpack.c.b16 %v1441, %v1440
    %v1454 = vpack.c.b16 %v1443, %v1442
    %v1455 = vpack.c.b16 %v1445, %v1444
    %v1456 = vpack.c.b16 %v1447, %v1446
    %v1457 = vpack.c.b16 %v1449, %v1448
    %1466 = vmatpush.bf16.msra.mxu0 %v1457
    %1467 = vmatpush.bf16.msra.mxu0 %v1456
    %1468 = vmatpush.bf16.msra.mxu0 %v1455
    %1469 = vmatpush.bf16.msra.mxu0 %v1454
    %1470 = vmatpush.bf16.msra.mxu0 %v1453
    %1471 = vmatpush.bf16.msra.mxu0 %v1452
    %1472 = vmatpush.bf16.msra.mxu0 %v1451
    %1473 = vmatpush.bf16.msra.mxu0 %v1450
    %1474 = vmatmul.bf16.gmra.mxu0 %v1386
    %v1475 = vpop.f32.mrf.mxu0
    %v1476 = vadd.f32 0.0, %v1475
    %v1477 = vpop.f32.mrf.mxu0
    %v1478 = vadd.f32 0.0, %v1477
    %1479 = vmatmul.bf16.gmra.mxu0 %v1387
    %v1480 = vpop.f32.mrf.mxu0
    %v1481 = vadd.f32 0.0, %v1480
    %v1482 = vpop.f32.mrf.mxu0
    %v1483 = vadd.f32 0.0, %v1482
    %1484 = vmatmul.bf16.gmra.mxu0 %v1388
    %v1485 = vpop.f32.mrf.mxu0
    %v1486 = vadd.f32 0.0, %v1485
    %v1487 = vpop.f32.mrf.mxu0
    %v1488 = vadd.f32 0.0, %v1487
    %1489 = vmatmul.bf16.gmra.mxu0 %v1389
    %v1490 = vpop.f32.mrf.mxu0
    %v1491 = vadd.f32 0.0, %v1490
    %v1492 = vpop.f32.mrf.mxu0
    %v1493 = vadd.f32 0.0, %v1492
    %1494 = vmatmul.bf16.gmra.mxu0 %v1390
    %v1495 = vpop.f32.mrf.mxu0
    %v1496 = vadd.f32 0.0, %v1495
    %v1497 = vpop.f32.mrf.mxu0
    %v1498 = vadd.f32 0.0, %v1497
    %1499 = vmatmul.bf16.gmra.mxu0 %v1391
    %v1500 = vpop.f32.mrf.mxu0
    %v1501 = vadd.f32 0.0, %v1500
    %v1502 = vpop.f32.mrf.mxu0
    %v1503 = vadd.f32 0.0, %v1502
    %1504 = vmatmul.bf16.gmra.mxu0 %v1392
    %v1505 = vpop.f32.mrf.mxu0
    %v1506 = vadd.f32 0.0, %v1505
    %v1507 = vpop.f32.mrf.mxu0
    %v1508 = vadd.f32 0.0, %v1507
    %1509 = vmatmul.bf16.gmra.mxu0 %v1393
    %v1510 = vpop.f32.mrf.mxu0
    %v1511 = vadd.f32 0.0, %v1510
    %v1512 = vpop.f32.mrf.mxu0
    %v1513 = vadd.f32 0.0, %v1512
    %1514 = vmatmul.bf16.gmra.mxu0 %v1394
    %v1515 = vpop.f32.mrf.mxu0
    %v1516 = vadd.f32 0.0, %v1515
    %v1517 = vpop.f32.mrf.mxu0
    %v1518 = vadd.f32 0.0, %v1517
    %1519 = vmatmul.bf16.gmra.mxu0 %v1395
    %v1520 = vpop.f32.mrf.mxu0
    %v1521 = vadd.f32 0.0, %v1520
    %v1522 = vpop.f32.mrf.mxu0
    %v1523 = vadd.f32 0.0, %v1522
    %1524 = vmatmul.bf16.gmra.mxu0 %v1396
    %v1525 = vpop.f32.mrf.mxu0
    %v1526 = vadd.f32 0.0, %v1525
    %v1527 = vpop.f32.mrf.mxu0
    %v1528 = vadd.f32 0.0, %v1527
    %1529 = vmatmul.bf16.gmra.mxu0 %v1397
    %v1530 = vpop.f32.mrf.mxu0
    %v1531 = vadd.f32 0.0, %v1530
    %v1532 = vpop.f32.mrf.mxu0
    %v1533 = vadd.f32 0.0, %v1532
    %1534 = vmatmul.bf16.gmra.mxu0 %v1398
    %v1535 = vpop.f32.mrf.mxu0
    %v1536 = vadd.f32 0.0, %v1535
    %v1537 = vpop.f32.mrf.mxu0
    %v1538 = vadd.f32 0.0, %v1537
    %1539 = vmatmul.bf16.gmra.mxu0 %v1399
    %v1540 = vpop.f32.mrf.mxu0
    %v1541 = vadd.f32 0.0, %v1540
    %v1542 = vpop.f32.mrf.mxu0
    %v1543 = vadd.f32 0.0, %v1542
    %1544 = vmatmul.bf16.gmra.mxu0 %v1400
    %v1545 = vpop.f32.mrf.mxu0
    %v1546 = vadd.f32 0.0, %v1545
    %v1547 = vpop.f32.mrf.mxu0
    %v1548 = vadd.f32 0.0, %v1547
    %1549 = vmatmul.bf16.gmra.mxu0 %v1401
    %v1550 = vpop.f32.mrf.mxu0
    %v1551 = vadd.f32 0.0, %v1550
    %v1552 = vpop.f32.mrf.mxu0
    %v1553 = vadd.f32 0.0, %v1552
    %1554 = vdwg.mxu0
    %v1555 = vadd.f32 %v1095, %v1476
    %v1556 = vadd.f32 %v1097, %v1478
    %v1557 = vadd.f32 %v1100, %v1481
    %v1558 = vadd.f32 %v1102, %v1483
    %v1559 = vadd.f32 %v1105, %v1486
    %v1560 = vadd.f32 %v1107, %v1488
    %v1561 = vadd.f32 %v1110, %v1491
    %v1562 = vadd.f32 %v1112, %v1493
    %v1563 = vadd.f32 %v1115, %v1496
    %v1564 = vadd.f32 %v1117, %v1498
    %v1565 = vadd.f32 %v1120, %v1501
    %v1566 = vadd.f32 %v1122, %v1503
    %v1567 = vadd.f32 %v1125, %v1506
    %v1568 = vadd.f32 %v1127, %v1508
    %v1569 = vadd.f32 %v1130, %v1511
    %v1570 = vadd.f32 %v1132, %v1513
    %v1571 = vadd.f32 %v1135, %v1516
    %v1572 = vadd.f32 %v1137, %v1518
    %v1573 = vadd.f32 %v1140, %v1521
    %v1574 = vadd.f32 %v1142, %v1523
    %v1575 = vadd.f32 %v1145, %v1526
    %v1576 = vadd.f32 %v1147, %v1528
    %v1577 = vadd.f32 %v1150, %v1531
    %v1578 = vadd.f32 %v1152, %v1533
    %v1579 = vadd.f32 %v1155, %v1536
    %v1580 = vadd.f32 %v1157, %v1538
    %v1581 = vadd.f32 %v1160, %v1541
    %v1582 = vadd.f32 %v1162, %v1543
    %v1583 = vadd.f32 %v1165, %v1546
    %v1584 = vadd.f32 %v1167, %v1548
    %v1585 = vadd.f32 %v1170, %v1551
    %v1586 = vadd.f32 %v1172, %v1553
    %v1587 = vld [vmem:[#allocation9] sm:$0x1]
    %v1588 = vperm.slane %v1587, 0
    %v1589 = vadd.f32 %v1555, %v1588
    %v1590 = vadd.f32 %v1556, %v1588
    %v1591 = vadd.f32 %v1557, %v1588
    %v1592 = vadd.f32 %v1558, %v1588
    %v1593 = vadd.f32 %v1559, %v1588
    %v1594 = vadd.f32 %v1560, %v1588
    %v1595 = vadd.f32 %v1561, %v1588
    %v1596 = vadd.f32 %v1562, %v1588
    %v1597 = vadd.f32 %v1563, %v1588
    %v1598 = vadd.f32 %v1564, %v1588
    %v1599 = vadd.f32 %v1565, %v1588
    %v1600 = vadd.f32 %v1566, %v1588
    %v1601 = vadd.f32 %v1567, %v1588
    %v1602 = vadd.f32 %v1568, %v1588
    %v1603 = vadd.f32 %v1569, %v1588
    %v1604 = vadd.f32 %v1570, %v1588
    %v1605 = vadd.f32 %v1571, %v1588
    %v1606 = vadd.f32 %v1572, %v1588
    %v1607 = vadd.f32 %v1573, %v1588
    %v1608 = vadd.f32 %v1574, %v1588
    %v1609 = vadd.f32 %v1575, %v1588
    %v1610 = vadd.f32 %v1576, %v1588
    %v1611 = vadd.f32 %v1577, %v1588
    %v1612 = vadd.f32 %v1578, %v1588
    %v1613 = vadd.f32 %v1579, %v1588
    %v1614 = vadd.f32 %v1580, %v1588
    %v1615 = vadd.f32 %v1581, %v1588
    %v1616 = vadd.f32 %v1582, %v1588
    %v1617 = vadd.f32 %v1583, %v1588
    %v1618 = vadd.f32 %v1584, %v1588
    %v1619 = vadd.f32 %v1585, %v1588
    %v1620 = vadd.f32 %v1586, %v1588
    %v1621 = vmax.f32 %v1589, 0.0
    %v1622 = vmax.f32 %v1590, 0.0
    %v1623 = vmax.f32 %v1591, 0.0
    %v1624 = vmax.f32 %v1592, 0.0
    %v1625 = vmax.f32 %v1593, 0.0
    %v1626 = vmax.f32 %v1594, 0.0
    %v1627 = vmax.f32 %v1595, 0.0
    %v1628 = vmax.f32 %v1596, 0.0
    %v1629 = vmax.f32 %v1597, 0.0
    %v1630 = vmax.f32 %v1598, 0.0
    %v1631 = vmax.f32 %v1599, 0.0
    %v1632 = vmax.f32 %v1600, 0.0
    %v1633 = vmax.f32 %v1601, 0.0
    %v1634 = vmax.f32 %v1602, 0.0
    %v1635 = vmax.f32 %v1603, 0.0
    %v1636 = vmax.f32 %v1604, 0.0
    %v1637 = vmax.f32 %v1605, 0.0
    %v1638 = vmax.f32 %v1606, 0.0
    %v1639 = vmax.f32 %v1607, 0.0
    %v1640 = vmax.f32 %v1608, 0.0
    %v1641 = vmax.f32 %v1609, 0.0
    %v1642 = vmax.f32 %v1610, 0.0
    %v1643 = vmax.f32 %v1611, 0.0
    %v1644 = vmax.f32 %v1612, 0.0
    %v1645 = vmax.f32 %v1613, 0.0
    %v1646 = vmax.f32 %v1614, 0.0
    %v1647 = vmax.f32 %v1615, 0.0
    %v1648 = vmax.f32 %v1616, 0.0
    %v1649 = vmax.f32 %v1617, 0.0
    %v1650 = vmax.f32 %v1618, 0.0
    %v1651 = vmax.f32 %v1619, 0.0
    %v1652 = vmax.f32 %v1620, 0.0
    %1653 = vst [vmem:[#allocation3] sm:$0xff] %v1621
    %1654 = vst [vmem:[#allocation3 + $0x8] sm:$0x3] %v1622
    %1655 = vst [vmem:[#allocation3 + $0x10] sm:$0xff] %v1623
    %1656 = vst [vmem:[#allocation3 + $0x18] sm:$0x3] %v1624
    %1657 = vst [vmem:[#allocation3 + $0x20] sm:$0xff] %v1625
    %1658 = vst [vmem:[#allocation3 + $0x28] sm:$0x3] %v1626
    %1659 = vst [vmem:[#allocation3 + $0x30] sm:$0xff] %v1627
    %1660 = vst [vmem:[#allocation3 + $0x38] sm:$0x3] %v1628
    %1661 = vst [vmem:[#allocation3 + $0x40] sm:$0xff] %v1629
    %1662 = vst [vmem:[#allocation3 + $0x48] sm:$0x3] %v1630
    %1663 = vst [vmem:[#allocation3 + $0x50] sm:$0xff] %v1631
    %1664 = vst [vmem:[#allocation3 + $0x58] sm:$0x3] %v1632
    %1665 = vst [vmem:[#allocation3 + $0x60] sm:$0xff] %v1633
    %1666 = vst [vmem:[#allocation3 + $0x68] sm:$0x3] %v1634
    %1667 = vst [vmem:[#allocation3 + $0x70] sm:$0xff] %v1635
    %1668 = vst [vmem:[#allocation3 + $0x78] sm:$0x3] %v1636
    %1669 = vst [vmem:[#allocation3 + $0x80] sm:$0xff] %v1637
    %1670 = vst [vmem:[#allocation3 + $0x88] sm:$0x3] %v1638
    %1671 = vst [vmem:[#allocation3 + $0x90] sm:$0xff] %v1639
    %1672 = vst [vmem:[#allocation3 + $0x98] sm:$0x3] %v1640
    %1673 = vst [vmem:[#allocation3 + $0xa0] sm:$0xff] %v1641
    %1674 = vst [vmem:[#allocation3 + $0xa8] sm:$0x3] %v1642
    %1675 = vst [vmem:[#allocation3 + $0xb0] sm:$0xff] %v1643
    %1676 = vst [vmem:[#allocation3 + $0xb8] sm:$0x3] %v1644
    %1677 = vst [vmem:[#allocation3 + $0xc0] sm:$0xff] %v1645
    %1678 = vst [vmem:[#allocation3 + $0xc8] sm:$0x3] %v1646
    %1679 = vst [vmem:[#allocation3 + $0xd0] sm:$0xff] %v1647
    %1680 = vst [vmem:[#allocation3 + $0xd8] sm:$0x3] %v1648
    %1681 = vst [vmem:[#allocation3 + $0xe0] sm:$0xff] %v1649
    %1682 = vst [vmem:[#allocation3 + $0xe8] sm:$0x3] %v1650
    %1683 = vst [vmem:[#allocation3 + $0xf0] sm:$0xff] %v1651
    %1684 = vst [vmem:[#allocation3 + $0xf8] sm:$0x3] %v1652
    %v1685 = vld [vmem:[#allocation3] ss:$2 sm:$0x1f]
    %s1686 = scalar_lea.vmem [#allocation3], 16
    %v1687 = vld [vmem:[%s1686] ss:$2 sm:$0x1f]
    %s1688 = scalar_lea.vmem [#allocation3], 32
    %v1689 = vld [vmem:[%s1688] ss:$2 sm:$0x1f]
    %s1690 = scalar_lea.vmem [#allocation3], 48
    %v1691 = vld [vmem:[%s1690] ss:$2 sm:$0x1f]
    %s1692 = scalar_lea.vmem [#allocation3], 64
    %v1693 = vld [vmem:[%s1692] ss:$2 sm:$0x1f]
    %s1694 = scalar_lea.vmem [#allocation3], 80
    %v1695 = vld [vmem:[%s1694] ss:$2 sm:$0x1f]
    %s1696 = scalar_lea.vmem [#allocation3], 96
    %v1697 = vld [vmem:[%s1696] ss:$2 sm:$0x1f]
    %s1698 = scalar_lea.vmem [#allocation3], 112
    %v1699 = vld [vmem:[%s1698] ss:$2 sm:$0x1f]
    %s1700 = scalar_lea.vmem [#allocation3], 128
    %v1701 = vld [vmem:[%s1700] ss:$2 sm:$0x1f]
    %s1702 = scalar_lea.vmem [#allocation3], 144
    %v1703 = vld [vmem:[%s1702] ss:$2 sm:$0x1f]
    %s1704 = scalar_lea.vmem [#allocation3], 160
    %v1705 = vld [vmem:[%s1704] ss:$2 sm:$0x1f]
    %s1706 = scalar_lea.vmem [#allocation3], 176
    %v1707 = vld [vmem:[%s1706] ss:$2 sm:$0x1f]
    %s1708 = scalar_lea.vmem [#allocation3], 192
    %v1709 = vld [vmem:[%s1708] ss:$2 sm:$0x1f]
    %s1710 = scalar_lea.vmem [#allocation3], 208
    %v1711 = vld [vmem:[%s1710] ss:$2 sm:$0x1f]
    %s1712 = scalar_lea.vmem [#allocation3], 224
    %v1713 = vld [vmem:[%s1712] ss:$2 sm:$0x1f]
    %s1714 = scalar_lea.vmem [#allocation3], 240
    %v1715 = vld [vmem:[%s1714] ss:$2 sm:$0x1f]
    %s1716 = scalar_lea.vmem [#allocation3], 1
    %v1717 = vld [vmem:[%s1716] ss:$2 sm:$0x1f]
    %s1718 = scalar_lea.vmem [#allocation3], 17
    %v1719 = vld [vmem:[%s1718] ss:$2 sm:$0x1f]
    %s1720 = scalar_lea.vmem [#allocation3], 33
    %v1721 = vld [vmem:[%s1720] ss:$2 sm:$0x1f]
    %s1722 = scalar_lea.vmem [#allocation3], 49
    %v1723 = vld [vmem:[%s1722] ss:$2 sm:$0x1f]
    %s1724 = scalar_lea.vmem [#allocation3], 65
    %v1725 = vld [vmem:[%s1724] ss:$2 sm:$0x1f]
    %s1726 = scalar_lea.vmem [#allocation3], 81
    %v1727 = vld [vmem:[%s1726] ss:$2 sm:$0x1f]
    %s1728 = scalar_lea.vmem [#allocation3], 97
    %v1729 = vld [vmem:[%s1728] ss:$2 sm:$0x1f]
    %s1730 = scalar_lea.vmem [#allocation3], 113
    %v1731 = vld [vmem:[%s1730] ss:$2 sm:$0x1f]
    %s1732 = scalar_lea.vmem [#allocation3], 129
    %v1733 = vld [vmem:[%s1732] ss:$2 sm:$0x1f]
    %s1734 = scalar_lea.vmem [#allocation3], 145
    %v1735 = vld [vmem:[%s1734] ss:$2 sm:$0x1f]
    %s1736 = scalar_lea.vmem [#allocation3], 161
    %v1737 = vld [vmem:[%s1736] ss:$2 sm:$0x1f]
    %s1738 = scalar_lea.vmem [#allocation3], 177
    %v1739 = vld [vmem:[%s1738] ss:$2 sm:$0x1f]
    %s1740 = scalar_lea.vmem [#allocation3], 193
    %v1741 = vld [vmem:[%s1740] ss:$2 sm:$0x1f]
    %s1742 = scalar_lea.vmem [#allocation3], 209
    %v1743 = vld [vmem:[%s1742] ss:$2 sm:$0x1f]
    %s1744 = scalar_lea.vmem [#allocation3], 225
    %v1745 = vld [vmem:[%s1744] ss:$2 sm:$0x1f]
    %s1746 = scalar_lea.vmem [#allocation3], 241
    %v1747 = vld [vmem:[%s1746] ss:$2 sm:$0x1f]
    %v1748 = vmax.f32 %v1685, %v1717
    %v1749 = vmax.f32 %v1687, %v1719
    %v1750 = vmax.f32 %v1689, %v1721
    %v1751 = vmax.f32 %v1691, %v1723
    %v1752 = vmax.f32 %v1693, %v1725
    %v1753 = vmax.f32 %v1695, %v1727
    %v1754 = vmax.f32 %v1697, %v1729
    %v1755 = vmax.f32 %v1699, %v1731
    %v1756 = vmax.f32 %v1701, %v1733
    %v1757 = vmax.f32 %v1703, %v1735
    %v1758 = vmax.f32 %v1705, %v1737
    %v1759 = vmax.f32 %v1707, %v1739
    %v1760 = vmax.f32 %v1709, %v1741
    %v1761 = vmax.f32 %v1711, %v1743
    %v1762 = vmax.f32 %v1713, %v1745
    %v1763 = vmax.f32 %v1715, %v1747
    %v1764 = vpack.c.bf16 %v1748, %v1748
    %v1765 = vpack.c.bf16 %v1749, %v1749
    %v1766 = vpack.c.bf16 %v1750, %v1750
    %v1767 = vpack.c.bf16 %v1751, %v1751
    %v1768 = vpack.c.bf16 %v1752, %v1752
    %v1769 = vpack.c.bf16 %v1753, %v1753
    %v1770 = vpack.c.bf16 %v1754, %v1754
    %v1771 = vpack.c.bf16 %v1755, %v1755
    %v1772 = vpack.c.bf16 %v1756, %v1756
    %v1773 = vpack.c.bf16 %v1757, %v1757
    %v1774 = vpack.c.bf16 %v1758, %v1758
    %v1775 = vpack.c.bf16 %v1759, %v1759
    %v1776 = vpack.c.bf16 %v1760, %v1760
    %v1777 = vpack.c.bf16 %v1761, %v1761
    %v1778 = vpack.c.bf16 %v1762, %v1762
    %v1779 = vpack.c.bf16 %v1763, %v1763
    %v1796 = vrot.slane %v1764, 7
    %v1797 = vrot.slane %v1765, 7
    %v1798 = vrot.slane %v1766, 7
    %v1799 = vrot.slane %v1767, 7
    %v1800 = vrot.slane %v1768, 7
    %v1801 = vrot.slane %v1769, 7
    %v1802 = vrot.slane %v1770, 7
    %v1803 = vrot.slane %v1771, 7
    %v1804 = vrot.slane %v1772, 7
    %v1805 = vrot.slane %v1773, 7
    %v1806 = vrot.slane %v1774, 7
    %v1807 = vrot.slane %v1775, 7
    %v1808 = vrot.slane %v1776, 7
    %v1809 = vrot.slane %v1777, 7
    %v1810 = vrot.slane %v1778, 7
    %v1811 = vrot.slane %v1779, 7
    %vm1828 = vcmask 1043457
    %vm1829 = vmand %vm1828, %vm336
    %v1830 = vld [vmem:[#allocation2] sm:$0xe]
    %v1831 = vsel %vm1829, %v1796, %v1830
    %1832 = vst [vmem:[#allocation2] sm:$0xe] %v1831
    %v1833 = vld [vmem:[#allocation2 + $0xc] sm:$0xe]
    %v1834 = vsel %vm1829, %v1797, %v1833
    %1835 = vst [vmem:[#allocation2 + $0xc] sm:$0xe] %v1834
    %v1836 = vld [vmem:[#allocation2 + $0x18] sm:$0xe]
    %v1837 = vsel %vm1829, %v1798, %v1836
    %1838 = vst [vmem:[#allocation2 + $0x18] sm:$0xe] %v1837
    %v1839 = vld [vmem:[#allocation2 + $0x24] sm:$0xe]
    %v1840 = vsel %vm1829, %v1799, %v1839
    %1841 = vst [vmem:[#allocation2 + $0x24] sm:$0xe] %v1840
    %v1842 = vld [vmem:[#allocation2 + $0x30] sm:$0xe]
    %v1843 = vsel %vm1829, %v1800, %v1842
    %1844 = vst [vmem:[#allocation2 + $0x30] sm:$0xe] %v1843
    %v1845 = vld [vmem:[#allocation2 + $0x3c] sm:$0xe]
    %v1846 = vsel %vm1829, %v1801, %v1845
    %1847 = vst [vmem:[#allocation2 + $0x3c] sm:$0xe] %v1846
    %v1848 = vld [vmem:[#allocation2 + $0x48] sm:$0xe]
    %v1849 = vsel %vm1829, %v1802, %v1848
    %1850 = vst [vmem:[#allocation2 + $0x48] sm:$0xe] %v1849
    %v1851 = vld [vmem:[#allocation2 + $0x54] sm:$0xe]
    %v1852 = vsel %vm1829, %v1803, %v1851
    %1853 = vst [vmem:[#allocation2 + $0x54] sm:$0xe] %v1852
    %v1854 = vld [vmem:[#allocation2 + $0x60] sm:$0xe]
    %v1855 = vsel %vm1829, %v1804, %v1854
    %1856 = vst [vmem:[#allocation2 + $0x60] sm:$0xe] %v1855
    %v1857 = vld [vmem:[#allocation2 + $0x6c] sm:$0xe]
    %v1858 = vsel %vm1829, %v1805, %v1857
    %1859 = vst [vmem:[#allocation2 + $0x6c] sm:$0xe] %v1858
    %v1860 = vld [vmem:[#allocation2 + $0x78] sm:$0xe]
    %v1861 = vsel %vm1829, %v1806, %v1860
    %1862 = vst [vmem:[#allocation2 + $0x78] sm:$0xe] %v1861
    %v1863 = vld [vmem:[#allocation2 + $0x84] sm:$0xe]
    %v1864 = vsel %vm1829, %v1807, %v1863
    %1865 = vst [vmem:[#allocation2 + $0x84] sm:$0xe] %v1864
    %v1866 = vld [vmem:[#allocation2 + $0x90] sm:$0xe]
    %v1867 = vsel %vm1829, %v1808, %v1866
    %1868 = vst [vmem:[#allocation2 + $0x90] sm:$0xe] %v1867
    %v1869 = vld [vmem:[#allocation2 + $0x9c] sm:$0xe]
    %v1870 = vsel %vm1829, %v1809, %v1869
    %1871 = vst [vmem:[#allocation2 + $0x9c] sm:$0xe] %v1870
    %v1872 = vld [vmem:[#allocation2 + $0xa8] sm:$0xe]
    %v1873 = vsel %vm1829, %v1810, %v1872
    %1874 = vst [vmem:[#allocation2 + $0xa8] sm:$0xe] %v1873
    %v1875 = vld [vmem:[#allocation2 + $0xb4] sm:$0xe]
    %v1876 = vsel %vm1829, %v1811, %v1875
    %1877 = vst [vmem:[#allocation2 + $0xb4] sm:$0xe] %v1876
    %vm1878 = vcmask 1043459
    %vm1879 = vsmask.f32 7950
    %vm1880 = vmand %vm1878, %vm1879
    %v1881 = vld [vmem:[#allocation2] sm:$0x8]
    %v1882 = vsel %vm1880, 0, %v1881
    %1883 = vst [vmem:[#allocation2] sm:$0x8] %v1882
    %vm1884 = vcmask 1040384
    %vm1885 = vsmask.f32 256
    %vm1886 = vmand %vm1884, %vm1885
    %v1887 = vld [vmem:[#allocation2 + $0x4] sm:$0x1]
    %v1888 = vsel %vm1886, 0, %v1887
    %1889 = vst [vmem:[#allocation2 + $0x4] sm:$0x1] %v1888
    %v1890 = vld [vmem:[#allocation2 + $0xc] sm:$0x8]
    %v1891 = vsel %vm1880, 0, %v1890
    %1892 = vst [vmem:[#allocation2 + $0xc] sm:$0x8] %v1891
    %v1893 = vld [vmem:[#allocation2 + $0x10] sm:$0x1]
    %v1894 = vsel %vm1886, 0, %v1893
    %1895 = vst [vmem:[#allocation2 + $0x10] sm:$0x1] %v1894
    %v1896 = vld [vmem:[#allocation2 + $0x18] sm:$0x8]
    %v1897 = vsel %vm1880, 0, %v1896
    %1898 = vst [vmem:[#allocation2 + $0x18] sm:$0x8] %v1897
    %v1899 = vld [vmem:[#allocation2 + $0x1c] sm:$0x1]
    %v1900 = vsel %vm1886, 0, %v1899
    %1901 = vst [vmem:[#allocation2 + $0x1c] sm:$0x1] %v1900
    %v1902 = vld [vmem:[#allocation2 + $0x24] sm:$0x8]
    %v1903 = vsel %vm1880, 0, %v1902
    %1904 = vst [vmem:[#allocation2 + $0x24] sm:$0x8] %v1903
    %v1905 = vld [vmem:[#allocation2 + $0x28] sm:$0x1]
    %v1906 = vsel %vm1886, 0, %v1905
    %1907 = vst [vmem:[#allocation2 + $0x28] sm:$0x1] %v1906
    %v1908 = vld [vmem:[#allocation2 + $0x30] sm:$0x8]
    %v1909 = vsel %vm1880, 0, %v1908
    %1910 = vst [vmem:[#allocation2 + $0x30] sm:$0x8] %v1909
    %v1911 = vld [vmem:[#allocation2 + $0x34] sm:$0x1]
    %v1912 = vsel %vm1886, 0, %v1911
    %1913 = vst [vmem:[#allocation2 + $0x34] sm:$0x1] %v1912
    %v1914 = vld [vmem:[#allocation2 + $0x3c] sm:$0x8]
    %v1915 = vsel %vm1880, 0, %v1914
    %1916 = vst [vmem:[#allocation2 + $0x3c] sm:$0x8] %v1915
    %v1917 = vld [vmem:[#allocation2 + $0x40] sm:$0x1]
    %v1918 = vsel %vm1886, 0, %v1917
    %1919 = vst [vmem:[#allocation2 + $0x40] sm:$0x1] %v1918
    %v1920 = vld [vmem:[#allocation2 + $0x48] sm:$0x8]
    %v1921 = vsel %vm1880, 0, %v1920
    %1922 = vst [vmem:[#allocation2 + $0x48] sm:$0x8] %v1921
    %v1923 = vld [vmem:[#allocation2 + $0x4c] sm:$0x1]
    %v1924 = vsel %vm1886, 0, %v1923
    %1925 = vst [vmem:[#allocation2 + $0x4c] sm:$0x1] %v1924
    %v1926 = vld [vmem:[#allocation2 + $0x54] sm:$0x8]
    %v1927 = vsel %vm1880, 0, %v1926
    %1928 = vst [vmem:[#allocation2 + $0x54] sm:$0x8] %v1927
    %v1929 = vld [vmem:[#allocation2 + $0x58] sm:$0x1]
    %v1930 = vsel %vm1886, 0, %v1929
    %1931 = vst [vmem:[#allocation2 + $0x58] sm:$0x1] %v1930
    %v1932 = vld [vmem:[#allocation2 + $0x60] sm:$0x8]
    %v1933 = vsel %vm1880, 0, %v1932
    %1934 = vst [vmem:[#allocation2 + $0x60] sm:$0x8] %v1933
    %v1935 = vld [vmem:[#allocation2 + $0x64] sm:$0x1]
    %v1936 = vsel %vm1886, 0, %v1935
    %1937 = vst [vmem:[#allocation2 + $0x64] sm:$0x1] %v1936
    %v1938 = vld [vmem:[#allocation2 + $0x6c] sm:$0x8]
    %v1939 = vsel %vm1880, 0, %v1938
    %1940 = vst [vmem:[#allocation2 + $0x6c] sm:$0x8] %v1939
    %v1941 = vld [vmem:[#allocation2 + $0x70] sm:$0x1]
    %v1942 = vsel %vm1886, 0, %v1941
    %1943 = vst [vmem:[#allocation2 + $0x70] sm:$0x1] %v1942
    %v1944 = vld [vmem:[#allocation2 + $0x78] sm:$0x8]
    %v1945 = vsel %vm1880, 0, %v1944
    %1946 = vst [vmem:[#allocation2 + $0x78] sm:$0x8] %v1945
    %v1947 = vld [vmem:[#allocation2 + $0x7c] sm:$0x1]
    %v1948 = vsel %vm1886, 0, %v1947
    %1949 = vst [vmem:[#allocation2 + $0x7c] sm:$0x1] %v1948
    %v1950 = vld [vmem:[#allocation2 + $0x84] sm:$0x8]
    %v1951 = vsel %vm1880, 0, %v1950
    %1952 = vst [vmem:[#allocation2 + $0x84] sm:$0x8] %v1951
    %v1953 = vld [vmem:[#allocation2 + $0x88] sm:$0x1]
    %v1954 = vsel %vm1886, 0, %v1953
    %1955 = vst [vmem:[#allocation2 + $0x88] sm:$0x1] %v1954
    %v1956 = vld [vmem:[#allocation2 + $0x90] sm:$0x8]
    %v1957 = vsel %vm1880, 0, %v1956
    %1958 = vst [vmem:[#allocation2 + $0x90] sm:$0x8] %v1957
    %v1959 = vld [vmem:[#allocation2 + $0x94] sm:$0x1]
    %v1960 = vsel %vm1886, 0, %v1959
    %1961 = vst [vmem:[#allocation2 + $0x94] sm:$0x1] %v1960
    %v1962 = vld [vmem:[#allocation2 + $0x9c] sm:$0x8]
    %v1963 = vsel %vm1880, 0, %v1962
    %1964 = vst [vmem:[#allocation2 + $0x9c] sm:$0x8] %v1963
    %v1965 = vld [vmem:[#allocation2 + $0xa0] sm:$0x1]
    %v1966 = vsel %vm1886, 0, %v1965
    %1967 = vst [vmem:[#allocation2 + $0xa0] sm:$0x1] %v1966
    %v1968 = vld [vmem:[#allocation2 + $0xa8] sm:$0x8]
    %v1969 = vsel %vm1880, 0, %v1968
    %1970 = vst [vmem:[#allocation2 + $0xa8] sm:$0x8] %v1969
    %v1971 = vld [vmem:[#allocation2 + $0xac] sm:$0x1]
    %v1972 = vsel %vm1886, 0, %v1971
    %1973 = vst [vmem:[#allocation2 + $0xac] sm:$0x1] %v1972
    %v1974 = vld [vmem:[#allocation2 + $0xb4] sm:$0x8]
    %v1975 = vsel %vm1880, 0, %v1974
    %1976 = vst [vmem:[#allocation2 + $0xb4] sm:$0x8] %v1975
    %v1977 = vld [vmem:[#allocation2 + $0xb8] sm:$0x1]
    %v1978 = vsel %vm1886, 0, %v1977
    %1979 = vst [vmem:[#allocation2 + $0xb8] sm:$0x1] %v1978
    %v1980 = vld [vmem:[#allocation2] sm:$0xf]
    %v1981 = vld [vmem:[#allocation2 + $0x4] sm:$0xf]
    %v1982 = vld [vmem:[#allocation2 + $0xc] sm:$0xf]
    %v1983 = vld [vmem:[#allocation2 + $0x10] sm:$0xf]
    %v1984 = vld [vmem:[#allocation2 + $0x18] sm:$0xf]
    %v1985 = vld [vmem:[#allocation2 + $0x1c] sm:$0xf]
    %v1986 = vld [vmem:[#allocation2 + $0x24] sm:$0xf]
    %v1987 = vld [vmem:[#allocation2 + $0x28] sm:$0xf]
    %v1988 = vld [vmem:[#allocation2 + $0x30] sm:$0xf]
    %v1989 = vld [vmem:[#allocation2 + $0x34] sm:$0xf]
    %v1990 = vld [vmem:[#allocation2 + $0x3c] sm:$0xf]
    %v1991 = vld [vmem:[#allocation2 + $0x40] sm:$0xf]
    %v1992 = vld [vmem:[#allocation2 + $0x48] sm:$0xf]
    %v1993 = vld [vmem:[#allocation2 + $0x4c] sm:$0xf]
    %v1994 = vld [vmem:[#allocation2 + $0x54] sm:$0xf]
    %v1995 = vld [vmem:[#allocation2 + $0x58] sm:$0xf]
    %v1996 = vld [vmem:[#allocation2 + $0x60] sm:$0xf]
    %v1997 = vld [vmem:[#allocation2 + $0x64] sm:$0xf]
    %v1998 = vld [vmem:[#allocation2 + $0x6c] sm:$0xf]
    %v1999 = vld [vmem:[#allocation2 + $0x70] sm:$0xf]
    %v2000 = vld [vmem:[#allocation2 + $0x78] sm:$0xf]
    %v2001 = vld [vmem:[#allocation2 + $0x7c] sm:$0xf]
    %v2002 = vld [vmem:[#allocation2 + $0x84] sm:$0xf]
    %v2003 = vld [vmem:[#allocation2 + $0x88] sm:$0xf]
    %v2004 = vld [vmem:[#allocation2 + $0x90] sm:$0xf]
    %v2005 = vld [vmem:[#allocation2 + $0x94] sm:$0xf]
    %v2006 = vld [vmem:[#allocation2 + $0x9c] sm:$0xf]
    %v2007 = vld [vmem:[#allocation2 + $0xa0] sm:$0xf]
    %v2008 = vld [vmem:[#allocation2 + $0xa8] sm:$0xf]
    %v2009 = vld [vmem:[#allocation2 + $0xac] sm:$0xf]
    %v2010 = vld [vmem:[#allocation2 + $0xb4] sm:$0xf]
    %v2011 = vld [vmem:[#allocation2 + $0xb8] sm:$0xf]
    %s2012 = scalar_lea.vmem [#allocation7], 192
    %v2013 = vld [vmem:[%s2012] sm:$0xf]
    %v2014 = vld [vmem:[%s2012 + $0x4] sm:$0xf]
    %v2015 = vld [vmem:[%s2012 + $0x8] sm:$0xf]
    %v2016 = vld [vmem:[%s2012 + $0xc] sm:$0xf]
    %v2017 = vld [vmem:[%s2012 + $0x10] sm:$0xf]
    %v2018 = vld [vmem:[%s2012 + $0x14] sm:$0xf]
    %v2019 = vld [vmem:[%s2012 + $0x18] sm:$0xf]
    %v2020 = vld [vmem:[%s2012 + $0x1c] sm:$0xf]
    %v2021 = vld [vmem:[%s2012 + $0x20] sm:$0xf]
    %v2022 = vld [vmem:[%s2012 + $0x24] sm:$0xf]
    %v2023 = vld [vmem:[%s2012 + $0x28] sm:$0xf]
    %v2024 = vld [vmem:[%s2012 + $0x2c] sm:$0xf]
    %v2025 = vld [vmem:[%s2012 + $0x30] sm:$0xf]
    %v2026 = vld [vmem:[%s2012 + $0x34] sm:$0xf]
    %v2027 = vld [vmem:[%s2012 + $0x38] sm:$0xf]
    %v2028 = vld [vmem:[%s2012 + $0x3c] sm:$0xf]
    %v2029 = vld [vmem:[#allocation2 + $0x8] sm:$0x1]
    %v2030 = vld [vmem:[#allocation2 + $0x14] sm:$0x1]
    %v2031 = vld [vmem:[#allocation2 + $0x20] sm:$0x1]
    %v2032 = vld [vmem:[#allocation2 + $0x2c] sm:$0x1]
    %v2033 = vld [vmem:[#allocation2 + $0x38] sm:$0x1]
    %v2034 = vld [vmem:[#allocation2 + $0x44] sm:$0x1]
    %v2035 = vld [vmem:[#allocation2 + $0x50] sm:$0x1]
    %v2036 = vld [vmem:[#allocation2 + $0x5c] sm:$0x1]
    %v2037 = vld [vmem:[#allocation2 + $0x68] sm:$0x1]
    %v2038 = vld [vmem:[#allocation2 + $0x74] sm:$0x1]
    %v2039 = vld [vmem:[#allocation2 + $0x80] sm:$0x1]
    %v2040 = vld [vmem:[#allocation2 + $0x8c] sm:$0x1]
    %v2041 = vld [vmem:[#allocation2 + $0x98] sm:$0x1]
    %v2042 = vld [vmem:[#allocation2 + $0xa4] sm:$0x1]
    %v2043 = vld [vmem:[#allocation2 + $0xb0] sm:$0x1]
    %v2044 = vld [vmem:[#allocation2 + $0xbc] sm:$0x1]
    %v2046 = vshrl.u32 %v1980, 16
    %v2048 = vrot.slane %v2046, 4
    %v2049 = vshll.u32 %v1980, 16
    %v2051 = vrot.slane %v2049, 5
    %v2052 = vor.u32 %v2048, %v2051
    %v2053 = vrot.slane %v2052, 4
    %v2055 = vshll.u32 %v1981, 16
    %v2057 = vrot.slane %v2055, 5
    %v2058 = vsel %vm338, %v2053, %v2057
    %v2059 = vshrl.u32 %v1981, 16
    %v2061 = vrot.slane %v2059, 4
    %v2062 = vor.u32 %v2061, %v2057
    %v2063 = vrot.slane %v2062, 4
    %v2065 = vshll.u32 %v2029, 16
    %v2067 = vrot.slane %v2065, 5
    %v2068 = vsel %vm338, %v2063, %v2067
    %v2070 = vshrl.u32 %v1982, 16
    %v2072 = vrot.slane %v2070, 4
    %v2073 = vshll.u32 %v1982, 16
    %v2075 = vrot.slane %v2073, 5
    %v2076 = vor.u32 %v2072, %v2075
    %v2077 = vrot.slane %v2076, 4
    %v2079 = vshll.u32 %v1983, 16
    %v2081 = vrot.slane %v2079, 5
    %v2082 = vsel %vm338, %v2077, %v2081
    %v2083 = vshrl.u32 %v1983, 16
    %v2085 = vrot.slane %v2083, 4
    %v2086 = vor.u32 %v2085, %v2081
    %v2087 = vrot.slane %v2086, 4
    %v2089 = vshll.u32 %v2030, 16
    %v2091 = vrot.slane %v2089, 5
    %v2092 = vsel %vm338, %v2087, %v2091
    %v2094 = vshrl.u32 %v1984, 16
    %v2096 = vrot.slane %v2094, 4
    %v2097 = vshll.u32 %v1984, 16
    %v2099 = vrot.slane %v2097, 5
    %v2100 = vor.u32 %v2096, %v2099
    %v2101 = vrot.slane %v2100, 4
    %v2103 = vshll.u32 %v1985, 16
    %v2105 = vrot.slane %v2103, 5
    %v2106 = vsel %vm338, %v2101, %v2105
    %v2107 = vshrl.u32 %v1985, 16
    %v2109 = vrot.slane %v2107, 4
    %v2110 = vor.u32 %v2109, %v2105
    %v2111 = vrot.slane %v2110, 4
    %v2113 = vshll.u32 %v2031, 16
    %v2115 = vrot.slane %v2113, 5
    %v2116 = vsel %vm338, %v2111, %v2115
    %v2118 = vshrl.u32 %v1986, 16
    %v2120 = vrot.slane %v2118, 4
    %v2121 = vshll.u32 %v1986, 16
    %v2123 = vrot.slane %v2121, 5
    %v2124 = vor.u32 %v2120, %v2123
    %v2125 = vrot.slane %v2124, 4
    %v2127 = vshll.u32 %v1987, 16
    %v2129 = vrot.slane %v2127, 5
    %v2130 = vsel %vm338, %v2125, %v2129
    %v2131 = vshrl.u32 %v1987, 16
    %v2133 = vrot.slane %v2131, 4
    %v2134 = vor.u32 %v2133, %v2129
    %v2135 = vrot.slane %v2134, 4
    %v2137 = vshll.u32 %v2032, 16
    %v2139 = vrot.slane %v2137, 5
    %v2140 = vsel %vm338, %v2135, %v2139
    %v2142 = vshrl.u32 %v1988, 16
    %v2144 = vrot.slane %v2142, 4
    %v2145 = vshll.u32 %v1988, 16
    %v2147 = vrot.slane %v2145, 5
    %v2148 = vor.u32 %v2144, %v2147
    %v2149 = vrot.slane %v2148, 4
    %v2151 = vshll.u32 %v1989, 16
    %v2153 = vrot.slane %v2151, 5
    %v2154 = vsel %vm338, %v2149, %v2153
    %v2155 = vshrl.u32 %v1989, 16
    %v2157 = vrot.slane %v2155, 4
    %v2158 = vor.u32 %v2157, %v2153
    %v2159 = vrot.slane %v2158, 4
    %v2161 = vshll.u32 %v2033, 16
    %v2163 = vrot.slane %v2161, 5
    %v2164 = vsel %vm338, %v2159, %v2163
    %v2166 = vshrl.u32 %v1990, 16
    %v2168 = vrot.slane %v2166, 4
    %v2169 = vshll.u32 %v1990, 16
    %v2171 = vrot.slane %v2169, 5
    %v2172 = vor.u32 %v2168, %v2171
    %v2173 = vrot.slane %v2172, 4
    %v2175 = vshll.u32 %v1991, 16
    %v2177 = vrot.slane %v2175, 5
    %v2178 = vsel %vm338, %v2173, %v2177
    %v2179 = vshrl.u32 %v1991, 16
    %v2181 = vrot.slane %v2179, 4
    %v2182 = vor.u32 %v2181, %v2177
    %v2183 = vrot.slane %v2182, 4
    %v2185 = vshll.u32 %v2034, 16
    %v2187 = vrot.slane %v2185, 5
    %v2188 = vsel %vm338, %v2183, %v2187
    %v2190 = vshrl.u32 %v1992, 16
    %v2192 = vrot.slane %v2190, 4
    %v2193 = vshll.u32 %v1992, 16
    %v2195 = vrot.slane %v2193, 5
    %v2196 = vor.u32 %v2192, %v2195
    %v2197 = vrot.slane %v2196, 4
    %v2199 = vshll.u32 %v1993, 16
    %v2201 = vrot.slane %v2199, 5
    %v2202 = vsel %vm338, %v2197, %v2201
    %v2203 = vshrl.u32 %v1993, 16
    %v2205 = vrot.slane %v2203, 4
    %v2206 = vor.u32 %v2205, %v2201
    %v2207 = vrot.slane %v2206, 4
    %v2209 = vshll.u32 %v2035, 16
    %v2211 = vrot.slane %v2209, 5
    %v2212 = vsel %vm338, %v2207, %v2211
    %v2214 = vshrl.u32 %v1994, 16
    %v2216 = vrot.slane %v2214, 4
    %v2217 = vshll.u32 %v1994, 16
    %v2219 = vrot.slane %v2217, 5
    %v2220 = vor.u32 %v2216, %v2219
    %v2221 = vrot.slane %v2220, 4
    %v2223 = vshll.u32 %v1995, 16
    %v2225 = vrot.slane %v2223, 5
    %v2226 = vsel %vm338, %v2221, %v2225
    %v2227 = vshrl.u32 %v1995, 16
    %v2229 = vrot.slane %v2227, 4
    %v2230 = vor.u32 %v2229, %v2225
    %v2231 = vrot.slane %v2230, 4
    %v2233 = vshll.u32 %v2036, 16
    %v2235 = vrot.slane %v2233, 5
    %v2236 = vsel %vm338, %v2231, %v2235
    %v2238 = vshrl.u32 %v1996, 16
    %v2240 = vrot.slane %v2238, 4
    %v2241 = vshll.u32 %v1996, 16
    %v2243 = vrot.slane %v2241, 5
    %v2244 = vor.u32 %v2240, %v2243
    %v2245 = vrot.slane %v2244, 4
    %v2247 = vshll.u32 %v1997, 16
    %v2249 = vrot.slane %v2247, 5
    %v2250 = vsel %vm338, %v2245, %v2249
    %v2251 = vshrl.u32 %v1997, 16
    %v2253 = vrot.slane %v2251, 4
    %v2254 = vor.u32 %v2253, %v2249
    %v2255 = vrot.slane %v2254, 4
    %v2257 = vshll.u32 %v2037, 16
    %v2259 = vrot.slane %v2257, 5
    %v2260 = vsel %vm338, %v2255, %v2259
    %v2262 = vshrl.u32 %v1998, 16
    %v2264 = vrot.slane %v2262, 4
    %v2265 = vshll.u32 %v1998, 16
    %v2267 = vrot.slane %v2265, 5
    %v2268 = vor.u32 %v2264, %v2267
    %v2269 = vrot.slane %v2268, 4
    %v2271 = vshll.u32 %v1999, 16
    %v2273 = vrot.slane %v2271, 5
    %v2274 = vsel %vm338, %v2269, %v2273
    %v2275 = vshrl.u32 %v1999, 16
    %v2277 = vrot.slane %v2275, 4
    %v2278 = vor.u32 %v2277, %v2273
    %v2279 = vrot.slane %v2278, 4
    %v2281 = vshll.u32 %v2038, 16
    %v2283 = vrot.slane %v2281, 5
    %v2284 = vsel %vm338, %v2279, %v2283
    %v2286 = vshrl.u32 %v2000, 16
    %v2288 = vrot.slane %v2286, 4
    %v2289 = vshll.u32 %v2000, 16
    %v2291 = vrot.slane %v2289, 5
    %v2292 = vor.u32 %v2288, %v2291
    %v2293 = vrot.slane %v2292, 4
    %v2295 = vshll.u32 %v2001, 16
    %v2297 = vrot.slane %v2295, 5
    %v2298 = vsel %vm338, %v2293, %v2297
    %v2299 = vshrl.u32 %v2001, 16
    %v2301 = vrot.slane %v2299, 4
    %v2302 = vor.u32 %v2301, %v2297
    %v2303 = vrot.slane %v2302, 4
    %v2305 = vshll.u32 %v2039, 16
    %v2307 = vrot.slane %v2305, 5
    %v2308 = vsel %vm338, %v2303, %v2307
    %v2310 = vshrl.u32 %v2002, 16
    %v2312 = vrot.slane %v2310, 4
    %v2313 = vshll.u32 %v2002, 16
    %v2315 = vrot.slane %v2313, 5
    %v2316 = vor.u32 %v2312, %v2315
    %v2317 = vrot.slane %v2316, 4
    %v2319 = vshll.u32 %v2003, 16
    %v2321 = vrot.slane %v2319, 5
    %v2322 = vsel %vm338, %v2317, %v2321
    %v2323 = vshrl.u32 %v2003, 16
    %v2325 = vrot.slane %v2323, 4
    %v2326 = vor.u32 %v2325, %v2321
    %v2327 = vrot.slane %v2326, 4
    %v2329 = vshll.u32 %v2040, 16
    %v2331 = vrot.slane %v2329, 5
    %v2332 = vsel %vm338, %v2327, %v2331
    %v2334 = vshrl.u32 %v2004, 16
    %v2336 = vrot.slane %v2334, 4
    %v2337 = vshll.u32 %v2004, 16
    %v2339 = vrot.slane %v2337, 5
    %v2340 = vor.u32 %v2336, %v2339
    %v2341 = vrot.slane %v2340, 4
    %v2343 = vshll.u32 %v2005, 16
    %v2345 = vrot.slane %v2343, 5
    %v2346 = vsel %vm338, %v2341, %v2345
    %v2347 = vshrl.u32 %v2005, 16
    %v2349 = vrot.slane %v2347, 4
    %v2350 = vor.u32 %v2349, %v2345
    %v2351 = vrot.slane %v2350, 4
    %v2353 = vshll.u32 %v2041, 16
    %v2355 = vrot.slane %v2353, 5
    %v2356 = vsel %vm338, %v2351, %v2355
    %v2358 = vshrl.u32 %v2006, 16
    %v2360 = vrot.slane %v2358, 4
    %v2361 = vshll.u32 %v2006, 16
    %v2363 = vrot.slane %v2361, 5
    %v2364 = vor.u32 %v2360, %v2363
    %v2365 = vrot.slane %v2364, 4
    %v2367 = vshll.u32 %v2007, 16
    %v2369 = vrot.slane %v2367, 5
    %v2370 = vsel %vm338, %v2365, %v2369
    %v2371 = vshrl.u32 %v2007, 16
    %v2373 = vrot.slane %v2371, 4
    %v2374 = vor.u32 %v2373, %v2369
    %v2375 = vrot.slane %v2374, 4
    %v2377 = vshll.u32 %v2042, 16
    %v2379 = vrot.slane %v2377, 5
    %v2380 = vsel %vm338, %v2375, %v2379
    %v2382 = vshrl.u32 %v2008, 16
    %v2384 = vrot.slane %v2382, 4
    %v2385 = vshll.u32 %v2008, 16
    %v2387 = vrot.slane %v2385, 5
    %v2388 = vor.u32 %v2384, %v2387
    %v2389 = vrot.slane %v2388, 4
    %v2391 = vshll.u32 %v2009, 16
    %v2393 = vrot.slane %v2391, 5
    %v2394 = vsel %vm338, %v2389, %v2393
    %v2395 = vshrl.u32 %v2009, 16
    %v2397 = vrot.slane %v2395, 4
    %v2398 = vor.u32 %v2397, %v2393
    %v2399 = vrot.slane %v2398, 4
    %v2401 = vshll.u32 %v2043, 16
    %v2403 = vrot.slane %v2401, 5
    %v2404 = vsel %vm338, %v2399, %v2403
    %v2406 = vshrl.u32 %v2010, 16
    %v2408 = vrot.slane %v2406, 4
    %v2409 = vshll.u32 %v2010, 16
    %v2411 = vrot.slane %v2409, 5
    %v2412 = vor.u32 %v2408, %v2411
    %v2413 = vrot.slane %v2412, 4
    %v2415 = vshll.u32 %v2011, 16
    %v2417 = vrot.slane %v2415, 5
    %v2418 = vsel %vm338, %v2413, %v2417
    %v2419 = vshrl.u32 %v2011, 16
    %v2421 = vrot.slane %v2419, 4
    %v2422 = vor.u32 %v2421, %v2417
    %v2423 = vrot.slane %v2422, 4
    %v2425 = vshll.u32 %v2044, 16
    %v2427 = vrot.slane %v2425, 5
    %v2428 = vsel %vm338, %v2423, %v2427
    %s2429 = scalar_lea.vmem [#allocation7], 256
    %v2430 = vld [vmem:[%s2429] sm:$0xf]
    %v2431 = vld [vmem:[%s2429 + $0x4] sm:$0xf]
    %v2432 = vld [vmem:[%s2429 + $0x8] sm:$0xf]
    %v2433 = vld [vmem:[%s2429 + $0xc] sm:$0xf]
    %v2434 = vld [vmem:[%s2429 + $0x10] sm:$0xf]
    %v2435 = vld [vmem:[%s2429 + $0x14] sm:$0xf]
    %v2436 = vld [vmem:[%s2429 + $0x18] sm:$0xf]
    %v2437 = vld [vmem:[%s2429 + $0x1c] sm:$0xf]
    %v2438 = vld [vmem:[%s2429 + $0x20] sm:$0xf]
    %v2439 = vld [vmem:[%s2429 + $0x24] sm:$0xf]
    %v2440 = vld [vmem:[%s2429 + $0x28] sm:$0xf]
    %v2441 = vld [vmem:[%s2429 + $0x2c] sm:$0xf]
    %v2442 = vld [vmem:[%s2429 + $0x30] sm:$0xf]
    %v2443 = vld [vmem:[%s2429 + $0x34] sm:$0xf]
    %v2444 = vld [vmem:[%s2429 + $0x38] sm:$0xf]
    %v2445 = vld [vmem:[%s2429 + $0x3c] sm:$0xf]
    %v2446 = vunpack.c.l.b16 %v2058
    %v2447 = vunpack.c.l.b16 %v2068
    %v2448 = vunpack.c.l.b16 %v2082
    %v2449 = vunpack.c.l.b16 %v2092
    %v2450 = vunpack.c.l.b16 %v2106
    %v2451 = vunpack.c.l.b16 %v2116
    %v2452 = vunpack.c.l.b16 %v2130
    %v2453 = vunpack.c.l.b16 %v2140
    %v2454 = vunpack.c.l.b16 %v2154
    %v2455 = vunpack.c.l.b16 %v2164
    %v2456 = vunpack.c.l.b16 %v2178
    %v2457 = vunpack.c.l.b16 %v2188
    %v2458 = vunpack.c.l.b16 %v2202
    %v2459 = vunpack.c.l.b16 %v2212
    %v2460 = vunpack.c.l.b16 %v2226
    %v2461 = vunpack.c.l.b16 %v2236
    %v2462 = vunpack.c.l.b16 %v2250
    %v2463 = vunpack.c.l.b16 %v2260
    %v2464 = vunpack.c.l.b16 %v2274
    %v2465 = vunpack.c.l.b16 %v2284
    %v2466 = vunpack.c.l.b16 %v2298
    %v2467 = vunpack.c.l.b16 %v2308
    %v2468 = vunpack.c.l.b16 %v2322
    %v2469 = vunpack.c.l.b16 %v2332
    %v2470 = vunpack.c.l.b16 %v2346
    %v2471 = vunpack.c.l.b16 %v2356
    %v2472 = vunpack.c.l.b16 %v2370
    %v2473 = vunpack.c.l.b16 %v2380
    %v2474 = vunpack.c.l.b16 %v2394
    %v2475 = vunpack.c.l.b16 %v2404
    %v2476 = vunpack.c.l.b16 %v2418
    %v2477 = vunpack.c.l.b16 %v2428
    %v2478 = vpack.c.b16 %v2447, %v2446
    %v2479 = vpack.c.b16 %v2449, %v2448
    %v2480 = vpack.c.b16 %v2451, %v2450
    %v2481 = vpack.c.b16 %v2453, %v2452
    %v2482 = vpack.c.b16 %v2455, %v2454
    %v2483 = vpack.c.b16 %v2457, %v2456
    %v2484 = vpack.c.b16 %v2459, %v2458
    %v2485 = vpack.c.b16 %v2461, %v2460
    %v2486 = vpack.c.b16 %v2463, %v2462
    %v2487 = vpack.c.b16 %v2465, %v2464
    %v2488 = vpack.c.b16 %v2467, %v2466
    %v2489 = vpack.c.b16 %v2469, %v2468
    %v2490 = vpack.c.b16 %v2471, %v2470
    %v2491 = vpack.c.b16 %v2473, %v2472
    %v2492 = vpack.c.b16 %v2475, %v2474
    %v2493 = vpack.c.b16 %v2477, %v2476
    %v2526 = vunpack.c.l.b16 %v2430
    %v2527 = vunpack.c.l.b16 %v2431
    %v2528 = vunpack.c.l.b16 %v2432
    %v2529 = vunpack.c.l.b16 %v2433
    %v2530 = vunpack.c.l.b16 %v2434
    %v2531 = vunpack.c.l.b16 %v2435
    %v2532 = vunpack.c.l.b16 %v2436
    %v2533 = vunpack.c.l.b16 %v2437
    %v2534 = vunpack.c.l.b16 %v2438
    %v2535 = vunpack.c.l.b16 %v2439
    %v2536 = vunpack.c.l.b16 %v2440
    %v2537 = vunpack.c.l.b16 %v2441
    %v2538 = vunpack.c.l.b16 %v2442
    %v2539 = vunpack.c.l.b16 %v2443
    %v2540 = vunpack.c.l.b16 %v2444
    %v2541 = vunpack.c.l.b16 %v2445
    %v2542 = vpack.c.b16 %v2527, %v2526
    %v2543 = vpack.c.b16 %v2529, %v2528
    %v2544 = vpack.c.b16 %v2531, %v2530
    %v2545 = vpack.c.b16 %v2533, %v2532
    %v2546 = vpack.c.b16 %v2535, %v2534
    %v2547 = vpack.c.b16 %v2537, %v2536
    %v2548 = vpack.c.b16 %v2539, %v2538
    %v2549 = vpack.c.b16 %v2541, %v2540
    %2558 = vmatpush.bf16.msra.mxu0 %v2549
    %2559 = vmatpush.bf16.msra.mxu0 %v2548
    %2560 = vmatpush.bf16.msra.mxu0 %v2547
    %2561 = vmatpush.bf16.msra.mxu0 %v2546
    %2562 = vmatpush.bf16.msra.mxu0 %v2545
    %2563 = vmatpush.bf16.msra.mxu0 %v2544
    %2564 = vmatpush.bf16.msra.mxu0 %v2543
    %2565 = vmatpush.bf16.msra.mxu0 %v2542
    %2566 = vmatmul.bf16.gmra.mxu0 %v2478
    %v2567 = vpop.f32.mrf.mxu0
    %v2568 = vadd.f32 0.0, %v2567
    %v2569 = vpop.f32.mrf.mxu0
    %2570 = vmatmul.bf16.gmra.mxu0 %v2479
    %v2571 = vpop.f32.mrf.mxu0
    %v2572 = vadd.f32 0.0, %v2571
    %v2573 = vpop.f32.mrf.mxu0
    %2574 = vmatmul.bf16.gmra.mxu0 %v2480
    %v2575 = vpop.f32.mrf.mxu0
    %v2576 = vadd.f32 0.0, %v2575
    %v2577 = vpop.f32.mrf.mxu0
    %2578 = vmatmul.bf16.gmra.mxu0 %v2481
    %v2579 = vpop.f32.mrf.mxu0
    %v2580 = vadd.f32 0.0, %v2579
    %v2581 = vpop.f32.mrf.mxu0
    %2582 = vmatmul.bf16.gmra.mxu0 %v2482
    %v2583 = vpop.f32.mrf.mxu0
    %v2584 = vadd.f32 0.0, %v2583
    %v2585 = vpop.f32.mrf.mxu0
    %2586 = vmatmul.bf16.gmra.mxu0 %v2483
    %v2587 = vpop.f32.mrf.mxu0
    %v2588 = vadd.f32 0.0, %v2587
    %v2589 = vpop.f32.mrf.mxu0
    %2590 = vmatmul.bf16.gmra.mxu0 %v2484
    %v2591 = vpop.f32.mrf.mxu0
    %v2592 = vadd.f32 0.0, %v2591
    %v2593 = vpop.f32.mrf.mxu0
    %2594 = vmatmul.bf16.gmra.mxu0 %v2485
    %v2595 = vpop.f32.mrf.mxu0
    %v2596 = vadd.f32 0.0, %v2595
    %v2597 = vpop.f32.mrf.mxu0
    %2598 = vmatmul.bf16.gmra.mxu0 %v2486
    %v2599 = vpop.f32.mrf.mxu0
    %v2600 = vadd.f32 0.0, %v2599
    %v2601 = vpop.f32.mrf.mxu0
    %2602 = vmatmul.bf16.gmra.mxu0 %v2487
    %v2603 = vpop.f32.mrf.mxu0
    %v2604 = vadd.f32 0.0, %v2603
    %v2605 = vpop.f32.mrf.mxu0
    %2606 = vmatmul.bf16.gmra.mxu0 %v2488
    %v2607 = vpop.f32.mrf.mxu0
    %v2608 = vadd.f32 0.0, %v2607
    %v2609 = vpop.f32.mrf.mxu0
    %2610 = vmatmul.bf16.gmra.mxu0 %v2489
    %v2611 = vpop.f32.mrf.mxu0
    %v2612 = vadd.f32 0.0, %v2611
    %v2613 = vpop.f32.mrf.mxu0
    %2614 = vmatmul.bf16.gmra.mxu0 %v2490
    %v2615 = vpop.f32.mrf.mxu0
    %v2616 = vadd.f32 0.0, %v2615
    %v2617 = vpop.f32.mrf.mxu0
    %2618 = vmatmul.bf16.gmra.mxu0 %v2491
    %v2619 = vpop.f32.mrf.mxu0
    %v2620 = vadd.f32 0.0, %v2619
    %v2621 = vpop.f32.mrf.mxu0
    %2622 = vmatmul.bf16.gmra.mxu0 %v2492
    %v2623 = vpop.f32.mrf.mxu0
    %v2624 = vadd.f32 0.0, %v2623
    %v2625 = vpop.f32.mrf.mxu0
    %2626 = vmatmul.bf16.gmra.mxu0 %v2493
    %v2627 = vpop.f32.mrf.mxu0
    %v2628 = vadd.f32 0.0, %v2627
    %v2629 = vpop.f32.mrf.mxu0
    %2630 = vdwg.mxu0
    %v2663 = vunpack.c.l.b16 %v1980
    %v2664 = vunpack.c.l.b16 %v1981
    %v2665 = vunpack.c.l.b16 %v1982
    %v2666 = vunpack.c.l.b16 %v1983
    %v2667 = vunpack.c.l.b16 %v1984
    %v2668 = vunpack.c.l.b16 %v1985
    %v2669 = vunpack.c.l.b16 %v1986
    %v2670 = vunpack.c.l.b16 %v1987
    %v2671 = vunpack.c.l.b16 %v1988
    %v2672 = vunpack.c.l.b16 %v1989
    %v2673 = vunpack.c.l.b16 %v1990
    %v2674 = vunpack.c.l.b16 %v1991
    %v2675 = vunpack.c.l.b16 %v1992
    %v2676 = vunpack.c.l.b16 %v1993
    %v2677 = vunpack.c.l.b16 %v1994
    %v2678 = vunpack.c.l.b16 %v1995
    %v2679 = vunpack.c.l.b16 %v1996
    %v2680 = vunpack.c.l.b16 %v1997
    %v2681 = vunpack.c.l.b16 %v1998
    %v2682 = vunpack.c.l.b16 %v1999
    %v2683 = vunpack.c.l.b16 %v2000
    %v2684 = vunpack.c.l.b16 %v2001
    %v2685 = vunpack.c.l.b16 %v2002
    %v2686 = vunpack.c.l.b16 %v2003
    %v2687 = vunpack.c.l.b16 %v2004
    %v2688 = vunpack.c.l.b16 %v2005
    %v2689 = vunpack.c.l.b16 %v2006
    %v2690 = vunpack.c.l.b16 %v2007
    %v2691 = vunpack.c.l.b16 %v2008
    %v2692 = vunpack.c.l.b16 %v2009
    %v2693 = vunpack.c.l.b16 %v2010
    %v2694 = vunpack.c.l.b16 %v2011
    %v2695 = vpack.c.b16 %v2664, %v2663
    %v2696 = vpack.c.b16 %v2666, %v2665
    %v2697 = vpack.c.b16 %v2668, %v2667
    %v2698 = vpack.c.b16 %v2670, %v2669
    %v2699 = vpack.c.b16 %v2672, %v2671
    %v2700 = vpack.c.b16 %v2674, %v2673
    %v2701 = vpack.c.b16 %v2676, %v2675
    %v2702 = vpack.c.b16 %v2678, %v2677
    %v2703 = vpack.c.b16 %v2680, %v2679
    %v2704 = vpack.c.b16 %v2682, %v2681
    %v2705 = vpack.c.b16 %v2684, %v2683
    %v2706 = vpack.c.b16 %v2686, %v2685
    %v2707 = vpack.c.b16 %v2688, %v2687
    %v2708 = vpack.c.b16 %v2690, %v2689
    %v2709 = vpack.c.b16 %v2692, %v2691
    %v2710 = vpack.c.b16 %v2694, %v2693
    %v2743 = vunpack.c.l.b16 %v2013
    %v2744 = vunpack.c.l.b16 %v2014
    %v2745 = vunpack.c.l.b16 %v2015
    %v2746 = vunpack.c.l.b16 %v2016
    %v2747 = vunpack.c.l.b16 %v2017
    %v2748 = vunpack.c.l.b16 %v2018
    %v2749 = vunpack.c.l.b16 %v2019
    %v2750 = vunpack.c.l.b16 %v2020
    %v2751 = vunpack.c.l.b16 %v2021
    %v2752 = vunpack.c.l.b16 %v2022
    %v2753 = vunpack.c.l.b16 %v2023
    %v2754 = vunpack.c.l.b16 %v2024
    %v2755 = vunpack.c.l.b16 %v2025
    %v2756 = vunpack.c.l.b16 %v2026
    %v2757 = vunpack.c.l.b16 %v2027
    %v2758 = vunpack.c.l.b16 %v2028
    %v2759 = vpack.c.b16 %v2744, %v2743
    %v2760 = vpack.c.b16 %v2746, %v2745
    %v2761 = vpack.c.b16 %v2748, %v2747
    %v2762 = vpack.c.b16 %v2750, %v2749
    %v2763 = vpack.c.b16 %v2752, %v2751
    %v2764 = vpack.c.b16 %v2754, %v2753
    %v2765 = vpack.c.b16 %v2756, %v2755
    %v2766 = vpack.c.b16 %v2758, %v2757
    %2775 = vmatpush.bf16.msra.mxu0 %v2766
    %2776 = vmatpush.bf16.msra.mxu0 %v2765
    %2777 = vmatpush.bf16.msra.mxu0 %v2764
    %2778 = vmatpush.bf16.msra.mxu0 %v2763
    %2779 = vmatpush.bf16.msra.mxu0 %v2762
    %2780 = vmatpush.bf16.msra.mxu0 %v2761
    %2781 = vmatpush.bf16.msra.mxu0 %v2760
    %2782 = vmatpush.bf16.msra.mxu0 %v2759
    %2783 = vmatmul.bf16.gmra.mxu0 %v2695
    %v2784 = vpop.f32.mrf.mxu0
    %v2785 = vadd.f32 %v2568, %v2784
    %v2786 = vpop.f32.mrf.mxu0
    %2787 = vmatmul.bf16.gmra.mxu0 %v2696
    %v2788 = vpop.f32.mrf.mxu0
    %v2789 = vadd.f32 %v2572, %v2788
    %v2790 = vpop.f32.mrf.mxu0
    %2791 = vmatmul.bf16.gmra.mxu0 %v2697
    %v2792 = vpop.f32.mrf.mxu0
    %v2793 = vadd.f32 %v2576, %v2792
    %v2794 = vpop.f32.mrf.mxu0
    %2795 = vmatmul.bf16.gmra.mxu0 %v2698
    %v2796 = vpop.f32.mrf.mxu0
    %v2797 = vadd.f32 %v2580, %v2796
    %v2798 = vpop.f32.mrf.mxu0
    %2799 = vmatmul.bf16.gmra.mxu0 %v2699
    %v2800 = vpop.f32.mrf.mxu0
    %v2801 = vadd.f32 %v2584, %v2800
    %v2802 = vpop.f32.mrf.mxu0
    %2803 = vmatmul.bf16.gmra.mxu0 %v2700
    %v2804 = vpop.f32.mrf.mxu0
    %v2805 = vadd.f32 %v2588, %v2804
    %v2806 = vpop.f32.mrf.mxu0
    %2807 = vmatmul.bf16.gmra.mxu0 %v2701
    %v2808 = vpop.f32.mrf.mxu0
    %v2809 = vadd.f32 %v2592, %v2808
    %v2810 = vpop.f32.mrf.mxu0
    %2811 = vmatmul.bf16.gmra.mxu0 %v2702
    %v2812 = vpop.f32.mrf.mxu0
    %v2813 = vadd.f32 %v2596, %v2812
    %v2814 = vpop.f32.mrf.mxu0
    %2815 = vmatmul.bf16.gmra.mxu0 %v2703
    %v2816 = vpop.f32.mrf.mxu0
    %v2817 = vadd.f32 %v2600, %v2816
    %v2818 = vpop.f32.mrf.mxu0
    %2819 = vmatmul.bf16.gmra.mxu0 %v2704
    %v2820 = vpop.f32.mrf.mxu0
    %v2821 = vadd.f32 %v2604, %v2820
    %v2822 = vpop.f32.mrf.mxu0
    %2823 = vmatmul.bf16.gmra.mxu0 %v2705
    %v2824 = vpop.f32.mrf.mxu0
    %v2825 = vadd.f32 %v2608, %v2824
    %v2826 = vpop.f32.mrf.mxu0
    %2827 = vmatmul.bf16.gmra.mxu0 %v2706
    %v2828 = vpop.f32.mrf.mxu0
    %v2829 = vadd.f32 %v2612, %v2828
    %v2830 = vpop.f32.mrf.mxu0
    %2831 = vmatmul.bf16.gmra.mxu0 %v2707
    %v2832 = vpop.f32.mrf.mxu0
    %v2833 = vadd.f32 %v2616, %v2832
    %v2834 = vpop.f32.mrf.mxu0
    %2835 = vmatmul.bf16.gmra.mxu0 %v2708
    %v2836 = vpop.f32.mrf.mxu0
    %v2837 = vadd.f32 %v2620, %v2836
    %v2838 = vpop.f32.mrf.mxu0
    %2839 = vmatmul.bf16.gmra.mxu0 %v2709
    %v2840 = vpop.f32.mrf.mxu0
    %v2841 = vadd.f32 %v2624, %v2840
    %v2842 = vpop.f32.mrf.mxu0
    %2843 = vmatmul.bf16.gmra.mxu0 %v2710
    %v2844 = vpop.f32.mrf.mxu0
    %v2845 = vadd.f32 %v2628, %v2844
    %v2846 = vpop.f32.mrf.mxu0
    %2847 = vdwg.mxu0
    %v2848 = vld [vmem:[#allocation2] sm:$0xe]
    %v2849 = vld [vmem:[#allocation2 + $0xc] sm:$0xe]
    %v2850 = vld [vmem:[#allocation2 + $0x18] sm:$0xe]
    %v2851 = vld [vmem:[#allocation2 + $0x24] sm:$0xe]
    %v2852 = vld [vmem:[#allocation2 + $0x30] sm:$0xe]
    %v2853 = vld [vmem:[#allocation2 + $0x3c] sm:$0xe]
    %v2854 = vld [vmem:[#allocation2 + $0x48] sm:$0xe]
    %v2855 = vld [vmem:[#allocation2 + $0x54] sm:$0xe]
    %v2856 = vld [vmem:[#allocation2 + $0x60] sm:$0xe]
    %v2857 = vld [vmem:[#allocation2 + $0x6c] sm:$0xe]
    %v2858 = vld [vmem:[#allocation2 + $0x78] sm:$0xe]
    %v2859 = vld [vmem:[#allocation2 + $0x84] sm:$0xe]
    %v2860 = vld [vmem:[#allocation2 + $0x90] sm:$0xe]
    %v2861 = vld [vmem:[#allocation2 + $0x9c] sm:$0xe]
    %v2862 = vld [vmem:[#allocation2 + $0xa8] sm:$0xe]
    %v2863 = vld [vmem:[#allocation2 + $0xb4] sm:$0xe]
    %v2896 = vrot.slane %v2848, 5
    %v2897 = vrot.slane %v2896, 4
    %v2898 = vrot.slane %v1981, 5
    %v2899 = vsel %vm1224, %v2897, %v2898
    %v2900 = vrot.slane %v2898, 4
    %v2901 = vrot.slane %v2029, 5
    %v2902 = vsel %vm1224, %v2900, %v2901
    %v2903 = vrot.slane %v2849, 5
    %v2904 = vrot.slane %v2903, 4
    %v2905 = vrot.slane %v1983, 5
    %v2906 = vsel %vm1224, %v2904, %v2905
    %v2907 = vrot.slane %v2905, 4
    %v2908 = vrot.slane %v2030, 5
    %v2909 = vsel %vm1224, %v2907, %v2908
    %v2910 = vrot.slane %v2850, 5
    %v2911 = vrot.slane %v2910, 4
    %v2912 = vrot.slane %v1985, 5
    %v2913 = vsel %vm1224, %v2911, %v2912
    %v2914 = vrot.slane %v2912, 4
    %v2915 = vrot.slane %v2031, 5
    %v2916 = vsel %vm1224, %v2914, %v2915
    %v2917 = vrot.slane %v2851, 5
    %v2918 = vrot.slane %v2917, 4
    %v2919 = vrot.slane %v1987, 5
    %v2920 = vsel %vm1224, %v2918, %v2919
    %v2921 = vrot.slane %v2919, 4
    %v2922 = vrot.slane %v2032, 5
    %v2923 = vsel %vm1224, %v2921, %v2922
    %v2924 = vrot.slane %v2852, 5
    %v2925 = vrot.slane %v2924, 4
    %v2926 = vrot.slane %v1989, 5
    %v2927 = vsel %vm1224, %v2925, %v2926
    %v2928 = vrot.slane %v2926, 4
    %v2929 = vrot.slane %v2033, 5
    %v2930 = vsel %vm1224, %v2928, %v2929
    %v2931 = vrot.slane %v2853, 5
    %v2932 = vrot.slane %v2931, 4
    %v2933 = vrot.slane %v1991, 5
    %v2934 = vsel %vm1224, %v2932, %v2933
    %v2935 = vrot.slane %v2933, 4
    %v2936 = vrot.slane %v2034, 5
    %v2937 = vsel %vm1224, %v2935, %v2936
    %v2938 = vrot.slane %v2854, 5
    %v2939 = vrot.slane %v2938, 4
    %v2940 = vrot.slane %v1993, 5
    %v2941 = vsel %vm1224, %v2939, %v2940
    %v2942 = vrot.slane %v2940, 4
    %v2943 = vrot.slane %v2035, 5
    %v2944 = vsel %vm1224, %v2942, %v2943
    %v2945 = vrot.slane %v2855, 5
    %v2946 = vrot.slane %v2945, 4
    %v2947 = vrot.slane %v1995, 5
    %v2948 = vsel %vm1224, %v2946, %v2947
    %v2949 = vrot.slane %v2947, 4
    %v2950 = vrot.slane %v2036, 5
    %v2951 = vsel %vm1224, %v2949, %v2950
    %v2952 = vrot.slane %v2856, 5
    %v2953 = vrot.slane %v2952, 4
    %v2954 = vrot.slane %v1997, 5
    %v2955 = vsel %vm1224, %v2953, %v2954
    %v2956 = vrot.slane %v2954, 4
    %v2957 = vrot.slane %v2037, 5
    %v2958 = vsel %vm1224, %v2956, %v2957
    %v2959 = vrot.slane %v2857, 5
    %v2960 = vrot.slane %v2959, 4
    %v2961 = vrot.slane %v1999, 5
    %v2962 = vsel %vm1224, %v2960, %v2961
    %v2963 = vrot.slane %v2961, 4
    %v2964 = vrot.slane %v2038, 5
    %v2965 = vsel %vm1224, %v2963, %v2964
    %v2966 = vrot.slane %v2858, 5
    %v2967 = vrot.slane %v2966, 4
    %v2968 = vrot.slane %v2001, 5
    %v2969 = vsel %vm1224, %v2967, %v2968
    %v2970 = vrot.slane %v2968, 4
    %v2971 = vrot.slane %v2039, 5
    %v2972 = vsel %vm1224, %v2970, %v2971
    %v2973 = vrot.slane %v2859, 5
    %v2974 = vrot.slane %v2973, 4
    %v2975 = vrot.slane %v2003, 5
    %v2976 = vsel %vm1224, %v2974, %v2975
    %v2977 = vrot.slane %v2975, 4
    %v2978 = vrot.slane %v2040, 5
    %v2979 = vsel %vm1224, %v2977, %v2978
    %v2980 = vrot.slane %v2860, 5
    %v2981 = vrot.slane %v2980, 4
    %v2982 = vrot.slane %v2005, 5
    %v2983 = vsel %vm1224, %v2981, %v2982
    %v2984 = vrot.slane %v2982, 4
    %v2985 = vrot.slane %v2041, 5
    %v2986 = vsel %vm1224, %v2984, %v2985
    %v2987 = vrot.slane %v2861, 5
    %v2988 = vrot.slane %v2987, 4
    %v2989 = vrot.slane %v2007, 5
    %v2990 = vsel %vm1224, %v2988, %v2989
    %v2991 = vrot.slane %v2989, 4
    %v2992 = vrot.slane %v2042, 5
    %v2993 = vsel %vm1224, %v2991, %v2992
    %v2994 = vrot.slane %v2862, 5
    %v2995 = vrot.slane %v2994, 4
    %v2996 = vrot.slane %v2009, 5
    %v2997 = vsel %vm1224, %v2995, %v2996
    %v2998 = vrot.slane %v2996, 4
    %v2999 = vrot.slane %v2043, 5
    %v3000 = vsel %vm1224, %v2998, %v2999
    %v3001 = vrot.slane %v2863, 5
    %v3002 = vrot.slane %v3001, 4
    %v3003 = vrot.slane %v2011, 5
    %v3004 = vsel %vm1224, %v3002, %v3003
    %v3005 = vrot.slane %v3003, 4
    %v3006 = vrot.slane %v2044, 5
    %v3007 = vsel %vm1224, %v3005, %v3006
    %s3008 = scalar_lea.vmem [#allocation7], 320
    %v3009 = vld [vmem:[%s3008] sm:$0xf]
    %v3010 = vld [vmem:[%s3008 + $0x4] sm:$0xf]
    %v3011 = vld [vmem:[%s3008 + $0x8] sm:$0xf]
    %v3012 = vld [vmem:[%s3008 + $0xc] sm:$0xf]
    %v3013 = vld [vmem:[%s3008 + $0x10] sm:$0xf]
    %v3014 = vld [vmem:[%s3008 + $0x14] sm:$0xf]
    %v3015 = vld [vmem:[%s3008 + $0x18] sm:$0xf]
    %v3016 = vld [vmem:[%s3008 + $0x1c] sm:$0xf]
    %v3017 = vld [vmem:[%s3008 + $0x20] sm:$0xf]
    %v3018 = vld [vmem:[%s3008 + $0x24] sm:$0xf]
    %v3019 = vld [vmem:[%s3008 + $0x28] sm:$0xf]
    %v3020 = vld [vmem:[%s3008 + $0x2c] sm:$0xf]
    %v3021 = vld [vmem:[%s3008 + $0x30] sm:$0xf]
    %v3022 = vld [vmem:[%s3008 + $0x34] sm:$0xf]
    %v3023 = vld [vmem:[%s3008 + $0x38] sm:$0xf]
    %v3024 = vld [vmem:[%s3008 + $0x3c] sm:$0xf]
    %v3025 = vunpack.c.l.b16 %v2899
    %v3026 = vunpack.c.l.b16 %v2902
    %v3027 = vunpack.c.l.b16 %v2906
    %v3028 = vunpack.c.l.b16 %v2909
    %v3029 = vunpack.c.l.b16 %v2913
    %v3030 = vunpack.c.l.b16 %v2916
    %v3031 = vunpack.c.l.b16 %v2920
    %v3032 = vunpack.c.l.b16 %v2923
    %v3033 = vunpack.c.l.b16 %v2927
    %v3034 = vunpack.c.l.b16 %v2930
    %v3035 = vunpack.c.l.b16 %v2934
    %v3036 = vunpack.c.l.b16 %v2937
    %v3037 = vunpack.c.l.b16 %v2941
    %v3038 = vunpack.c.l.b16 %v2944
    %v3039 = vunpack.c.l.b16 %v2948
    %v3040 = vunpack.c.l.b16 %v2951
    %v3041 = vunpack.c.l.b16 %v2955
    %v3042 = vunpack.c.l.b16 %v2958
    %v3043 = vunpack.c.l.b16 %v2962
    %v3044 = vunpack.c.l.b16 %v2965
    %v3045 = vunpack.c.l.b16 %v2969
    %v3046 = vunpack.c.l.b16 %v2972
    %v3047 = vunpack.c.l.b16 %v2976
    %v3048 = vunpack.c.l.b16 %v2979
    %v3049 = vunpack.c.l.b16 %v2983
    %v3050 = vunpack.c.l.b16 %v2986
    %v3051 = vunpack.c.l.b16 %v2990
    %v3052 = vunpack.c.l.b16 %v2993
    %v3053 = vunpack.c.l.b16 %v2997
    %v3054 = vunpack.c.l.b16 %v3000
    %v3055 = vunpack.c.l.b16 %v3004
    %v3056 = vunpack.c.l.b16 %v3007
    %v3057 = vpack.c.b16 %v3026, %v3025
    %v3058 = vpack.c.b16 %v3028, %v3027
    %v3059 = vpack.c.b16 %v3030, %v3029
    %v3060 = vpack.c.b16 %v3032, %v3031
    %v3061 = vpack.c.b16 %v3034, %v3033
    %v3062 = vpack.c.b16 %v3036, %v3035
    %v3063 = vpack.c.b16 %v3038, %v3037
    %v3064 = vpack.c.b16 %v3040, %v3039
    %v3065 = vpack.c.b16 %v3042, %v3041
    %v3066 = vpack.c.b16 %v3044, %v3043
    %v3067 = vpack.c.b16 %v3046, %v3045
    %v3068 = vpack.c.b16 %v3048, %v3047
    %v3069 = vpack.c.b16 %v3050, %v3049
    %v3070 = vpack.c.b16 %v3052, %v3051
    %v3071 = vpack.c.b16 %v3054, %v3053
    %v3072 = vpack.c.b16 %v3056, %v3055
    %v3105 = vunpack.c.l.b16 %v3009
    %v3106 = vunpack.c.l.b16 %v3010
    %v3107 = vunpack.c.l.b16 %v3011
    %v3108 = vunpack.c.l.b16 %v3012
    %v3109 = vunpack.c.l.b16 %v3013
    %v3110 = vunpack.c.l.b16 %v3014
    %v3111 = vunpack.c.l.b16 %v3015
    %v3112 = vunpack.c.l.b16 %v3016
    %v3113 = vunpack.c.l.b16 %v3017
    %v3114 = vunpack.c.l.b16 %v3018
    %v3115 = vunpack.c.l.b16 %v3019
    %v3116 = vunpack.c.l.b16 %v3020
    %v3117 = vunpack.c.l.b16 %v3021
    %v3118 = vunpack.c.l.b16 %v3022
    %v3119 = vunpack.c.l.b16 %v3023
    %v3120 = vunpack.c.l.b16 %v3024
    %v3121 = vpack.c.b16 %v3106, %v3105
    %v3122 = vpack.c.b16 %v3108, %v3107
    %v3123 = vpack.c.b16 %v3110, %v3109
    %v3124 = vpack.c.b16 %v3112, %v3111
    %v3125 = vpack.c.b16 %v3114, %v3113
    %v3126 = vpack.c.b16 %v3116, %v3115
    %v3127 = vpack.c.b16 %v3118, %v3117
    %v3128 = vpack.c.b16 %v3120, %v3119
    %3137 = vmatpush.bf16.msra.mxu0 %v3128
    %3138 = vmatpush.bf16.msra.mxu0 %v3127
    %3139 = vmatpush.bf16.msra.mxu0 %v3126
    %3140 = vmatpush.bf16.msra.mxu0 %v3125
    %3141 = vmatpush.bf16.msra.mxu0 %v3124
    %3142 = vmatpush.bf16.msra.mxu0 %v3123
    %3143 = vmatpush.bf16.msra.mxu0 %v3122
    %3144 = vmatpush.bf16.msra.mxu0 %v3121
    %3145 = vmatmul.bf16.gmra.mxu0 %v3057
    %v3146 = vpop.f32.mrf.mxu0
    %v3147 = vadd.f32 0.0, %v3146
    %v3148 = vpop.f32.mrf.mxu0
    %3149 = vmatmul.bf16.gmra.mxu0 %v3058
    %v3150 = vpop.f32.mrf.mxu0
    %v3151 = vadd.f32 0.0, %v3150
    %v3152 = vpop.f32.mrf.mxu0
    %3153 = vmatmul.bf16.gmra.mxu0 %v3059
    %v3154 = vpop.f32.mrf.mxu0
    %v3155 = vadd.f32 0.0, %v3154
    %v3156 = vpop.f32.mrf.mxu0
    %3157 = vmatmul.bf16.gmra.mxu0 %v3060
    %v3158 = vpop.f32.mrf.mxu0
    %v3159 = vadd.f32 0.0, %v3158
    %v3160 = vpop.f32.mrf.mxu0
    %3161 = vmatmul.bf16.gmra.mxu0 %v3061
    %v3162 = vpop.f32.mrf.mxu0
    %v3163 = vadd.f32 0.0, %v3162
    %v3164 = vpop.f32.mrf.mxu0
    %3165 = vmatmul.bf16.gmra.mxu0 %v3062
    %v3166 = vpop.f32.mrf.mxu0
    %v3167 = vadd.f32 0.0, %v3166
    %v3168 = vpop.f32.mrf.mxu0
    %3169 = vmatmul.bf16.gmra.mxu0 %v3063
    %v3170 = vpop.f32.mrf.mxu0
    %v3171 = vadd.f32 0.0, %v3170
    %v3172 = vpop.f32.mrf.mxu0
    %3173 = vmatmul.bf16.gmra.mxu0 %v3064
    %v3174 = vpop.f32.mrf.mxu0
    %v3175 = vadd.f32 0.0, %v3174
    %v3176 = vpop.f32.mrf.mxu0
    %3177 = vmatmul.bf16.gmra.mxu0 %v3065
    %v3178 = vpop.f32.mrf.mxu0
    %v3179 = vadd.f32 0.0, %v3178
    %v3180 = vpop.f32.mrf.mxu0
    %3181 = vmatmul.bf16.gmra.mxu0 %v3066
    %v3182 = vpop.f32.mrf.mxu0
    %v3183 = vadd.f32 0.0, %v3182
    %v3184 = vpop.f32.mrf.mxu0
    %3185 = vmatmul.bf16.gmra.mxu0 %v3067
    %v3186 = vpop.f32.mrf.mxu0
    %v3187 = vadd.f32 0.0, %v3186
    %v3188 = vpop.f32.mrf.mxu0
    %3189 = vmatmul.bf16.gmra.mxu0 %v3068
    %v3190 = vpop.f32.mrf.mxu0
    %v3191 = vadd.f32 0.0, %v3190
    %v3192 = vpop.f32.mrf.mxu0
    %3193 = vmatmul.bf16.gmra.mxu0 %v3069
    %v3194 = vpop.f32.mrf.mxu0
    %v3195 = vadd.f32 0.0, %v3194
    %v3196 = vpop.f32.mrf.mxu0
    %3197 = vmatmul.bf16.gmra.mxu0 %v3070
    %v3198 = vpop.f32.mrf.mxu0
    %v3199 = vadd.f32 0.0, %v3198
    %v3200 = vpop.f32.mrf.mxu0
    %3201 = vmatmul.bf16.gmra.mxu0 %v3071
    %v3202 = vpop.f32.mrf.mxu0
    %v3203 = vadd.f32 0.0, %v3202
    %v3204 = vpop.f32.mrf.mxu0
    %3205 = vmatmul.bf16.gmra.mxu0 %v3072
    %v3206 = vpop.f32.mrf.mxu0
    %v3207 = vadd.f32 0.0, %v3206
    %v3208 = vpop.f32.mrf.mxu0
    %3209 = vdwg.mxu0
    %v3210 = vadd.f32 %v2785, %v3147
    %v3211 = vadd.f32 %v2789, %v3151
    %v3212 = vadd.f32 %v2793, %v3155
    %v3213 = vadd.f32 %v2797, %v3159
    %v3214 = vadd.f32 %v2801, %v3163
    %v3215 = vadd.f32 %v2805, %v3167
    %v3216 = vadd.f32 %v2809, %v3171
    %v3217 = vadd.f32 %v2813, %v3175
    %v3218 = vadd.f32 %v2817, %v3179
    %v3219 = vadd.f32 %v2821, %v3183
    %v3220 = vadd.f32 %v2825, %v3187
    %v3221 = vadd.f32 %v2829, %v3191
    %v3222 = vadd.f32 %v2833, %v3195
    %v3223 = vadd.f32 %v2837, %v3199
    %v3224 = vadd.f32 %v2841, %v3203
    %v3225 = vadd.f32 %v2845, %v3207
    %v3226 = vld [vmem:[#allocation9 + $0x1] sm:$0x1]
    %v3227 = vperm.slane %v3226, 0
    %v3228 = vadd.f32 %v3210, %v3227
    %v3229 = vadd.f32 %v3211, %v3227
    %v3230 = vadd.f32 %v3212, %v3227
    %v3231 = vadd.f32 %v3213, %v3227
    %v3232 = vadd.f32 %v3214, %v3227
    %v3233 = vadd.f32 %v3215, %v3227
    %v3234 = vadd.f32 %v3216, %v3227
    %v3235 = vadd.f32 %v3217, %v3227
    %v3236 = vadd.f32 %v3218, %v3227
    %v3237 = vadd.f32 %v3219, %v3227
    %v3238 = vadd.f32 %v3220, %v3227
    %v3239 = vadd.f32 %v3221, %v3227
    %v3240 = vadd.f32 %v3222, %v3227
    %v3241 = vadd.f32 %v3223, %v3227
    %v3242 = vadd.f32 %v3224, %v3227
    %v3243 = vadd.f32 %v3225, %v3227
    %v3244 = vmax.f32 %v3228, 0.0
    %v3245 = vmax.f32 %v3229, 0.0
    %v3246 = vmax.f32 %v3230, 0.0
    %v3247 = vmax.f32 %v3231, 0.0
    %v3248 = vmax.f32 %v3232, 0.0
    %v3249 = vmax.f32 %v3233, 0.0
    %v3250 = vmax.f32 %v3234, 0.0
    %v3251 = vmax.f32 %v3235, 0.0
    %v3252 = vmax.f32 %v3236, 0.0
    %v3253 = vmax.f32 %v3237, 0.0
    %v3254 = vmax.f32 %v3238, 0.0
    %v3255 = vmax.f32 %v3239, 0.0
    %v3256 = vmax.f32 %v3240, 0.0
    %v3257 = vmax.f32 %v3241, 0.0
    %v3258 = vmax.f32 %v3242, 0.0
    %v3259 = vmax.f32 %v3243, 0.0
    %3260 = vst [vmem:[#allocation3] sm:$0x7f] %v3244
    %3261 = vst [vmem:[#allocation3 + $0x10] sm:$0x7f] %v3245
    %3262 = vst [vmem:[#allocation3 + $0x20] sm:$0x7f] %v3246
    %3263 = vst [vmem:[#allocation3 + $0x30] sm:$0x7f] %v3247
    %3264 = vst [vmem:[#allocation3 + $0x40] sm:$0x7f] %v3248
    %3265 = vst [vmem:[#allocation3 + $0x50] sm:$0x7f] %v3249
    %3266 = vst [vmem:[#allocation3 + $0x60] sm:$0x7f] %v3250
    %3267 = vst [vmem:[#allocation3 + $0x70] sm:$0x7f] %v3251
    %3268 = vst [vmem:[#allocation3 + $0x80] sm:$0x7f] %v3252
    %3269 = vst [vmem:[#allocation3 + $0x90] sm:$0x7f] %v3253
    %3270 = vst [vmem:[#allocation3 + $0xa0] sm:$0x7f] %v3254
    %3271 = vst [vmem:[#allocation3 + $0xb0] sm:$0x7f] %v3255
    %3272 = vst [vmem:[#allocation3 + $0xc0] sm:$0x7f] %v3256
    %3273 = vst [vmem:[#allocation3 + $0xd0] sm:$0x7f] %v3257
    %3274 = vst [vmem:[#allocation3 + $0xe0] sm:$0x7f] %v3258
    %3275 = vst [vmem:[#allocation3 + $0xf0] sm:$0x7f] %v3259
    %v3276 = vld [vmem:[#allocation3] ss:$2 sm:$0x7]
    %v3277 = vld [vmem:[%s1686] ss:$2 sm:$0x7]
    %v3278 = vld [vmem:[%s1688] ss:$2 sm:$0x7]
    %v3279 = vld [vmem:[%s1690] ss:$2 sm:$0x7]
    %v3280 = vld [vmem:[%s1692] ss:$2 sm:$0x7]
    %v3281 = vld [vmem:[%s1694] ss:$2 sm:$0x7]
    %v3282 = vld [vmem:[%s1696] ss:$2 sm:$0x7]
    %v3283 = vld [vmem:[%s1698] ss:$2 sm:$0x7]
    %v3284 = vld [vmem:[%s1700] ss:$2 sm:$0x7]
    %v3285 = vld [vmem:[%s1702] ss:$2 sm:$0x7]
    %v3286 = vld [vmem:[%s1704] ss:$2 sm:$0x7]
    %v3287 = vld [vmem:[%s1706] ss:$2 sm:$0x7]
    %v3288 = vld [vmem:[%s1708] ss:$2 sm:$0x7]
    %v3289 = vld [vmem:[%s1710] ss:$2 sm:$0x7]
    %v3290 = vld [vmem:[%s1712] ss:$2 sm:$0x7]
    %v3291 = vld [vmem:[%s1714] ss:$2 sm:$0x7]
    %v3292 = vld [vmem:[%s1716] ss:$2 sm:$0x7]
    %v3293 = vld [vmem:[%s1718] ss:$2 sm:$0x7]
    %v3294 = vld [vmem:[%s1720] ss:$2 sm:$0x7]
    %v3295 = vld [vmem:[%s1722] ss:$2 sm:$0x7]
    %v3296 = vld [vmem:[%s1724] ss:$2 sm:$0x7]
    %v3297 = vld [vmem:[%s1726] ss:$2 sm:$0x7]
    %v3298 = vld [vmem:[%s1728] ss:$2 sm:$0x7]
    %v3299 = vld [vmem:[%s1730] ss:$2 sm:$0x7]
    %v3300 = vld [vmem:[%s1732] ss:$2 sm:$0x7]
    %v3301 = vld [vmem:[%s1734] ss:$2 sm:$0x7]
    %v3302 = vld [vmem:[%s1736] ss:$2 sm:$0x7]
    %v3303 = vld [vmem:[%s1738] ss:$2 sm:$0x7]
    %v3304 = vld [vmem:[%s1740] ss:$2 sm:$0x7]
    %v3305 = vld [vmem:[%s1742] ss:$2 sm:$0x7]
    %v3306 = vld [vmem:[%s1744] ss:$2 sm:$0x7]
    %v3307 = vld [vmem:[%s1746] ss:$2 sm:$0x7]
    %v3308 = vmax.f32 %v3276, %v3292
    %v3309 = vmax.f32 %v3277, %v3293
    %v3310 = vmax.f32 %v3278, %v3294
    %v3311 = vmax.f32 %v3279, %v3295
    %v3312 = vmax.f32 %v3280, %v3296
    %v3313 = vmax.f32 %v3281, %v3297
    %v3314 = vmax.f32 %v3282, %v3298
    %v3315 = vmax.f32 %v3283, %v3299
    %v3316 = vmax.f32 %v3284, %v3300
    %v3317 = vmax.f32 %v3285, %v3301
    %v3318 = vmax.f32 %v3286, %v3302
    %v3319 = vmax.f32 %v3287, %v3303
    %v3320 = vmax.f32 %v3288, %v3304
    %v3321 = vmax.f32 %v3289, %v3305
    %v3322 = vmax.f32 %v3290, %v3306
    %v3323 = vmax.f32 %v3291, %v3307
    %v3324 = vpack.c.bf16 %v3308, %v3308
    %v3325 = vpack.c.bf16 %v3309, %v3309
    %v3326 = vpack.c.bf16 %v3310, %v3310
    %v3327 = vpack.c.bf16 %v3311, %v3311
    %v3328 = vpack.c.bf16 %v3312, %v3312
    %v3329 = vpack.c.bf16 %v3313, %v3313
    %v3330 = vpack.c.bf16 %v3314, %v3314
    %v3331 = vpack.c.bf16 %v3315, %v3315
    %v3332 = vpack.c.bf16 %v3316, %v3316
    %v3333 = vpack.c.bf16 %v3317, %v3317
    %v3334 = vpack.c.bf16 %v3318, %v3318
    %v3335 = vpack.c.bf16 %v3319, %v3319
    %v3336 = vpack.c.bf16 %v3320, %v3320
    %v3337 = vpack.c.bf16 %v3321, %v3321
    %v3338 = vpack.c.bf16 %v3322, %v3322
    %v3339 = vpack.c.bf16 %v3323, %v3323
    %v3356 = vrot.slane %v3324, 7
    %v3357 = vrot.slane %v3325, 7
    %v3358 = vrot.slane %v3326, 7
    %v3359 = vrot.slane %v3327, 7
    %v3360 = vrot.slane %v3328, 7
    %v3361 = vrot.slane %v3329, 7
    %v3362 = vrot.slane %v3330, 7
    %v3363 = vrot.slane %v3331, 7
    %v3364 = vrot.slane %v3332, 7
    %v3365 = vrot.slane %v3333, 7
    %v3366 = vrot.slane %v3334, 7
    %v3367 = vrot.slane %v3335, 7
    %v3368 = vrot.slane %v3336, 7
    %v3369 = vrot.slane %v3337, 7
    %v3370 = vrot.slane %v3338, 7
    %v3371 = vrot.slane %v3339, 7
    %vm3388 = vcmask 1042433
    %vm3389 = vsmask.f32 2304
    %vm3390 = vmand %vm3388, %vm3389
    %v3391 = vld [vmem:[#allocation2] sm:$0x6]
    %v3392 = vsel %vm3390, %v3356, %v3391
    %3393 = vst [vmem:[#allocation2] sm:$0x6] %v3392
    %v3394 = vld [vmem:[#allocation2 + $0xc] sm:$0x6]
    %v3395 = vsel %vm3390, %v3357, %v3394
    %3396 = vst [vmem:[#allocation2 + $0xc] sm:$0x6] %v3395
    %v3397 = vld [vmem:[#allocation2 + $0x18] sm:$0x6]
    %v3398 = vsel %vm3390, %v3358, %v3397
    %3399 = vst [vmem:[#allocation2 + $0x18] sm:$0x6] %v3398
    %v3400 = vld [vmem:[#allocation2 + $0x24] sm:$0x6]
    %v3401 = vsel %vm3390, %v3359, %v3400
    %3402 = vst [vmem:[#allocation2 + $0x24] sm:$0x6] %v3401
    %v3403 = vld [vmem:[#allocation2 + $0x30] sm:$0x6]
    %v3404 = vsel %vm3390, %v3360, %v3403
    %3405 = vst [vmem:[#allocation2 + $0x30] sm:$0x6] %v3404
    %v3406 = vld [vmem:[#allocation2 + $0x3c] sm:$0x6]
    %v3407 = vsel %vm3390, %v3361, %v3406
    %3408 = vst [vmem:[#allocation2 + $0x3c] sm:$0x6] %v3407
    %v3409 = vld [vmem:[#allocation2 + $0x48] sm:$0x6]
    %v3410 = vsel %vm3390, %v3362, %v3409
    %3411 = vst [vmem:[#allocation2 + $0x48] sm:$0x6] %v3410
    %v3412 = vld [vmem:[#allocation2 + $0x54] sm:$0x6]
    %v3413 = vsel %vm3390, %v3363, %v3412
    %3414 = vst [vmem:[#allocation2 + $0x54] sm:$0x6] %v3413
    %v3415 = vld [vmem:[#allocation2 + $0x60] sm:$0x6]
    %v3416 = vsel %vm3390, %v3364, %v3415
    %3417 = vst [vmem:[#allocation2 + $0x60] sm:$0x6] %v3416
    %v3418 = vld [vmem:[#allocation2 + $0x6c] sm:$0x6]
    %v3419 = vsel %vm3390, %v3365, %v3418
    %3420 = vst [vmem:[#allocation2 + $0x6c] sm:$0x6] %v3419
    %v3421 = vld [vmem:[#allocation2 + $0x78] sm:$0x6]
    %v3422 = vsel %vm3390, %v3366, %v3421
    %3423 = vst [vmem:[#allocation2 + $0x78] sm:$0x6] %v3422
    %v3424 = vld [vmem:[#allocation2 + $0x84] sm:$0x6]
    %v3425 = vsel %vm3390, %v3367, %v3424
    %3426 = vst [vmem:[#allocation2 + $0x84] sm:$0x6] %v3425
    %v3427 = vld [vmem:[#allocation2 + $0x90] sm:$0x6]
    %v3428 = vsel %vm3390, %v3368, %v3427
    %3429 = vst [vmem:[#allocation2 + $0x90] sm:$0x6] %v3428
    %v3430 = vld [vmem:[#allocation2 + $0x9c] sm:$0x6]
    %v3431 = vsel %vm3390, %v3369, %v3430
    %3432 = vst [vmem:[#allocation2 + $0x9c] sm:$0x6] %v3431
    %v3433 = vld [vmem:[#allocation2 + $0xa8] sm:$0x6]
    %v3434 = vsel %vm3390, %v3370, %v3433
    %3435 = vst [vmem:[#allocation2 + $0xa8] sm:$0x6] %v3434
    %v3436 = vld [vmem:[#allocation2 + $0xb4] sm:$0x6]
    %v3437 = vsel %vm3390, %v3371, %v3436
    %3438 = vst [vmem:[#allocation2 + $0xb4] sm:$0x6] %v3437
    %vm3439 = vcmask 1043458
    %vm3440 = vsmask.f32 3338
    %vm3441 = vmand %vm3439, %vm3440
    %v3442 = vld [vmem:[#allocation2] sm:$0xc]
    %v3443 = vsel %vm3441, 0, %v3442
    %3444 = vst [vmem:[#allocation2] sm:$0xc] %v3443
    %v3445 = vld [vmem:[#allocation2 + $0xc] sm:$0xc]
    %v3446 = vsel %vm3441, 0, %v3445
    %3447 = vst [vmem:[#allocation2 + $0xc] sm:$0xc] %v3446
    %v3448 = vld [vmem:[#allocation2 + $0x18] sm:$0xc]
    %v3449 = vsel %vm3441, 0, %v3448
    %3450 = vst [vmem:[#allocation2 + $0x18] sm:$0xc] %v3449
    %v3451 = vld [vmem:[#allocation2 + $0x24] sm:$0xc]
    %v3452 = vsel %vm3441, 0, %v3451
    %3453 = vst [vmem:[#allocation2 + $0x24] sm:$0xc] %v3452
    %v3454 = vld [vmem:[#allocation2 + $0x30] sm:$0xc]
    %v3455 = vsel %vm3441, 0, %v3454
    %3456 = vst [vmem:[#allocation2 + $0x30] sm:$0xc] %v3455
    %v3457 = vld [vmem:[#allocation2 + $0x3c] sm:$0xc]
    %v3458 = vsel %vm3441, 0, %v3457
    %3459 = vst [vmem:[#allocation2 + $0x3c] sm:$0xc] %v3458
    %v3460 = vld [vmem:[#allocation2 + $0x48] sm:$0xc]
    %v3461 = vsel %vm3441, 0, %v3460
    %3462 = vst [vmem:[#allocation2 + $0x48] sm:$0xc] %v3461
    %v3463 = vld [vmem:[#allocation2 + $0x54] sm:$0xc]
    %v3464 = vsel %vm3441, 0, %v3463
    %3465 = vst [vmem:[#allocation2 + $0x54] sm:$0xc] %v3464
    %v3466 = vld [vmem:[#allocation2 + $0x60] sm:$0xc]
    %v3467 = vsel %vm3441, 0, %v3466
    %3468 = vst [vmem:[#allocation2 + $0x60] sm:$0xc] %v3467
    %v3469 = vld [vmem:[#allocation2 + $0x6c] sm:$0xc]
    %v3470 = vsel %vm3441, 0, %v3469
    %3471 = vst [vmem:[#allocation2 + $0x6c] sm:$0xc] %v3470
    %v3472 = vld [vmem:[#allocation2 + $0x78] sm:$0xc]
    %v3473 = vsel %vm3441, 0, %v3472
    %3474 = vst [vmem:[#allocation2 + $0x78] sm:$0xc] %v3473
    %v3475 = vld [vmem:[#allocation2 + $0x84] sm:$0xc]
    %v3476 = vsel %vm3441, 0, %v3475
    %3477 = vst [vmem:[#allocation2 + $0x84] sm:$0xc] %v3476
    %v3478 = vld [vmem:[#allocation2 + $0x90] sm:$0xc]
    %v3479 = vsel %vm3441, 0, %v3478
    %3480 = vst [vmem:[#allocation2 + $0x90] sm:$0xc] %v3479
    %v3481 = vld [vmem:[#allocation2 + $0x9c] sm:$0xc]
    %v3482 = vsel %vm3441, 0, %v3481
    %3483 = vst [vmem:[#allocation2 + $0x9c] sm:$0xc] %v3482
    %v3484 = vld [vmem:[#allocation2 + $0xa8] sm:$0xc]
    %v3485 = vsel %vm3441, 0, %v3484
    %3486 = vst [vmem:[#allocation2 + $0xa8] sm:$0xc] %v3485
    %v3487 = vld [vmem:[#allocation2 + $0xb4] sm:$0xc]
    %v3488 = vsel %vm3441, 0, %v3487
    %3489 = vst [vmem:[#allocation2 + $0xb4] sm:$0xc] %v3488
    %v3490 = vld [vmem:[#allocation2] sm:$0xf]
    %v3491 = vld [vmem:[#allocation2 + $0x4] sm:$0xf]
    %v3492 = vld [vmem:[#allocation2 + $0xc] sm:$0xf]
    %v3493 = vld [vmem:[#allocation2 + $0x10] sm:$0xf]
    %v3494 = vld [vmem:[#allocation2 + $0x18] sm:$0xf]
    %v3495 = vld [vmem:[#allocation2 + $0x1c] sm:$0xf]
    %v3496 = vld [vmem:[#allocation2 + $0x24] sm:$0xf]
    %v3497 = vld [vmem:[#allocation2 + $0x28] sm:$0xf]
    %v3498 = vld [vmem:[#allocation2 + $0x30] sm:$0xf]
    %v3499 = vld [vmem:[#allocation2 + $0x34] sm:$0xf]
    %v3500 = vld [vmem:[#allocation2 + $0x3c] sm:$0xf]
    %v3501 = vld [vmem:[#allocation2 + $0x40] sm:$0xf]
    %v3502 = vld [vmem:[#allocation2 + $0x48] sm:$0xf]
    %v3503 = vld [vmem:[#allocation2 + $0x4c] sm:$0xf]
    %v3504 = vld [vmem:[#allocation2 + $0x54] sm:$0xf]
    %v3505 = vld [vmem:[#allocation2 + $0x58] sm:$0xf]
    %v3506 = vld [vmem:[#allocation2 + $0x60] sm:$0xf]
    %v3507 = vld [vmem:[#allocation2 + $0x64] sm:$0xf]
    %v3508 = vld [vmem:[#allocation2 + $0x6c] sm:$0xf]
    %v3509 = vld [vmem:[#allocation2 + $0x70] sm:$0xf]
    %v3510 = vld [vmem:[#allocation2 + $0x78] sm:$0xf]
    %v3511 = vld [vmem:[#allocation2 + $0x7c] sm:$0xf]
    %v3512 = vld [vmem:[#allocation2 + $0x84] sm:$0xf]
    %v3513 = vld [vmem:[#allocation2 + $0x88] sm:$0xf]
    %v3514 = vld [vmem:[#allocation2 + $0x90] sm:$0xf]
    %v3515 = vld [vmem:[#allocation2 + $0x94] sm:$0xf]
    %v3516 = vld [vmem:[#allocation2 + $0x9c] sm:$0xf]
    %v3517 = vld [vmem:[#allocation2 + $0xa0] sm:$0xf]
    %v3518 = vld [vmem:[#allocation2 + $0xa8] sm:$0xf]
    %v3519 = vld [vmem:[#allocation2 + $0xac] sm:$0xf]
    %v3520 = vld [vmem:[#allocation2 + $0xb4] sm:$0xf]
    %v3521 = vld [vmem:[#allocation2 + $0xb8] sm:$0xf]
    %s3522 = scalar_lea.vmem [#allocation7], 384
    %v3523 = vld [vmem:[%s3522] sm:$0xf]
    %v3524 = vld [vmem:[%s3522 + $0x4] sm:$0xf]
    %v3525 = vld [vmem:[%s3522 + $0x8] sm:$0xf]
    %v3526 = vld [vmem:[%s3522 + $0xc] sm:$0xf]
    %v3527 = vld [vmem:[%s3522 + $0x10] sm:$0xf]
    %v3528 = vld [vmem:[%s3522 + $0x14] sm:$0xf]
    %v3529 = vld [vmem:[%s3522 + $0x18] sm:$0xf]
    %v3530 = vld [vmem:[%s3522 + $0x1c] sm:$0xf]
    %v3531 = vld [vmem:[%s3522 + $0x20] sm:$0xf]
    %v3532 = vld [vmem:[%s3522 + $0x24] sm:$0xf]
    %v3533 = vld [vmem:[%s3522 + $0x28] sm:$0xf]
    %v3534 = vld [vmem:[%s3522 + $0x2c] sm:$0xf]
    %v3535 = vld [vmem:[%s3522 + $0x30] sm:$0xf]
    %v3536 = vld [vmem:[%s3522 + $0x34] sm:$0xf]
    %v3537 = vld [vmem:[%s3522 + $0x38] sm:$0xf]
    %v3538 = vld [vmem:[%s3522 + $0x3c] sm:$0xf]
    %v3539 = vld [vmem:[#allocation2 + $0x8] sm:$0x1]
    %v3540 = vld [vmem:[#allocation2 + $0x14] sm:$0x1]
    %v3541 = vld [vmem:[#allocation2 + $0x20] sm:$0x1]
    %v3542 = vld [vmem:[#allocation2 + $0x2c] sm:$0x1]
    %v3543 = vld [vmem:[#allocation2 + $0x38] sm:$0x1]
    %v3544 = vld [vmem:[#allocation2 + $0x44] sm:$0x1]
    %v3545 = vld [vmem:[#allocation2 + $0x50] sm:$0x1]
    %v3546 = vld [vmem:[#allocation2 + $0x5c] sm:$0x1]
    %v3547 = vld [vmem:[#allocation2 + $0x68] sm:$0x1]
    %v3548 = vld [vmem:[#allocation2 + $0x74] sm:$0x1]
    %v3549 = vld [vmem:[#allocation2 + $0x80] sm:$0x1]
    %v3550 = vld [vmem:[#allocation2 + $0x8c] sm:$0x1]
    %v3551 = vld [vmem:[#allocation2 + $0x98] sm:$0x1]
    %v3552 = vld [vmem:[#allocation2 + $0xa4] sm:$0x1]
    %v3553 = vld [vmem:[#allocation2 + $0xb0] sm:$0x1]
    %v3554 = vld [vmem:[#allocation2 + $0xbc] sm:$0x1]
    %v3556 = vshrl.u32 %v3490, 16
    %v3558 = vrot.slane %v3556, 4
    %v3559 = vshll.u32 %v3490, 16
    %v3561 = vrot.slane %v3559, 5
    %v3562 = vor.u32 %v3558, %v3561
    %v3563 = vrot.slane %v3562, 4
    %v3565 = vshll.u32 %v3491, 16
    %v3567 = vrot.slane %v3565, 5
    %v3568 = vsel %vm338, %v3563, %v3567
    %v3569 = vshrl.u32 %v3491, 16
    %v3571 = vrot.slane %v3569, 4
    %v3572 = vor.u32 %v3571, %v3567
    %v3573 = vrot.slane %v3572, 4
    %v3575 = vshll.u32 %v3539, 16
    %v3577 = vrot.slane %v3575, 5
    %v3578 = vsel %vm338, %v3573, %v3577
    %v3580 = vshrl.u32 %v3492, 16
    %v3582 = vrot.slane %v3580, 4
    %v3583 = vshll.u32 %v3492, 16
    %v3585 = vrot.slane %v3583, 5
    %v3586 = vor.u32 %v3582, %v3585
    %v3587 = vrot.slane %v3586, 4
    %v3589 = vshll.u32 %v3493, 16
    %v3591 = vrot.slane %v3589, 5
    %v3592 = vsel %vm338, %v3587, %v3591
    %v3593 = vshrl.u32 %v3493, 16
    %v3595 = vrot.slane %v3593, 4
    %v3596 = vor.u32 %v3595, %v3591
    %v3597 = vrot.slane %v3596, 4
    %v3599 = vshll.u32 %v3540, 16
    %v3601 = vrot.slane %v3599, 5
    %v3602 = vsel %vm338, %v3597, %v3601
    %v3604 = vshrl.u32 %v3494, 16
    %v3606 = vrot.slane %v3604, 4
    %v3607 = vshll.u32 %v3494, 16
    %v3609 = vrot.slane %v3607, 5
    %v3610 = vor.u32 %v3606, %v3609
    %v3611 = vrot.slane %v3610, 4
    %v3613 = vshll.u32 %v3495, 16
    %v3615 = vrot.slane %v3613, 5
    %v3616 = vsel %vm338, %v3611, %v3615
    %v3617 = vshrl.u32 %v3495, 16
    %v3619 = vrot.slane %v3617, 4
    %v3620 = vor.u32 %v3619, %v3615
    %v3621 = vrot.slane %v3620, 4
    %v3623 = vshll.u32 %v3541, 16
    %v3625 = vrot.slane %v3623, 5
    %v3626 = vsel %vm338, %v3621, %v3625
    %v3628 = vshrl.u32 %v3496, 16
    %v3630 = vrot.slane %v3628, 4
    %v3631 = vshll.u32 %v3496, 16
    %v3633 = vrot.slane %v3631, 5
    %v3634 = vor.u32 %v3630, %v3633
    %v3635 = vrot.slane %v3634, 4
    %v3637 = vshll.u32 %v3497, 16
    %v3639 = vrot.slane %v3637, 5
    %v3640 = vsel %vm338, %v3635, %v3639
    %v3641 = vshrl.u32 %v3497, 16
    %v3643 = vrot.slane %v3641, 4
    %v3644 = vor.u32 %v3643, %v3639
    %v3645 = vrot.slane %v3644, 4
    %v3647 = vshll.u32 %v3542, 16
    %v3649 = vrot.slane %v3647, 5
    %v3650 = vsel %vm338, %v3645, %v3649
    %v3652 = vshrl.u32 %v3498, 16
    %v3654 = vrot.slane %v3652, 4
    %v3655 = vshll.u32 %v3498, 16
    %v3657 = vrot.slane %v3655, 5
    %v3658 = vor.u32 %v3654, %v3657
    %v3659 = vrot.slane %v3658, 4
    %v3661 = vshll.u32 %v3499, 16
    %v3663 = vrot.slane %v3661, 5
    %v3664 = vsel %vm338, %v3659, %v3663
    %v3665 = vshrl.u32 %v3499, 16
    %v3667 = vrot.slane %v3665, 4
    %v3668 = vor.u32 %v3667, %v3663
    %v3669 = vrot.slane %v3668, 4
    %v3671 = vshll.u32 %v3543, 16
    %v3673 = vrot.slane %v3671, 5
    %v3674 = vsel %vm338, %v3669, %v3673
    %v3676 = vshrl.u32 %v3500, 16
    %v3678 = vrot.slane %v3676, 4
    %v3679 = vshll.u32 %v3500, 16
    %v3681 = vrot.slane %v3679, 5
    %v3682 = vor.u32 %v3678, %v3681
    %v3683 = vrot.slane %v3682, 4
    %v3685 = vshll.u32 %v3501, 16
    %v3687 = vrot.slane %v3685, 5
    %v3688 = vsel %vm338, %v3683, %v3687
    %v3689 = vshrl.u32 %v3501, 16
    %v3691 = vrot.slane %v3689, 4
    %v3692 = vor.u32 %v3691, %v3687
    %v3693 = vrot.slane %v3692, 4
    %v3695 = vshll.u32 %v3544, 16
    %v3697 = vrot.slane %v3695, 5
    %v3698 = vsel %vm338, %v3693, %v3697
    %v3700 = vshrl.u32 %v3502, 16
    %v3702 = vrot.slane %v3700, 4
    %v3703 = vshll.u32 %v3502, 16
    %v3705 = vrot.slane %v3703, 5
    %v3706 = vor.u32 %v3702, %v3705
    %v3707 = vrot.slane %v3706, 4
    %v3709 = vshll.u32 %v3503, 16
    %v3711 = vrot.slane %v3709, 5
    %v3712 = vsel %vm338, %v3707, %v3711
    %v3713 = vshrl.u32 %v3503, 16
    %v3715 = vrot.slane %v3713, 4
    %v3716 = vor.u32 %v3715, %v3711
    %v3717 = vrot.slane %v3716, 4
    %v3719 = vshll.u32 %v3545, 16
    %v3721 = vrot.slane %v3719, 5
    %v3722 = vsel %vm338, %v3717, %v3721
    %v3724 = vshrl.u32 %v3504, 16
    %v3726 = vrot.slane %v3724, 4
    %v3727 = vshll.u32 %v3504, 16
    %v3729 = vrot.slane %v3727, 5
    %v3730 = vor.u32 %v3726, %v3729
    %v3731 = vrot.slane %v3730, 4
    %v3733 = vshll.u32 %v3505, 16
    %v3735 = vrot.slane %v3733, 5
    %v3736 = vsel %vm338, %v3731, %v3735
    %v3737 = vshrl.u32 %v3505, 16
    %v3739 = vrot.slane %v3737, 4
    %v3740 = vor.u32 %v3739, %v3735
    %v3741 = vrot.slane %v3740, 4
    %v3743 = vshll.u32 %v3546, 16
    %v3745 = vrot.slane %v3743, 5
    %v3746 = vsel %vm338, %v3741, %v3745
    %v3748 = vshrl.u32 %v3506, 16
    %v3750 = vrot.slane %v3748, 4
    %v3751 = vshll.u32 %v3506, 16
    %v3753 = vrot.slane %v3751, 5
    %v3754 = vor.u32 %v3750, %v3753
    %v3755 = vrot.slane %v3754, 4
    %v3757 = vshll.u32 %v3507, 16
    %v3759 = vrot.slane %v3757, 5
    %v3760 = vsel %vm338, %v3755, %v3759
    %v3761 = vshrl.u32 %v3507, 16
    %v3763 = vrot.slane %v3761, 4
    %v3764 = vor.u32 %v3763, %v3759
    %v3765 = vrot.slane %v3764, 4
    %v3767 = vshll.u32 %v3547, 16
    %v3769 = vrot.slane %v3767, 5
    %v3770 = vsel %vm338, %v3765, %v3769
    %v3772 = vshrl.u32 %v3508, 16
    %v3774 = vrot.slane %v3772, 4
    %v3775 = vshll.u32 %v3508, 16
    %v3777 = vrot.slane %v3775, 5
    %v3778 = vor.u32 %v3774, %v3777
    %v3779 = vrot.slane %v3778, 4
    %v3781 = vshll.u32 %v3509, 16
    %v3783 = vrot.slane %v3781, 5
    %v3784 = vsel %vm338, %v3779, %v3783
    %v3785 = vshrl.u32 %v3509, 16
    %v3787 = vrot.slane %v3785, 4
    %v3788 = vor.u32 %v3787, %v3783
    %v3789 = vrot.slane %v3788, 4
    %v3791 = vshll.u32 %v3548, 16
    %v3793 = vrot.slane %v3791, 5
    %v3794 = vsel %vm338, %v3789, %v3793
    %v3796 = vshrl.u32 %v3510, 16
    %v3798 = vrot.slane %v3796, 4
    %v3799 = vshll.u32 %v3510, 16
    %v3801 = vrot.slane %v3799, 5
    %v3802 = vor.u32 %v3798, %v3801
    %v3803 = vrot.slane %v3802, 4
    %v3805 = vshll.u32 %v3511, 16
    %v3807 = vrot.slane %v3805, 5
    %v3808 = vsel %vm338, %v3803, %v3807
    %v3809 = vshrl.u32 %v3511, 16
    %v3811 = vrot.slane %v3809, 4
    %v3812 = vor.u32 %v3811, %v3807
    %v3813 = vrot.slane %v3812, 4
    %v3815 = vshll.u32 %v3549, 16
    %v3817 = vrot.slane %v3815, 5
    %v3818 = vsel %vm338, %v3813, %v3817
    %v3820 = vshrl.u32 %v3512, 16
    %v3822 = vrot.slane %v3820, 4
    %v3823 = vshll.u32 %v3512, 16
    %v3825 = vrot.slane %v3823, 5
    %v3826 = vor.u32 %v3822, %v3825
    %v3827 = vrot.slane %v3826, 4
    %v3829 = vshll.u32 %v3513, 16
    %v3831 = vrot.slane %v3829, 5
    %v3832 = vsel %vm338, %v3827, %v3831
    %v3833 = vshrl.u32 %v3513, 16
    %v3835 = vrot.slane %v3833, 4
    %v3836 = vor.u32 %v3835, %v3831
    %v3837 = vrot.slane %v3836, 4
    %v3839 = vshll.u32 %v3550, 16
    %v3841 = vrot.slane %v3839, 5
    %v3842 = vsel %vm338, %v3837, %v3841
    %v3844 = vshrl.u32 %v3514, 16
    %v3846 = vrot.slane %v3844, 4
    %v3847 = vshll.u32 %v3514, 16
    %v3849 = vrot.slane %v3847, 5
    %v3850 = vor.u32 %v3846, %v3849
    %v3851 = vrot.slane %v3850, 4
    %v3853 = vshll.u32 %v3515, 16
    %v3855 = vrot.slane %v3853, 5
    %v3856 = vsel %vm338, %v3851, %v3855
    %v3857 = vshrl.u32 %v3515, 16
    %v3859 = vrot.slane %v3857, 4
    %v3860 = vor.u32 %v3859, %v3855
    %v3861 = vrot.slane %v3860, 4
    %v3863 = vshll.u32 %v3551, 16
    %v3865 = vrot.slane %v3863, 5
    %v3866 = vsel %vm338, %v3861, %v3865
    %v3868 = vshrl.u32 %v3516, 16
    %v3870 = vrot.slane %v3868, 4
    %v3871 = vshll.u32 %v3516, 16
    %v3873 = vrot.slane %v3871, 5
    %v3874 = vor.u32 %v3870, %v3873
    %v3875 = vrot.slane %v3874, 4
    %v3877 = vshll.u32 %v3517, 16
    %v3879 = vrot.slane %v3877, 5
    %v3880 = vsel %vm338, %v3875, %v3879
    %v3881 = vshrl.u32 %v3517, 16
    %v3883 = vrot.slane %v3881, 4
    %v3884 = vor.u32 %v3883, %v3879
    %v3885 = vrot.slane %v3884, 4
    %v3887 = vshll.u32 %v3552, 16
    %v3889 = vrot.slane %v3887, 5
    %v3890 = vsel %vm338, %v3885, %v3889
    %v3892 = vshrl.u32 %v3518, 16
    %v3894 = vrot.slane %v3892, 4
    %v3895 = vshll.u32 %v3518, 16
    %v3897 = vrot.slane %v3895, 5
    %v3898 = vor.u32 %v3894, %v3897
    %v3899 = vrot.slane %v3898, 4
    %v3901 = vshll.u32 %v3519, 16
    %v3903 = vrot.slane %v3901, 5
    %v3904 = vsel %vm338, %v3899, %v3903
    %v3905 = vshrl.u32 %v3519, 16
    %v3907 = vrot.slane %v3905, 4
    %v3908 = vor.u32 %v3907, %v3903
    %v3909 = vrot.slane %v3908, 4
    %v3911 = vshll.u32 %v3553, 16
    %v3913 = vrot.slane %v3911, 5
    %v3914 = vsel %vm338, %v3909, %v3913
    %v3916 = vshrl.u32 %v3520, 16
    %v3918 = vrot.slane %v3916, 4
    %v3919 = vshll.u32 %v3520, 16
    %v3921 = vrot.slane %v3919, 5
    %v3922 = vor.u32 %v3918, %v3921
    %v3923 = vrot.slane %v3922, 4
    %v3925 = vshll.u32 %v3521, 16
    %v3927 = vrot.slane %v3925, 5
    %v3928 = vsel %vm338, %v3923, %v3927
    %v3929 = vshrl.u32 %v3521, 16
    %v3931 = vrot.slane %v3929, 4
    %v3932 = vor.u32 %v3931, %v3927
    %v3933 = vrot.slane %v3932, 4
    %v3935 = vshll.u32 %v3554, 16
    %v3937 = vrot.slane %v3935, 5
    %v3938 = vsel %vm338, %v3933, %v3937
    %s3939 = scalar_lea.vmem [#allocation7], 448
    %v3940 = vld [vmem:[%s3939] sm:$0xf]
    %v3941 = vld [vmem:[%s3939 + $0x4] sm:$0xf]
    %v3942 = vld [vmem:[%s3939 + $0x8] sm:$0xf]
    %v3943 = vld [vmem:[%s3939 + $0xc] sm:$0xf]
    %v3944 = vld [vmem:[%s3939 + $0x10] sm:$0xf]
    %v3945 = vld [vmem:[%s3939 + $0x14] sm:$0xf]
    %v3946 = vld [vmem:[%s3939 + $0x18] sm:$0xf]
    %v3947 = vld [vmem:[%s3939 + $0x1c] sm:$0xf]
    %v3948 = vld [vmem:[%s3939 + $0x20] sm:$0xf]
    %v3949 = vld [vmem:[%s3939 + $0x24] sm:$0xf]
    %v3950 = vld [vmem:[%s3939 + $0x28] sm:$0xf]
    %v3951 = vld [vmem:[%s3939 + $0x2c] sm:$0xf]
    %v3952 = vld [vmem:[%s3939 + $0x30] sm:$0xf]
    %v3953 = vld [vmem:[%s3939 + $0x34] sm:$0xf]
    %v3954 = vld [vmem:[%s3939 + $0x38] sm:$0xf]
    %v3955 = vld [vmem:[%s3939 + $0x3c] sm:$0xf]
    %v3956 = vunpack.c.l.b16 %v3568
    %v3957 = vunpack.c.l.b16 %v3578
    %v3958 = vunpack.c.l.b16 %v3592
    %v3959 = vunpack.c.l.b16 %v3602
    %v3960 = vunpack.c.l.b16 %v3616
    %v3961 = vunpack.c.l.b16 %v3626
    %v3962 = vunpack.c.l.b16 %v3640
    %v3963 = vunpack.c.l.b16 %v3650
    %v3964 = vunpack.c.l.b16 %v3664
    %v3965 = vunpack.c.l.b16 %v3674
    %v3966 = vunpack.c.l.b16 %v3688
    %v3967 = vunpack.c.l.b16 %v3698
    %v3968 = vunpack.c.l.b16 %v3712
    %v3969 = vunpack.c.l.b16 %v3722
    %v3970 = vunpack.c.l.b16 %v3736
    %v3971 = vunpack.c.l.b16 %v3746
    %v3972 = vunpack.c.l.b16 %v3760
    %v3973 = vunpack.c.l.b16 %v3770
    %v3974 = vunpack.c.l.b16 %v3784
    %v3975 = vunpack.c.l.b16 %v3794
    %v3976 = vunpack.c.l.b16 %v3808
    %v3977 = vunpack.c.l.b16 %v3818
    %v3978 = vunpack.c.l.b16 %v3832
    %v3979 = vunpack.c.l.b16 %v3842
    %v3980 = vunpack.c.l.b16 %v3856
    %v3981 = vunpack.c.l.b16 %v3866
    %v3982 = vunpack.c.l.b16 %v3880
    %v3983 = vunpack.c.l.b16 %v3890
    %v3984 = vunpack.c.l.b16 %v3904
    %v3985 = vunpack.c.l.b16 %v3914
    %v3986 = vunpack.c.l.b16 %v3928
    %v3987 = vunpack.c.l.b16 %v3938
    %v3988 = vpack.c.b16 %v3957, %v3956
    %v3989 = vpack.c.b16 %v3959, %v3958
    %v3990 = vpack.c.b16 %v3961, %v3960
    %v3991 = vpack.c.b16 %v3963, %v3962
    %v3992 = vpack.c.b16 %v3965, %v3964
    %v3993 = vpack.c.b16 %v3967, %v3966
    %v3994 = vpack.c.b16 %v3969, %v3968
    %v3995 = vpack.c.b16 %v3971, %v3970
    %v3996 = vpack.c.b16 %v3973, %v3972
    %v3997 = vpack.c.b16 %v3975, %v3974
    %v3998 = vpack.c.b16 %v3977, %v3976
    %v3999 = vpack.c.b16 %v3979, %v3978
    %v4000 = vpack.c.b16 %v3981, %v3980
    %v4001 = vpack.c.b16 %v3983, %v3982
    %v4002 = vpack.c.b16 %v3985, %v3984
    %v4003 = vpack.c.b16 %v3987, %v3986
    %v4036 = vunpack.c.l.b16 %v3940
    %v4037 = vunpack.c.l.b16 %v3941
    %v4038 = vunpack.c.l.b16 %v3942
    %v4039 = vunpack.c.l.b16 %v3943
    %v4040 = vunpack.c.l.b16 %v3944
    %v4041 = vunpack.c.l.b16 %v3945
    %v4042 = vunpack.c.l.b16 %v3946
    %v4043 = vunpack.c.l.b16 %v3947
    %v4044 = vunpack.c.l.b16 %v3948
    %v4045 = vunpack.c.l.b16 %v3949
    %v4046 = vunpack.c.l.b16 %v3950
    %v4047 = vunpack.c.l.b16 %v3951
    %v4048 = vunpack.c.l.b16 %v3952
    %v4049 = vunpack.c.l.b16 %v3953
    %v4050 = vunpack.c.l.b16 %v3954
    %v4051 = vunpack.c.l.b16 %v3955
    %v4052 = vpack.c.b16 %v4037, %v4036
    %v4053 = vpack.c.b16 %v4039, %v4038
    %v4054 = vpack.c.b16 %v4041, %v4040
    %v4055 = vpack.c.b16 %v4043, %v4042
    %v4056 = vpack.c.b16 %v4045, %v4044
    %v4057 = vpack.c.b16 %v4047, %v4046
    %v4058 = vpack.c.b16 %v4049, %v4048
    %v4059 = vpack.c.b16 %v4051, %v4050
    %4068 = vmatpush.bf16.msra.mxu0 %v4059
    %4069 = vmatpush.bf16.msra.mxu0 %v4058
    %4070 = vmatpush.bf16.msra.mxu0 %v4057
    %4071 = vmatpush.bf16.msra.mxu0 %v4056
    %4072 = vmatpush.bf16.msra.mxu0 %v4055
    %4073 = vmatpush.bf16.msra.mxu0 %v4054
    %4074 = vmatpush.bf16.msra.mxu0 %v4053
    %4075 = vmatpush.bf16.msra.mxu0 %v4052
    %4076 = vmatmul.bf16.gmra.mxu0 %v3988
    %v4077 = vpop.f32.mrf.mxu0
    %v4078 = vadd.f32 0.0, %v4077
    %v4079 = vpop.f32.mrf.mxu0
    %4080 = vmatmul.bf16.gmra.mxu0 %v3989
    %v4081 = vpop.f32.mrf.mxu0
    %v4082 = vadd.f32 0.0, %v4081
    %v4083 = vpop.f32.mrf.mxu0
    %4084 = vmatmul.bf16.gmra.mxu0 %v3990
    %v4085 = vpop.f32.mrf.mxu0
    %v4086 = vadd.f32 0.0, %v4085
    %v4087 = vpop.f32.mrf.mxu0
    %4088 = vmatmul.bf16.gmra.mxu0 %v3991
    %v4089 = vpop.f32.mrf.mxu0
    %v4090 = vadd.f32 0.0, %v4089
    %v4091 = vpop.f32.mrf.mxu0
    %4092 = vmatmul.bf16.gmra.mxu0 %v3992
    %v4093 = vpop.f32.mrf.mxu0
    %v4094 = vadd.f32 0.0, %v4093
    %v4095 = vpop.f32.mrf.mxu0
    %4096 = vmatmul.bf16.gmra.mxu0 %v3993
    %v4097 = vpop.f32.mrf.mxu0
    %v4098 = vadd.f32 0.0, %v4097
    %v4099 = vpop.f32.mrf.mxu0
    %4100 = vmatmul.bf16.gmra.mxu0 %v3994
    %v4101 = vpop.f32.mrf.mxu0
    %v4102 = vadd.f32 0.0, %v4101
    %v4103 = vpop.f32.mrf.mxu0
    %4104 = vmatmul.bf16.gmra.mxu0 %v3995
    %v4105 = vpop.f32.mrf.mxu0
    %v4106 = vadd.f32 0.0, %v4105
    %v4107 = vpop.f32.mrf.mxu0
    %4108 = vmatmul.bf16.gmra.mxu0 %v3996
    %v4109 = vpop.f32.mrf.mxu0
    %v4110 = vadd.f32 0.0, %v4109
    %v4111 = vpop.f32.mrf.mxu0
    %4112 = vmatmul.bf16.gmra.mxu0 %v3997
    %v4113 = vpop.f32.mrf.mxu0
    %v4114 = vadd.f32 0.0, %v4113
    %v4115 = vpop.f32.mrf.mxu0
    %4116 = vmatmul.bf16.gmra.mxu0 %v3998
    %v4117 = vpop.f32.mrf.mxu0
    %v4118 = vadd.f32 0.0, %v4117
    %v4119 = vpop.f32.mrf.mxu0
    %4120 = vmatmul.bf16.gmra.mxu0 %v3999
    %v4121 = vpop.f32.mrf.mxu0
    %v4122 = vadd.f32 0.0, %v4121
    %v4123 = vpop.f32.mrf.mxu0
    %4124 = vmatmul.bf16.gmra.mxu0 %v4000
    %v4125 = vpop.f32.mrf.mxu0
    %v4126 = vadd.f32 0.0, %v4125
    %v4127 = vpop.f32.mrf.mxu0
    %4128 = vmatmul.bf16.gmra.mxu0 %v4001
    %v4129 = vpop.f32.mrf.mxu0
    %v4130 = vadd.f32 0.0, %v4129
    %v4131 = vpop.f32.mrf.mxu0
    %4132 = vmatmul.bf16.gmra.mxu0 %v4002
    %v4133 = vpop.f32.mrf.mxu0
    %v4134 = vadd.f32 0.0, %v4133
    %v4135 = vpop.f32.mrf.mxu0
    %4136 = vmatmul.bf16.gmra.mxu0 %v4003
    %v4137 = vpop.f32.mrf.mxu0
    %v4138 = vadd.f32 0.0, %v4137
    %v4139 = vpop.f32.mrf.mxu0
    %4140 = vdwg.mxu0
    %v4173 = vunpack.c.l.b16 %v3490
    %v4174 = vunpack.c.l.b16 %v3491
    %v4175 = vunpack.c.l.b16 %v3492
    %v4176 = vunpack.c.l.b16 %v3493
    %v4177 = vunpack.c.l.b16 %v3494
    %v4178 = vunpack.c.l.b16 %v3495
    %v4179 = vunpack.c.l.b16 %v3496
    %v4180 = vunpack.c.l.b16 %v3497
    %v4181 = vunpack.c.l.b16 %v3498
    %v4182 = vunpack.c.l.b16 %v3499
    %v4183 = vunpack.c.l.b16 %v3500
    %v4184 = vunpack.c.l.b16 %v3501
    %v4185 = vunpack.c.l.b16 %v3502
    %v4186 = vunpack.c.l.b16 %v3503
    %v4187 = vunpack.c.l.b16 %v3504
    %v4188 = vunpack.c.l.b16 %v3505
    %v4189 = vunpack.c.l.b16 %v3506
    %v4190 = vunpack.c.l.b16 %v3507
    %v4191 = vunpack.c.l.b16 %v3508
    %v4192 = vunpack.c.l.b16 %v3509
    %v4193 = vunpack.c.l.b16 %v3510
    %v4194 = vunpack.c.l.b16 %v3511
    %v4195 = vunpack.c.l.b16 %v3512
    %v4196 = vunpack.c.l.b16 %v3513
    %v4197 = vunpack.c.l.b16 %v3514
    %v4198 = vunpack.c.l.b16 %v3515
    %v4199 = vunpack.c.l.b16 %v3516
    %v4200 = vunpack.c.l.b16 %v3517
    %v4201 = vunpack.c.l.b16 %v3518
    %v4202 = vunpack.c.l.b16 %v3519
    %v4203 = vunpack.c.l.b16 %v3520
    %v4204 = vunpack.c.l.b16 %v3521
    %v4205 = vpack.c.b16 %v4174, %v4173
    %v4206 = vpack.c.b16 %v4176, %v4175
    %v4207 = vpack.c.b16 %v4178, %v4177
    %v4208 = vpack.c.b16 %v4180, %v4179
    %v4209 = vpack.c.b16 %v4182, %v4181
    %v4210 = vpack.c.b16 %v4184, %v4183
    %v4211 = vpack.c.b16 %v4186, %v4185
    %v4212 = vpack.c.b16 %v4188, %v4187
    %v4213 = vpack.c.b16 %v4190, %v4189
    %v4214 = vpack.c.b16 %v4192, %v4191
    %v4215 = vpack.c.b16 %v4194, %v4193
    %v4216 = vpack.c.b16 %v4196, %v4195
    %v4217 = vpack.c.b16 %v4198, %v4197
    %v4218 = vpack.c.b16 %v4200, %v4199
    %v4219 = vpack.c.b16 %v4202, %v4201
    %v4220 = vpack.c.b16 %v4204, %v4203
    %v4253 = vunpack.c.l.b16 %v3523
    %v4254 = vunpack.c.l.b16 %v3524
    %v4255 = vunpack.c.l.b16 %v3525
    %v4256 = vunpack.c.l.b16 %v3526
    %v4257 = vunpack.c.l.b16 %v3527
    %v4258 = vunpack.c.l.b16 %v3528
    %v4259 = vunpack.c.l.b16 %v3529
    %v4260 = vunpack.c.l.b16 %v3530
    %v4261 = vunpack.c.l.b16 %v3531
    %v4262 = vunpack.c.l.b16 %v3532
    %v4263 = vunpack.c.l.b16 %v3533
    %v4264 = vunpack.c.l.b16 %v3534
    %v4265 = vunpack.c.l.b16 %v3535
    %v4266 = vunpack.c.l.b16 %v3536
    %v4267 = vunpack.c.l.b16 %v3537
    %v4268 = vunpack.c.l.b16 %v3538
    %v4269 = vpack.c.b16 %v4254, %v4253
    %v4270 = vpack.c.b16 %v4256, %v4255
    %v4271 = vpack.c.b16 %v4258, %v4257
    %v4272 = vpack.c.b16 %v4260, %v4259
    %v4273 = vpack.c.b16 %v4262, %v4261
    %v4274 = vpack.c.b16 %v4264, %v4263
    %v4275 = vpack.c.b16 %v4266, %v4265
    %v4276 = vpack.c.b16 %v4268, %v4267
    %4285 = vmatpush.bf16.msra.mxu0 %v4276
    %4286 = vmatpush.bf16.msra.mxu0 %v4275
    %4287 = vmatpush.bf16.msra.mxu0 %v4274
    %4288 = vmatpush.bf16.msra.mxu0 %v4273
    %4289 = vmatpush.bf16.msra.mxu0 %v4272
    %4290 = vmatpush.bf16.msra.mxu0 %v4271
    %4291 = vmatpush.bf16.msra.mxu0 %v4270
    %4292 = vmatpush.bf16.msra.mxu0 %v4269
    %4293 = vmatmul.bf16.gmra.mxu0 %v4205
    %v4294 = vpop.f32.mrf.mxu0
    %v4295 = vadd.f32 %v4078, %v4294
    %v4296 = vpop.f32.mrf.mxu0
    %4297 = vmatmul.bf16.gmra.mxu0 %v4206
    %v4298 = vpop.f32.mrf.mxu0
    %v4299 = vadd.f32 %v4082, %v4298
    %v4300 = vpop.f32.mrf.mxu0
    %4301 = vmatmul.bf16.gmra.mxu0 %v4207
    %v4302 = vpop.f32.mrf.mxu0
    %v4303 = vadd.f32 %v4086, %v4302
    %v4304 = vpop.f32.mrf.mxu0
    %4305 = vmatmul.bf16.gmra.mxu0 %v4208
    %v4306 = vpop.f32.mrf.mxu0
    %v4307 = vadd.f32 %v4090, %v4306
    %v4308 = vpop.f32.mrf.mxu0
    %4309 = vmatmul.bf16.gmra.mxu0 %v4209
    %v4310 = vpop.f32.mrf.mxu0
    %v4311 = vadd.f32 %v4094, %v4310
    %v4312 = vpop.f32.mrf.mxu0
    %4313 = vmatmul.bf16.gmra.mxu0 %v4210
    %v4314 = vpop.f32.mrf.mxu0
    %v4315 = vadd.f32 %v4098, %v4314
    %v4316 = vpop.f32.mrf.mxu0
    %4317 = vmatmul.bf16.gmra.mxu0 %v4211
    %v4318 = vpop.f32.mrf.mxu0
    %v4319 = vadd.f32 %v4102, %v4318
    %v4320 = vpop.f32.mrf.mxu0
    %4321 = vmatmul.bf16.gmra.mxu0 %v4212
    %v4322 = vpop.f32.mrf.mxu0
    %v4323 = vadd.f32 %v4106, %v4322
    %v4324 = vpop.f32.mrf.mxu0
    %4325 = vmatmul.bf16.gmra.mxu0 %v4213
    %v4326 = vpop.f32.mrf.mxu0
    %v4327 = vadd.f32 %v4110, %v4326
    %v4328 = vpop.f32.mrf.mxu0
    %4329 = vmatmul.bf16.gmra.mxu0 %v4214
    %v4330 = vpop.f32.mrf.mxu0
    %v4331 = vadd.f32 %v4114, %v4330
    %v4332 = vpop.f32.mrf.mxu0
    %4333 = vmatmul.bf16.gmra.mxu0 %v4215
    %v4334 = vpop.f32.mrf.mxu0
    %v4335 = vadd.f32 %v4118, %v4334
    %v4336 = vpop.f32.mrf.mxu0
    %4337 = vmatmul.bf16.gmra.mxu0 %v4216
    %v4338 = vpop.f32.mrf.mxu0
    %v4339 = vadd.f32 %v4122, %v4338
    %v4340 = vpop.f32.mrf.mxu0
    %4341 = vmatmul.bf16.gmra.mxu0 %v4217
    %v4342 = vpop.f32.mrf.mxu0
    %v4343 = vadd.f32 %v4126, %v4342
    %v4344 = vpop.f32.mrf.mxu0
    %4345 = vmatmul.bf16.gmra.mxu0 %v4218
    %v4346 = vpop.f32.mrf.mxu0
    %v4347 = vadd.f32 %v4130, %v4346
    %v4348 = vpop.f32.mrf.mxu0
    %4349 = vmatmul.bf16.gmra.mxu0 %v4219
    %v4350 = vpop.f32.mrf.mxu0
    %v4351 = vadd.f32 %v4134, %v4350
    %v4352 = vpop.f32.mrf.mxu0
    %4353 = vmatmul.bf16.gmra.mxu0 %v4220
    %v4354 = vpop.f32.mrf.mxu0
    %v4355 = vadd.f32 %v4138, %v4354
    %v4356 = vpop.f32.mrf.mxu0
    %4357 = vdwg.mxu0
    %v4358 = vld [vmem:[#allocation2] sm:$0xe]
    %v4359 = vld [vmem:[#allocation2 + $0xc] sm:$0xe]
    %v4360 = vld [vmem:[#allocation2 + $0x18] sm:$0xe]
    %v4361 = vld [vmem:[#allocation2 + $0x24] sm:$0xe]
    %v4362 = vld [vmem:[#allocation2 + $0x30] sm:$0xe]
    %v4363 = vld [vmem:[#allocation2 + $0x3c] sm:$0xe]
    %v4364 = vld [vmem:[#allocation2 + $0x48] sm:$0xe]
    %v4365 = vld [vmem:[#allocation2 + $0x54] sm:$0xe]
    %v4366 = vld [vmem:[#allocation2 + $0x60] sm:$0xe]
    %v4367 = vld [vmem:[#allocation2 + $0x6c] sm:$0xe]
    %v4368 = vld [vmem:[#allocation2 + $0x78] sm:$0xe]
    %v4369 = vld [vmem:[#allocation2 + $0x84] sm:$0xe]
    %v4370 = vld [vmem:[#allocation2 + $0x90] sm:$0xe]
    %v4371 = vld [vmem:[#allocation2 + $0x9c] sm:$0xe]
    %v4372 = vld [vmem:[#allocation2 + $0xa8] sm:$0xe]
    %v4373 = vld [vmem:[#allocation2 + $0xb4] sm:$0xe]
    %v4406 = vrot.slane %v4358, 5
    %v4407 = vrot.slane %v4406, 4
    %v4408 = vrot.slane %v3491, 5
    %v4409 = vsel %vm1224, %v4407, %v4408
    %v4410 = vrot.slane %v4408, 4
    %v4411 = vrot.slane %v3539, 5
    %v4412 = vsel %vm1224, %v4410, %v4411
    %v4413 = vrot.slane %v4359, 5
    %v4414 = vrot.slane %v4413, 4
    %v4415 = vrot.slane %v3493, 5
    %v4416 = vsel %vm1224, %v4414, %v4415
    %v4417 = vrot.slane %v4415, 4
    %v4418 = vrot.slane %v3540, 5
    %v4419 = vsel %vm1224, %v4417, %v4418
    %v4420 = vrot.slane %v4360, 5
    %v4421 = vrot.slane %v4420, 4
    %v4422 = vrot.slane %v3495, 5
    %v4423 = vsel %vm1224, %v4421, %v4422
    %v4424 = vrot.slane %v4422, 4
    %v4425 = vrot.slane %v3541, 5
    %v4426 = vsel %vm1224, %v4424, %v4425
    %v4427 = vrot.slane %v4361, 5
    %v4428 = vrot.slane %v4427, 4
    %v4429 = vrot.slane %v3497, 5
    %v4430 = vsel %vm1224, %v4428, %v4429
    %v4431 = vrot.slane %v4429, 4
    %v4432 = vrot.slane %v3542, 5
    %v4433 = vsel %vm1224, %v4431, %v4432
    %v4434 = vrot.slane %v4362, 5
    %v4435 = vrot.slane %v4434, 4
    %v4436 = vrot.slane %v3499, 5
    %v4437 = vsel %vm1224, %v4435, %v4436
    %v4438 = vrot.slane %v4436, 4
    %v4439 = vrot.slane %v3543, 5
    %v4440 = vsel %vm1224, %v4438, %v4439
    %v4441 = vrot.slane %v4363, 5
    %v4442 = vrot.slane %v4441, 4
    %v4443 = vrot.slane %v3501, 5
    %v4444 = vsel %vm1224, %v4442, %v4443
    %v4445 = vrot.slane %v4443, 4
    %v4446 = vrot.slane %v3544, 5
    %v4447 = vsel %vm1224, %v4445, %v4446
    %v4448 = vrot.slane %v4364, 5
    %v4449 = vrot.slane %v4448, 4
    %v4450 = vrot.slane %v3503, 5
    %v4451 = vsel %vm1224, %v4449, %v4450
    %v4452 = vrot.slane %v4450, 4
    %v4453 = vrot.slane %v3545, 5
    %v4454 = vsel %vm1224, %v4452, %v4453
    %v4455 = vrot.slane %v4365, 5
    %v4456 = vrot.slane %v4455, 4
    %v4457 = vrot.slane %v3505, 5
    %v4458 = vsel %vm1224, %v4456, %v4457
    %v4459 = vrot.slane %v4457, 4
    %v4460 = vrot.slane %v3546, 5
    %v4461 = vsel %vm1224, %v4459, %v4460
    %v4462 = vrot.slane %v4366, 5
    %v4463 = vrot.slane %v4462, 4
    %v4464 = vrot.slane %v3507, 5
    %v4465 = vsel %vm1224, %v4463, %v4464
    %v4466 = vrot.slane %v4464, 4
    %v4467 = vrot.slane %v3547, 5
    %v4468 = vsel %vm1224, %v4466, %v4467
    %v4469 = vrot.slane %v4367, 5
    %v4470 = vrot.slane %v4469, 4
    %v4471 = vrot.slane %v3509, 5
    %v4472 = vsel %vm1224, %v4470, %v4471
    %v4473 = vrot.slane %v4471, 4
    %v4474 = vrot.slane %v3548, 5
    %v4475 = vsel %vm1224, %v4473, %v4474
    %v4476 = vrot.slane %v4368, 5
    %v4477 = vrot.slane %v4476, 4
    %v4478 = vrot.slane %v3511, 5
    %v4479 = vsel %vm1224, %v4477, %v4478
    %v4480 = vrot.slane %v4478, 4
    %v4481 = vrot.slane %v3549, 5
    %v4482 = vsel %vm1224, %v4480, %v4481
    %v4483 = vrot.slane %v4369, 5
    %v4484 = vrot.slane %v4483, 4
    %v4485 = vrot.slane %v3513, 5
    %v4486 = vsel %vm1224, %v4484, %v4485
    %v4487 = vrot.slane %v4485, 4
    %v4488 = vrot.slane %v3550, 5
    %v4489 = vsel %vm1224, %v4487, %v4488
    %v4490 = vrot.slane %v4370, 5
    %v4491 = vrot.slane %v4490, 4
    %v4492 = vrot.slane %v3515, 5
    %v4493 = vsel %vm1224, %v4491, %v4492
    %v4494 = vrot.slane %v4492, 4
    %v4495 = vrot.slane %v3551, 5
    %v4496 = vsel %vm1224, %v4494, %v4495
    %v4497 = vrot.slane %v4371, 5
    %v4498 = vrot.slane %v4497, 4
    %v4499 = vrot.slane %v3517, 5
    %v4500 = vsel %vm1224, %v4498, %v4499
    %v4501 = vrot.slane %v4499, 4
    %v4502 = vrot.slane %v3552, 5
    %v4503 = vsel %vm1224, %v4501, %v4502
    %v4504 = vrot.slane %v4372, 5
    %v4505 = vrot.slane %v4504, 4
    %v4506 = vrot.slane %v3519, 5
    %v4507 = vsel %vm1224, %v4505, %v4506
    %v4508 = vrot.slane %v4506, 4
    %v4509 = vrot.slane %v3553, 5
    %v4510 = vsel %vm1224, %v4508, %v4509
    %v4511 = vrot.slane %v4373, 5
    %v4512 = vrot.slane %v4511, 4
    %v4513 = vrot.slane %v3521, 5
    %v4514 = vsel %vm1224, %v4512, %v4513
    %v4515 = vrot.slane %v4513, 4
    %v4516 = vrot.slane %v3554, 5
    %v4517 = vsel %vm1224, %v4515, %v4516
    %s4518 = scalar_lea.vmem [#allocation7], 512
    %v4519 = vld [vmem:[%s4518] sm:$0xf]
    %v4520 = vld [vmem:[%s4518 + $0x4] sm:$0xf]
    %v4521 = vld [vmem:[%s4518 + $0x8] sm:$0xf]
    %v4522 = vld [vmem:[%s4518 + $0xc] sm:$0xf]
    %v4523 = vld [vmem:[%s4518 + $0x10] sm:$0xf]
    %v4524 = vld [vmem:[%s4518 + $0x14] sm:$0xf]
    %v4525 = vld [vmem:[%s4518 + $0x18] sm:$0xf]
    %v4526 = vld [vmem:[%s4518 + $0x1c] sm:$0xf]
    %v4527 = vld [vmem:[%s4518 + $0x20] sm:$0xf]
    %v4528 = vld [vmem:[%s4518 + $0x24] sm:$0xf]
    %v4529 = vld [vmem:[%s4518 + $0x28] sm:$0xf]
    %v4530 = vld [vmem:[%s4518 + $0x2c] sm:$0xf]
    %v4531 = vld [vmem:[%s4518 + $0x30] sm:$0xf]
    %v4532 = vld [vmem:[%s4518 + $0x34] sm:$0xf]
    %v4533 = vld [vmem:[%s4518 + $0x38] sm:$0xf]
    %v4534 = vld [vmem:[%s4518 + $0x3c] sm:$0xf]
    %v4535 = vunpack.c.l.b16 %v4409
    %v4536 = vunpack.c.l.b16 %v4412
    %v4537 = vunpack.c.l.b16 %v4416
    %v4538 = vunpack.c.l.b16 %v4419
    %v4539 = vunpack.c.l.b16 %v4423
    %v4540 = vunpack.c.l.b16 %v4426
    %v4541 = vunpack.c.l.b16 %v4430
    %v4542 = vunpack.c.l.b16 %v4433
    %v4543 = vunpack.c.l.b16 %v4437
    %v4544 = vunpack.c.l.b16 %v4440
    %v4545 = vunpack.c.l.b16 %v4444
    %v4546 = vunpack.c.l.b16 %v4447
    %v4547 = vunpack.c.l.b16 %v4451
    %v4548 = vunpack.c.l.b16 %v4454
    %v4549 = vunpack.c.l.b16 %v4458
    %v4550 = vunpack.c.l.b16 %v4461
    %v4551 = vunpack.c.l.b16 %v4465
    %v4552 = vunpack.c.l.b16 %v4468
    %v4553 = vunpack.c.l.b16 %v4472
    %v4554 = vunpack.c.l.b16 %v4475
    %v4555 = vunpack.c.l.b16 %v4479
    %v4556 = vunpack.c.l.b16 %v4482
    %v4557 = vunpack.c.l.b16 %v4486
    %v4558 = vunpack.c.l.b16 %v4489
    %v4559 = vunpack.c.l.b16 %v4493
    %v4560 = vunpack.c.l.b16 %v4496
    %v4561 = vunpack.c.l.b16 %v4500
    %v4562 = vunpack.c.l.b16 %v4503
    %v4563 = vunpack.c.l.b16 %v4507
    %v4564 = vunpack.c.l.b16 %v4510
    %v4565 = vunpack.c.l.b16 %v4514
    %v4566 = vunpack.c.l.b16 %v4517
    %v4567 = vpack.c.b16 %v4536, %v4535
    %v4568 = vpack.c.b16 %v4538, %v4537
    %v4569 = vpack.c.b16 %v4540, %v4539
    %v4570 = vpack.c.b16 %v4542, %v4541
    %v4571 = vpack.c.b16 %v4544, %v4543
    %v4572 = vpack.c.b16 %v4546, %v4545
    %v4573 = vpack.c.b16 %v4548, %v4547
    %v4574 = vpack.c.b16 %v4550, %v4549
    %v4575 = vpack.c.b16 %v4552, %v4551
    %v4576 = vpack.c.b16 %v4554, %v4553
    %v4577 = vpack.c.b16 %v4556, %v4555
    %v4578 = vpack.c.b16 %v4558, %v4557
    %v4579 = vpack.c.b16 %v4560, %v4559
    %v4580 = vpack.c.b16 %v4562, %v4561
    %v4581 = vpack.c.b16 %v4564, %v4563
    %v4582 = vpack.c.b16 %v4566, %v4565
    %v4615 = vunpack.c.l.b16 %v4519
    %v4616 = vunpack.c.l.b16 %v4520
    %v4617 = vunpack.c.l.b16 %v4521
    %v4618 = vunpack.c.l.b16 %v4522
    %v4619 = vunpack.c.l.b16 %v4523
    %v4620 = vunpack.c.l.b16 %v4524
    %v4621 = vunpack.c.l.b16 %v4525
    %v4622 = vunpack.c.l.b16 %v4526
    %v4623 = vunpack.c.l.b16 %v4527
    %v4624 = vunpack.c.l.b16 %v4528
    %v4625 = vunpack.c.l.b16 %v4529
    %v4626 = vunpack.c.l.b16 %v4530
    %v4627 = vunpack.c.l.b16 %v4531
    %v4628 = vunpack.c.l.b16 %v4532
    %v4629 = vunpack.c.l.b16 %v4533
    %v4630 = vunpack.c.l.b16 %v4534
    %v4631 = vpack.c.b16 %v4616, %v4615
    %v4632 = vpack.c.b16 %v4618, %v4617
    %v4633 = vpack.c.b16 %v4620, %v4619
    %v4634 = vpack.c.b16 %v4622, %v4621
    %v4635 = vpack.c.b16 %v4624, %v4623
    %v4636 = vpack.c.b16 %v4626, %v4625
    %v4637 = vpack.c.b16 %v4628, %v4627
    %v4638 = vpack.c.b16 %v4630, %v4629
    %4647 = vmatpush.bf16.msra.mxu0 %v4638
    %4648 = vmatpush.bf16.msra.mxu0 %v4637
    %4649 = vmatpush.bf16.msra.mxu0 %v4636
    %4650 = vmatpush.bf16.msra.mxu0 %v4635
    %4651 = vmatpush.bf16.msra.mxu0 %v4634
    %4652 = vmatpush.bf16.msra.mxu0 %v4633
    %4653 = vmatpush.bf16.msra.mxu0 %v4632
    %4654 = vmatpush.bf16.msra.mxu0 %v4631
    %4655 = vmatmul.bf16.gmra.mxu0 %v4567
    %v4656 = vpop.f32.mrf.mxu0
    %v4657 = vadd.f32 0.0, %v4656
    %v4658 = vpop.f32.mrf.mxu0
    %4659 = vmatmul.bf16.gmra.mxu0 %v4568
    %v4660 = vpop.f32.mrf.mxu0
    %v4661 = vadd.f32 0.0, %v4660
    %v4662 = vpop.f32.mrf.mxu0
    %4663 = vmatmul.bf16.gmra.mxu0 %v4569
    %v4664 = vpop.f32.mrf.mxu0
    %v4665 = vadd.f32 0.0, %v4664
    %v4666 = vpop.f32.mrf.mxu0
    %4667 = vmatmul.bf16.gmra.mxu0 %v4570
    %v4668 = vpop.f32.mrf.mxu0
    %v4669 = vadd.f32 0.0, %v4668
    %v4670 = vpop.f32.mrf.mxu0
    %4671 = vmatmul.bf16.gmra.mxu0 %v4571
    %v4672 = vpop.f32.mrf.mxu0
    %v4673 = vadd.f32 0.0, %v4672
    %v4674 = vpop.f32.mrf.mxu0
    %4675 = vmatmul.bf16.gmra.mxu0 %v4572
    %v4676 = vpop.f32.mrf.mxu0
    %v4677 = vadd.f32 0.0, %v4676
    %v4678 = vpop.f32.mrf.mxu0
    %4679 = vmatmul.bf16.gmra.mxu0 %v4573
    %v4680 = vpop.f32.mrf.mxu0
    %v4681 = vadd.f32 0.0, %v4680
    %v4682 = vpop.f32.mrf.mxu0
    %4683 = vmatmul.bf16.gmra.mxu0 %v4574
    %v4684 = vpop.f32.mrf.mxu0
    %v4685 = vadd.f32 0.0, %v4684
    %v4686 = vpop.f32.mrf.mxu0
    %4687 = vmatmul.bf16.gmra.mxu0 %v4575
    %v4688 = vpop.f32.mrf.mxu0
    %v4689 = vadd.f32 0.0, %v4688
    %v4690 = vpop.f32.mrf.mxu0
    %4691 = vmatmul.bf16.gmra.mxu0 %v4576
    %v4692 = vpop.f32.mrf.mxu0
    %v4693 = vadd.f32 0.0, %v4692
    %v4694 = vpop.f32.mrf.mxu0
    %4695 = vmatmul.bf16.gmra.mxu0 %v4577
    %v4696 = vpop.f32.mrf.mxu0
    %v4697 = vadd.f32 0.0, %v4696
    %v4698 = vpop.f32.mrf.mxu0
    %4699 = vmatmul.bf16.gmra.mxu0 %v4578
    %v4700 = vpop.f32.mrf.mxu0
    %v4701 = vadd.f32 0.0, %v4700
    %v4702 = vpop.f32.mrf.mxu0
    %4703 = vmatmul.bf16.gmra.mxu0 %v4579
    %v4704 = vpop.f32.mrf.mxu0
    %v4705 = vadd.f32 0.0, %v4704
    %v4706 = vpop.f32.mrf.mxu0
    %4707 = vmatmul.bf16.gmra.mxu0 %v4580
    %v4708 = vpop.f32.mrf.mxu0
    %v4709 = vadd.f32 0.0, %v4708
    %v4710 = vpop.f32.mrf.mxu0
    %4711 = vmatmul.bf16.gmra.mxu0 %v4581
    %v4712 = vpop.f32.mrf.mxu0
    %v4713 = vadd.f32 0.0, %v4712
    %v4714 = vpop.f32.mrf.mxu0
    %4715 = vmatmul.bf16.gmra.mxu0 %v4582
    %v4716 = vpop.f32.mrf.mxu0
    %v4717 = vadd.f32 0.0, %v4716
    %v4718 = vpop.f32.mrf.mxu0
    %4719 = vdwg.mxu0
    %v4720 = vadd.f32 %v4295, %v4657
    %v4721 = vadd.f32 %v4299, %v4661
    %v4722 = vadd.f32 %v4303, %v4665
    %v4723 = vadd.f32 %v4307, %v4669
    %v4724 = vadd.f32 %v4311, %v4673
    %v4725 = vadd.f32 %v4315, %v4677
    %v4726 = vadd.f32 %v4319, %v4681
    %v4727 = vadd.f32 %v4323, %v4685
    %v4728 = vadd.f32 %v4327, %v4689
    %v4729 = vadd.f32 %v4331, %v4693
    %v4730 = vadd.f32 %v4335, %v4697
    %v4731 = vadd.f32 %v4339, %v4701
    %v4732 = vadd.f32 %v4343, %v4705
    %v4733 = vadd.f32 %v4347, %v4709
    %v4734 = vadd.f32 %v4351, %v4713
    %v4735 = vadd.f32 %v4355, %v4717
    %v4736 = vld [vmem:[#allocation9 + $0x2] sm:$0x1]
    %v4737 = vperm.slane %v4736, 0
    %v4738 = vadd.f32 %v4720, %v4737
    %v4739 = vadd.f32 %v4721, %v4737
    %v4740 = vadd.f32 %v4722, %v4737
    %v4741 = vadd.f32 %v4723, %v4737
    %v4742 = vadd.f32 %v4724, %v4737
    %v4743 = vadd.f32 %v4725, %v4737
    %v4744 = vadd.f32 %v4726, %v4737
    %v4745 = vadd.f32 %v4727, %v4737
    %v4746 = vadd.f32 %v4728, %v4737
    %v4747 = vadd.f32 %v4729, %v4737
    %v4748 = vadd.f32 %v4730, %v4737
    %v4749 = vadd.f32 %v4731, %v4737
    %v4750 = vadd.f32 %v4732, %v4737
    %v4751 = vadd.f32 %v4733, %v4737
    %v4752 = vadd.f32 %v4734, %v4737
    %v4753 = vadd.f32 %v4735, %v4737
    %v4754 = vmax.f32 %v4738, 0.0
    %v4755 = vmax.f32 %v4739, 0.0
    %v4756 = vmax.f32 %v4740, 0.0
    %v4757 = vmax.f32 %v4741, 0.0
    %v4758 = vmax.f32 %v4742, 0.0
    %v4759 = vmax.f32 %v4743, 0.0
    %v4760 = vmax.f32 %v4744, 0.0
    %v4761 = vmax.f32 %v4745, 0.0
    %v4762 = vmax.f32 %v4746, 0.0
    %v4763 = vmax.f32 %v4747, 0.0
    %v4764 = vmax.f32 %v4748, 0.0
    %v4765 = vmax.f32 %v4749, 0.0
    %v4766 = vmax.f32 %v4750, 0.0
    %v4767 = vmax.f32 %v4751, 0.0
    %v4768 = vmax.f32 %v4752, 0.0
    %v4769 = vmax.f32 %v4753, 0.0
    %v4770 = vpack.c.bf16 %v4754, %v4754
    %v4771 = vpack.c.bf16 %v4755, %v4755
    %v4772 = vpack.c.bf16 %v4756, %v4756
    %v4773 = vpack.c.bf16 %v4757, %v4757
    %v4774 = vpack.c.bf16 %v4758, %v4758
    %v4775 = vpack.c.bf16 %v4759, %v4759
    %v4776 = vpack.c.bf16 %v4760, %v4760
    %v4777 = vpack.c.bf16 %v4761, %v4761
    %v4778 = vpack.c.bf16 %v4762, %v4762
    %v4779 = vpack.c.bf16 %v4763, %v4763
    %v4780 = vpack.c.bf16 %v4764, %v4764
    %v4781 = vpack.c.bf16 %v4765, %v4765
    %v4782 = vpack.c.bf16 %v4766, %v4766
    %v4783 = vpack.c.bf16 %v4767, %v4767
    %v4784 = vpack.c.bf16 %v4768, %v4768
    %v4785 = vpack.c.bf16 %v4769, %v4769
    %v4802 = vrot.slane %v4770, 7
    %v4803 = vrot.slane %v4771, 7
    %v4804 = vrot.slane %v4772, 7
    %v4805 = vrot.slane %v4773, 7
    %v4806 = vrot.slane %v4774, 7
    %v4807 = vrot.slane %v4775, 7
    %v4808 = vrot.slane %v4776, 7
    %v4809 = vrot.slane %v4777, 7
    %v4810 = vrot.slane %v4778, 7
    %v4811 = vrot.slane %v4779, 7
    %v4812 = vrot.slane %v4780, 7
    %v4813 = vrot.slane %v4781, 7
    %v4814 = vrot.slane %v4782, 7
    %v4815 = vrot.slane %v4783, 7
    %v4816 = vrot.slane %v4784, 7
    %v4817 = vrot.slane %v4785, 7
    %v4834 = vld [vmem:[#allocation2] sm:$0xe]
    %v4835 = vsel %vm1829, %v4802, %v4834
    %4836 = vst [vmem:[#allocation2] sm:$0xe] %v4835
    %v4837 = vld [vmem:[#allocation2 + $0xc] sm:$0xe]
    %v4838 = vsel %vm1829, %v4803, %v4837
    %4839 = vst [vmem:[#allocation2 + $0xc] sm:$0xe] %v4838
    %v4840 = vld [vmem:[#allocation2 + $0x18] sm:$0xe]
    %v4841 = vsel %vm1829, %v4804, %v4840
    %4842 = vst [vmem:[#allocation2 + $0x18] sm:$0xe] %v4841
    %v4843 = vld [vmem:[#allocation2 + $0x24] sm:$0xe]
    %v4844 = vsel %vm1829, %v4805, %v4843
    %4845 = vst [vmem:[#allocation2 + $0x24] sm:$0xe] %v4844
    %v4846 = vld [vmem:[#allocation2 + $0x30] sm:$0xe]
    %v4847 = vsel %vm1829, %v4806, %v4846
    %4848 = vst [vmem:[#allocation2 + $0x30] sm:$0xe] %v4847
    %v4849 = vld [vmem:[#allocation2 + $0x3c] sm:$0xe]
    %v4850 = vsel %vm1829, %v4807, %v4849
    %4851 = vst [vmem:[#allocation2 + $0x3c] sm:$0xe] %v4850
    %v4852 = vld [vmem:[#allocation2 + $0x48] sm:$0xe]
    %v4853 = vsel %vm1829, %v4808, %v4852
    %4854 = vst [vmem:[#allocation2 + $0x48] sm:$0xe] %v4853
    %v4855 = vld [vmem:[#allocation2 + $0x54] sm:$0xe]
    %v4856 = vsel %vm1829, %v4809, %v4855
    %4857 = vst [vmem:[#allocation2 + $0x54] sm:$0xe] %v4856
    %v4858 = vld [vmem:[#allocation2 + $0x60] sm:$0xe]
    %v4859 = vsel %vm1829, %v4810, %v4858
    %4860 = vst [vmem:[#allocation2 + $0x60] sm:$0xe] %v4859
    %v4861 = vld [vmem:[#allocation2 + $0x6c] sm:$0xe]
    %v4862 = vsel %vm1829, %v4811, %v4861
    %4863 = vst [vmem:[#allocation2 + $0x6c] sm:$0xe] %v4862
    %v4864 = vld [vmem:[#allocation2 + $0x78] sm:$0xe]
    %v4865 = vsel %vm1829, %v4812, %v4864
    %4866 = vst [vmem:[#allocation2 + $0x78] sm:$0xe] %v4865
    %v4867 = vld [vmem:[#allocation2 + $0x84] sm:$0xe]
    %v4868 = vsel %vm1829, %v4813, %v4867
    %4869 = vst [vmem:[#allocation2 + $0x84] sm:$0xe] %v4868
    %v4870 = vld [vmem:[#allocation2 + $0x90] sm:$0xe]
    %v4871 = vsel %vm1829, %v4814, %v4870
    %4872 = vst [vmem:[#allocation2 + $0x90] sm:$0xe] %v4871
    %v4873 = vld [vmem:[#allocation2 + $0x9c] sm:$0xe]
    %v4874 = vsel %vm1829, %v4815, %v4873
    %4875 = vst [vmem:[#allocation2 + $0x9c] sm:$0xe] %v4874
    %v4876 = vld [vmem:[#allocation2 + $0xa8] sm:$0xe]
    %v4877 = vsel %vm1829, %v4816, %v4876
    %4878 = vst [vmem:[#allocation2 + $0xa8] sm:$0xe] %v4877
    %v4879 = vld [vmem:[#allocation2 + $0xb4] sm:$0xe]
    %v4880 = vsel %vm1829, %v4817, %v4879
    %4881 = vst [vmem:[#allocation2 + $0xb4] sm:$0xe] %v4880
    %v4882 = vld [vmem:[#allocation2] sm:$0x8]
    %v4883 = vsel %vm1880, 0, %v4882
    %4884 = vst [vmem:[#allocation2] sm:$0x8] %v4883
    %v4885 = vld [vmem:[#allocation2 + $0x4] sm:$0x1]
    %v4886 = vsel %vm1886, 0, %v4885
    %4887 = vst [vmem:[#allocation2 + $0x4] sm:$0x1] %v4886
    %v4888 = vld [vmem:[#allocation2 + $0xc] sm:$0x8]
    %v4889 = vsel %vm1880, 0, %v4888
    %4890 = vst [vmem:[#allocation2 + $0xc] sm:$0x8] %v4889
    %v4891 = vld [vmem:[#allocation2 + $0x10] sm:$0x1]
    %v4892 = vsel %vm1886, 0, %v4891
    %4893 = vst [vmem:[#allocation2 + $0x10] sm:$0x1] %v4892
    %v4894 = vld [vmem:[#allocation2 + $0x18] sm:$0x8]
    %v4895 = vsel %vm1880, 0, %v4894
    %4896 = vst [vmem:[#allocation2 + $0x18] sm:$0x8] %v4895
    %v4897 = vld [vmem:[#allocation2 + $0x1c] sm:$0x1]
    %v4898 = vsel %vm1886, 0, %v4897
    %4899 = vst [vmem:[#allocation2 + $0x1c] sm:$0x1] %v4898
    %v4900 = vld [vmem:[#allocation2 + $0x24] sm:$0x8]
    %v4901 = vsel %vm1880, 0, %v4900
    %4902 = vst [vmem:[#allocation2 + $0x24] sm:$0x8] %v4901
    %v4903 = vld [vmem:[#allocation2 + $0x28] sm:$0x1]
    %v4904 = vsel %vm1886, 0, %v4903
    %4905 = vst [vmem:[#allocation2 + $0x28] sm:$0x1] %v4904
    %v4906 = vld [vmem:[#allocation2 + $0x30] sm:$0x8]
    %v4907 = vsel %vm1880, 0, %v4906
    %4908 = vst [vmem:[#allocation2 + $0x30] sm:$0x8] %v4907
    %v4909 = vld [vmem:[#allocation2 + $0x34] sm:$0x1]
    %v4910 = vsel %vm1886, 0, %v4909
    %4911 = vst [vmem:[#allocation2 + $0x34] sm:$0x1] %v4910
    %v4912 = vld [vmem:[#allocation2 + $0x3c] sm:$0x8]
    %v4913 = vsel %vm1880, 0, %v4912
    %4914 = vst [vmem:[#allocation2 + $0x3c] sm:$0x8] %v4913
    %v4915 = vld [vmem:[#allocation2 + $0x40] sm:$0x1]
    %v4916 = vsel %vm1886, 0, %v4915
    %4917 = vst [vmem:[#allocation2 + $0x40] sm:$0x1] %v4916
    %v4918 = vld [vmem:[#allocation2 + $0x48] sm:$0x8]
    %v4919 = vsel %vm1880, 0, %v4918
    %4920 = vst [vmem:[#allocation2 + $0x48] sm:$0x8] %v4919
    %v4921 = vld [vmem:[#allocation2 + $0x4c] sm:$0x1]
    %v4922 = vsel %vm1886, 0, %v4921
    %4923 = vst [vmem:[#allocation2 + $0x4c] sm:$0x1] %v4922
    %v4924 = vld [vmem:[#allocation2 + $0x54] sm:$0x8]
    %v4925 = vsel %vm1880, 0, %v4924
    %4926 = vst [vmem:[#allocation2 + $0x54] sm:$0x8] %v4925
    %v4927 = vld [vmem:[#allocation2 + $0x58] sm:$0x1]
    %v4928 = vsel %vm1886, 0, %v4927
    %4929 = vst [vmem:[#allocation2 + $0x58] sm:$0x1] %v4928
    %v4930 = vld [vmem:[#allocation2 + $0x60] sm:$0x8]
    %v4931 = vsel %vm1880, 0, %v4930
    %4932 = vst [vmem:[#allocation2 + $0x60] sm:$0x8] %v4931
    %v4933 = vld [vmem:[#allocation2 + $0x64] sm:$0x1]
    %v4934 = vsel %vm1886, 0, %v4933
    %4935 = vst [vmem:[#allocation2 + $0x64] sm:$0x1] %v4934
    %v4936 = vld [vmem:[#allocation2 + $0x6c] sm:$0x8]
    %v4937 = vsel %vm1880, 0, %v4936
    %4938 = vst [vmem:[#allocation2 + $0x6c] sm:$0x8] %v4937
    %v4939 = vld [vmem:[#allocation2 + $0x70] sm:$0x1]
    %v4940 = vsel %vm1886, 0, %v4939
    %4941 = vst [vmem:[#allocation2 + $0x70] sm:$0x1] %v4940
    %v4942 = vld [vmem:[#allocation2 + $0x78] sm:$0x8]
    %v4943 = vsel %vm1880, 0, %v4942
    %4944 = vst [vmem:[#allocation2 + $0x78] sm:$0x8] %v4943
    %v4945 = vld [vmem:[#allocation2 + $0x7c] sm:$0x1]
    %v4946 = vsel %vm1886, 0, %v4945
    %4947 = vst [vmem:[#allocation2 + $0x7c] sm:$0x1] %v4946
    %v4948 = vld [vmem:[#allocation2 + $0x84] sm:$0x8]
    %v4949 = vsel %vm1880, 0, %v4948
    %4950 = vst [vmem:[#allocation2 + $0x84] sm:$0x8] %v4949
    %v4951 = vld [vmem:[#allocation2 + $0x88] sm:$0x1]
    %v4952 = vsel %vm1886, 0, %v4951
    %4953 = vst [vmem:[#allocation2 + $0x88] sm:$0x1] %v4952
    %v4954 = vld [vmem:[#allocation2 + $0x90] sm:$0x8]
    %v4955 = vsel %vm1880, 0, %v4954
    %4956 = vst [vmem:[#allocation2 + $0x90] sm:$0x8] %v4955
    %v4957 = vld [vmem:[#allocation2 + $0x94] sm:$0x1]
    %v4958 = vsel %vm1886, 0, %v4957
    %4959 = vst [vmem:[#allocation2 + $0x94] sm:$0x1] %v4958
    %v4960 = vld [vmem:[#allocation2 + $0x9c] sm:$0x8]
    %v4961 = vsel %vm1880, 0, %v4960
    %4962 = vst [vmem:[#allocation2 + $0x9c] sm:$0x8] %v4961
    %v4963 = vld [vmem:[#allocation2 + $0xa0] sm:$0x1]
    %v4964 = vsel %vm1886, 0, %v4963
    %4965 = vst [vmem:[#allocation2 + $0xa0] sm:$0x1] %v4964
    %v4966 = vld [vmem:[#allocation2 + $0xa8] sm:$0x8]
    %v4967 = vsel %vm1880, 0, %v4966
    %4968 = vst [vmem:[#allocation2 + $0xa8] sm:$0x8] %v4967
    %v4969 = vld [vmem:[#allocation2 + $0xac] sm:$0x1]
    %v4970 = vsel %vm1886, 0, %v4969
    %4971 = vst [vmem:[#allocation2 + $0xac] sm:$0x1] %v4970
    %v4972 = vld [vmem:[#allocation2 + $0xb4] sm:$0x8]
    %v4973 = vsel %vm1880, 0, %v4972
    %4974 = vst [vmem:[#allocation2 + $0xb4] sm:$0x8] %v4973
    %v4975 = vld [vmem:[#allocation2 + $0xb8] sm:$0x1]
    %v4976 = vsel %vm1886, 0, %v4975
    %4977 = vst [vmem:[#allocation2 + $0xb8] sm:$0x1] %v4976
    %v4978 = vld [vmem:[#allocation2] sm:$0xf]
    %v4979 = vld [vmem:[#allocation2 + $0x4] sm:$0xf]
    %v4980 = vld [vmem:[#allocation2 + $0xc] sm:$0xf]
    %v4981 = vld [vmem:[#allocation2 + $0x10] sm:$0xf]
    %v4982 = vld [vmem:[#allocation2 + $0x18] sm:$0xf]
    %v4983 = vld [vmem:[#allocation2 + $0x1c] sm:$0xf]
    %v4984 = vld [vmem:[#allocation2 + $0x24] sm:$0xf]
    %v4985 = vld [vmem:[#allocation2 + $0x28] sm:$0xf]
    %v4986 = vld [vmem:[#allocation2 + $0x30] sm:$0xf]
    %v4987 = vld [vmem:[#allocation2 + $0x34] sm:$0xf]
    %v4988 = vld [vmem:[#allocation2 + $0x3c] sm:$0xf]
    %v4989 = vld [vmem:[#allocation2 + $0x40] sm:$0xf]
    %v4990 = vld [vmem:[#allocation2 + $0x48] sm:$0xf]
    %v4991 = vld [vmem:[#allocation2 + $0x4c] sm:$0xf]
    %v4992 = vld [vmem:[#allocation2 + $0x54] sm:$0xf]
    %v4993 = vld [vmem:[#allocation2 + $0x58] sm:$0xf]
    %v4994 = vld [vmem:[#allocation2 + $0x60] sm:$0xf]
    %v4995 = vld [vmem:[#allocation2 + $0x64] sm:$0xf]
    %v4996 = vld [vmem:[#allocation2 + $0x6c] sm:$0xf]
    %v4997 = vld [vmem:[#allocation2 + $0x70] sm:$0xf]
    %v4998 = vld [vmem:[#allocation2 + $0x78] sm:$0xf]
    %v4999 = vld [vmem:[#allocation2 + $0x7c] sm:$0xf]
    %v5000 = vld [vmem:[#allocation2 + $0x84] sm:$0xf]
    %v5001 = vld [vmem:[#allocation2 + $0x88] sm:$0xf]
    %v5002 = vld [vmem:[#allocation2 + $0x90] sm:$0xf]
    %v5003 = vld [vmem:[#allocation2 + $0x94] sm:$0xf]
    %v5004 = vld [vmem:[#allocation2 + $0x9c] sm:$0xf]
    %v5005 = vld [vmem:[#allocation2 + $0xa0] sm:$0xf]
    %v5006 = vld [vmem:[#allocation2 + $0xa8] sm:$0xf]
    %v5007 = vld [vmem:[#allocation2 + $0xac] sm:$0xf]
    %v5008 = vld [vmem:[#allocation2 + $0xb4] sm:$0xf]
    %v5009 = vld [vmem:[#allocation2 + $0xb8] sm:$0xf]
    %s5010 = scalar_lea.vmem [#allocation7], 576
    %v5011 = vld [vmem:[%s5010] sm:$0xf]
    %v5012 = vld [vmem:[%s5010 + $0x4] sm:$0xf]
    %v5013 = vld [vmem:[%s5010 + $0x8] sm:$0xf]
    %v5014 = vld [vmem:[%s5010 + $0xc] sm:$0xf]
    %v5015 = vld [vmem:[%s5010 + $0x10] sm:$0xf]
    %v5016 = vld [vmem:[%s5010 + $0x14] sm:$0xf]
    %v5017 = vld [vmem:[%s5010 + $0x18] sm:$0xf]
    %v5018 = vld [vmem:[%s5010 + $0x1c] sm:$0xf]
    %v5019 = vld [vmem:[%s5010 + $0x20] sm:$0xf]
    %v5020 = vld [vmem:[%s5010 + $0x24] sm:$0xf]
    %v5021 = vld [vmem:[%s5010 + $0x28] sm:$0xf]
    %v5022 = vld [vmem:[%s5010 + $0x2c] sm:$0xf]
    %v5023 = vld [vmem:[%s5010 + $0x30] sm:$0xf]
    %v5024 = vld [vmem:[%s5010 + $0x34] sm:$0xf]
    %v5025 = vld [vmem:[%s5010 + $0x38] sm:$0xf]
    %v5026 = vld [vmem:[%s5010 + $0x3c] sm:$0xf]
    %v5027 = vld [vmem:[#allocation2 + $0x8] sm:$0x1]
    %v5028 = vld [vmem:[#allocation2 + $0x14] sm:$0x1]
    %v5029 = vld [vmem:[#allocation2 + $0x20] sm:$0x1]
    %v5030 = vld [vmem:[#allocation2 + $0x2c] sm:$0x1]
    %v5031 = vld [vmem:[#allocation2 + $0x38] sm:$0x1]
    %v5032 = vld [vmem:[#allocation2 + $0x44] sm:$0x1]
    %v5033 = vld [vmem:[#allocation2 + $0x50] sm:$0x1]
    %v5034 = vld [vmem:[#allocation2 + $0x5c] sm:$0x1]
    %v5035 = vld [vmem:[#allocation2 + $0x68] sm:$0x1]
    %v5036 = vld [vmem:[#allocation2 + $0x74] sm:$0x1]
    %v5037 = vld [vmem:[#allocation2 + $0x80] sm:$0x1]
    %v5038 = vld [vmem:[#allocation2 + $0x8c] sm:$0x1]
    %v5039 = vld [vmem:[#allocation2 + $0x98] sm:$0x1]
    %v5040 = vld [vmem:[#allocation2 + $0xa4] sm:$0x1]
    %v5041 = vld [vmem:[#allocation2 + $0xb0] sm:$0x1]
    %v5042 = vld [vmem:[#allocation2 + $0xbc] sm:$0x1]
    %v5044 = vshrl.u32 %v4978, 16
    %v5046 = vrot.slane %v5044, 4
    %v5047 = vshll.u32 %v4978, 16
    %v5049 = vrot.slane %v5047, 5
    %v5050 = vor.u32 %v5046, %v5049
    %v5051 = vrot.slane %v5050, 4
    %v5053 = vshll.u32 %v4979, 16
    %v5055 = vrot.slane %v5053, 5
    %v5056 = vsel %vm338, %v5051, %v5055
    %v5057 = vshrl.u32 %v4979, 16
    %v5059 = vrot.slane %v5057, 4
    %v5060 = vor.u32 %v5059, %v5055
    %v5061 = vrot.slane %v5060, 4
    %v5063 = vshll.u32 %v5027, 16
    %v5065 = vrot.slane %v5063, 5
    %v5066 = vsel %vm338, %v5061, %v5065
    %v5068 = vshrl.u32 %v4980, 16
    %v5070 = vrot.slane %v5068, 4
    %v5071 = vshll.u32 %v4980, 16
    %v5073 = vrot.slane %v5071, 5
    %v5074 = vor.u32 %v5070, %v5073
    %v5075 = vrot.slane %v5074, 4
    %v5077 = vshll.u32 %v4981, 16
    %v5079 = vrot.slane %v5077, 5
    %v5080 = vsel %vm338, %v5075, %v5079
    %v5081 = vshrl.u32 %v4981, 16
    %v5083 = vrot.slane %v5081, 4
    %v5084 = vor.u32 %v5083, %v5079
    %v5085 = vrot.slane %v5084, 4
    %v5087 = vshll.u32 %v5028, 16
    %v5089 = vrot.slane %v5087, 5
    %v5090 = vsel %vm338, %v5085, %v5089
    %v5092 = vshrl.u32 %v4982, 16
    %v5094 = vrot.slane %v5092, 4
    %v5095 = vshll.u32 %v4982, 16
    %v5097 = vrot.slane %v5095, 5
    %v5098 = vor.u32 %v5094, %v5097
    %v5099 = vrot.slane %v5098, 4
    %v5101 = vshll.u32 %v4983, 16
    %v5103 = vrot.slane %v5101, 5
    %v5104 = vsel %vm338, %v5099, %v5103
    %v5105 = vshrl.u32 %v4983, 16
    %v5107 = vrot.slane %v5105, 4
    %v5108 = vor.u32 %v5107, %v5103
    %v5109 = vrot.slane %v5108, 4
    %v5111 = vshll.u32 %v5029, 16
    %v5113 = vrot.slane %v5111, 5
    %v5114 = vsel %vm338, %v5109, %v5113
    %v5116 = vshrl.u32 %v4984, 16
    %v5118 = vrot.slane %v5116, 4
    %v5119 = vshll.u32 %v4984, 16
    %v5121 = vrot.slane %v5119, 5
    %v5122 = vor.u32 %v5118, %v5121
    %v5123 = vrot.slane %v5122, 4
    %v5125 = vshll.u32 %v4985, 16
    %v5127 = vrot.slane %v5125, 5
    %v5128 = vsel %vm338, %v5123, %v5127
    %v5129 = vshrl.u32 %v4985, 16
    %v5131 = vrot.slane %v5129, 4
    %v5132 = vor.u32 %v5131, %v5127
    %v5133 = vrot.slane %v5132, 4
    %v5135 = vshll.u32 %v5030, 16
    %v5137 = vrot.slane %v5135, 5
    %v5138 = vsel %vm338, %v5133, %v5137
    %v5140 = vshrl.u32 %v4986, 16
    %v5142 = vrot.slane %v5140, 4
    %v5143 = vshll.u32 %v4986, 16
    %v5145 = vrot.slane %v5143, 5
    %v5146 = vor.u32 %v5142, %v5145
    %v5147 = vrot.slane %v5146, 4
    %v5149 = vshll.u32 %v4987, 16
    %v5151 = vrot.slane %v5149, 5
    %v5152 = vsel %vm338, %v5147, %v5151
    %v5153 = vshrl.u32 %v4987, 16
    %v5155 = vrot.slane %v5153, 4
    %v5156 = vor.u32 %v5155, %v5151
    %v5157 = vrot.slane %v5156, 4
    %v5159 = vshll.u32 %v5031, 16
    %v5161 = vrot.slane %v5159, 5
    %v5162 = vsel %vm338, %v5157, %v5161
    %v5164 = vshrl.u32 %v4988, 16
    %v5166 = vrot.slane %v5164, 4
    %v5167 = vshll.u32 %v4988, 16
    %v5169 = vrot.slane %v5167, 5
    %v5170 = vor.u32 %v5166, %v5169
    %v5171 = vrot.slane %v5170, 4
    %v5173 = vshll.u32 %v4989, 16
    %v5175 = vrot.slane %v5173, 5
    %v5176 = vsel %vm338, %v5171, %v5175
    %v5177 = vshrl.u32 %v4989, 16
    %v5179 = vrot.slane %v5177, 4
    %v5180 = vor.u32 %v5179, %v5175
    %v5181 = vrot.slane %v5180, 4
    %v5183 = vshll.u32 %v5032, 16
    %v5185 = vrot.slane %v5183, 5
    %v5186 = vsel %vm338, %v5181, %v5185
    %v5188 = vshrl.u32 %v4990, 16
    %v5190 = vrot.slane %v5188, 4
    %v5191 = vshll.u32 %v4990, 16
    %v5193 = vrot.slane %v5191, 5
    %v5194 = vor.u32 %v5190, %v5193
    %v5195 = vrot.slane %v5194, 4
    %v5197 = vshll.u32 %v4991, 16
    %v5199 = vrot.slane %v5197, 5
    %v5200 = vsel %vm338, %v5195, %v5199
    %v5201 = vshrl.u32 %v4991, 16
    %v5203 = vrot.slane %v5201, 4
    %v5204 = vor.u32 %v5203, %v5199
    %v5205 = vrot.slane %v5204, 4
    %v5207 = vshll.u32 %v5033, 16
    %v5209 = vrot.slane %v5207, 5
    %v5210 = vsel %vm338, %v5205, %v5209
    %v5212 = vshrl.u32 %v4992, 16
    %v5214 = vrot.slane %v5212, 4
    %v5215 = vshll.u32 %v4992, 16
    %v5217 = vrot.slane %v5215, 5
    %v5218 = vor.u32 %v5214, %v5217
    %v5219 = vrot.slane %v5218, 4
    %v5221 = vshll.u32 %v4993, 16
    %v5223 = vrot.slane %v5221, 5
    %v5224 = vsel %vm338, %v5219, %v5223
    %v5225 = vshrl.u32 %v4993, 16
    %v5227 = vrot.slane %v5225, 4
    %v5228 = vor.u32 %v5227, %v5223
    %v5229 = vrot.slane %v5228, 4
    %v5231 = vshll.u32 %v5034, 16
    %v5233 = vrot.slane %v5231, 5
    %v5234 = vsel %vm338, %v5229, %v5233
    %v5236 = vshrl.u32 %v4994, 16
    %v5238 = vrot.slane %v5236, 4
    %v5239 = vshll.u32 %v4994, 16
    %v5241 = vrot.slane %v5239, 5
    %v5242 = vor.u32 %v5238, %v5241
    %v5243 = vrot.slane %v5242, 4
    %v5245 = vshll.u32 %v4995, 16
    %v5247 = vrot.slane %v5245, 5
    %v5248 = vsel %vm338, %v5243, %v5247
    %v5249 = vshrl.u32 %v4995, 16
    %v5251 = vrot.slane %v5249, 4
    %v5252 = vor.u32 %v5251, %v5247
    %v5253 = vrot.slane %v5252, 4
    %v5255 = vshll.u32 %v5035, 16
    %v5257 = vrot.slane %v5255, 5
    %v5258 = vsel %vm338, %v5253, %v5257
    %v5260 = vshrl.u32 %v4996, 16
    %v5262 = vrot.slane %v5260, 4
    %v5263 = vshll.u32 %v4996, 16
    %v5265 = vrot.slane %v5263, 5
    %v5266 = vor.u32 %v5262, %v5265
    %v5267 = vrot.slane %v5266, 4
    %v5269 = vshll.u32 %v4997, 16
    %v5271 = vrot.slane %v5269, 5
    %v5272 = vsel %vm338, %v5267, %v5271
    %v5273 = vshrl.u32 %v4997, 16
    %v5275 = vrot.slane %v5273, 4
    %v5276 = vor.u32 %v5275, %v5271
    %v5277 = vrot.slane %v5276, 4
    %v5279 = vshll.u32 %v5036, 16
    %v5281 = vrot.slane %v5279, 5
    %v5282 = vsel %vm338, %v5277, %v5281
    %v5284 = vshrl.u32 %v4998, 16
    %v5286 = vrot.slane %v5284, 4
    %v5287 = vshll.u32 %v4998, 16
    %v5289 = vrot.slane %v5287, 5
    %v5290 = vor.u32 %v5286, %v5289
    %v5291 = vrot.slane %v5290, 4
    %v5293 = vshll.u32 %v4999, 16
    %v5295 = vrot.slane %v5293, 5
    %v5296 = vsel %vm338, %v5291, %v5295
    %v5297 = vshrl.u32 %v4999, 16
    %v5299 = vrot.slane %v5297, 4
    %v5300 = vor.u32 %v5299, %v5295
    %v5301 = vrot.slane %v5300, 4
    %v5303 = vshll.u32 %v5037, 16
    %v5305 = vrot.slane %v5303, 5
    %v5306 = vsel %vm338, %v5301, %v5305
    %v5308 = vshrl.u32 %v5000, 16
    %v5310 = vrot.slane %v5308, 4
    %v5311 = vshll.u32 %v5000, 16
    %v5313 = vrot.slane %v5311, 5
    %v5314 = vor.u32 %v5310, %v5313
    %v5315 = vrot.slane %v5314, 4
    %v5317 = vshll.u32 %v5001, 16
    %v5319 = vrot.slane %v5317, 5
    %v5320 = vsel %vm338, %v5315, %v5319
    %v5321 = vshrl.u32 %v5001, 16
    %v5323 = vrot.slane %v5321, 4
    %v5324 = vor.u32 %v5323, %v5319
    %v5325 = vrot.slane %v5324, 4
    %v5327 = vshll.u32 %v5038, 16
    %v5329 = vrot.slane %v5327, 5
    %v5330 = vsel %vm338, %v5325, %v5329
    %v5332 = vshrl.u32 %v5002, 16
    %v5334 = vrot.slane %v5332, 4
    %v5335 = vshll.u32 %v5002, 16
    %v5337 = vrot.slane %v5335, 5
    %v5338 = vor.u32 %v5334, %v5337
    %v5339 = vrot.slane %v5338, 4
    %v5341 = vshll.u32 %v5003, 16
    %v5343 = vrot.slane %v5341, 5
    %v5344 = vsel %vm338, %v5339, %v5343
    %v5345 = vshrl.u32 %v5003, 16
    %v5347 = vrot.slane %v5345, 4
    %v5348 = vor.u32 %v5347, %v5343
    %v5349 = vrot.slane %v5348, 4
    %v5351 = vshll.u32 %v5039, 16
    %v5353 = vrot.slane %v5351, 5
    %v5354 = vsel %vm338, %v5349, %v5353
    %v5356 = vshrl.u32 %v5004, 16
    %v5358 = vrot.slane %v5356, 4
    %v5359 = vshll.u32 %v5004, 16
    %v5361 = vrot.slane %v5359, 5
    %v5362 = vor.u32 %v5358, %v5361
    %v5363 = vrot.slane %v5362, 4
    %v5365 = vshll.u32 %v5005, 16
    %v5367 = vrot.slane %v5365, 5
    %v5368 = vsel %vm338, %v5363, %v5367
    %v5369 = vshrl.u32 %v5005, 16
    %v5371 = vrot.slane %v5369, 4
    %v5372 = vor.u32 %v5371, %v5367
    %v5373 = vrot.slane %v5372, 4
    %v5375 = vshll.u32 %v5040, 16
    %v5377 = vrot.slane %v5375, 5
    %v5378 = vsel %vm338, %v5373, %v5377
    %v5380 = vshrl.u32 %v5006, 16
    %v5382 = vrot.slane %v5380, 4
    %v5383 = vshll.u32 %v5006, 16
    %v5385 = vrot.slane %v5383, 5
    %v5386 = vor.u32 %v5382, %v5385
    %v5387 = vrot.slane %v5386, 4
    %v5389 = vshll.u32 %v5007, 16
    %v5391 = vrot.slane %v5389, 5
    %v5392 = vsel %vm338, %v5387, %v5391
    %v5393 = vshrl.u32 %v5007, 16
    %v5395 = vrot.slane %v5393, 4
    %v5396 = vor.u32 %v5395, %v5391
    %v5397 = vrot.slane %v5396, 4
    %v5399 = vshll.u32 %v5041, 16
    %v5401 = vrot.slane %v5399, 5
    %v5402 = vsel %vm338, %v5397, %v5401
    %v5404 = vshrl.u32 %v5008, 16
    %v5406 = vrot.slane %v5404, 4
    %v5407 = vshll.u32 %v5008, 16
    %v5409 = vrot.slane %v5407, 5
    %v5410 = vor.u32 %v5406, %v5409
    %v5411 = vrot.slane %v5410, 4
    %v5413 = vshll.u32 %v5009, 16
    %v5415 = vrot.slane %v5413, 5
    %v5416 = vsel %vm338, %v5411, %v5415
    %v5417 = vshrl.u32 %v5009, 16
    %v5419 = vrot.slane %v5417, 4
    %v5420 = vor.u32 %v5419, %v5415
    %v5421 = vrot.slane %v5420, 4
    %v5423 = vshll.u32 %v5042, 16
    %v5425 = vrot.slane %v5423, 5
    %v5426 = vsel %vm338, %v5421, %v5425
    %s5427 = scalar_lea.vmem [#allocation7], 640
    %v5428 = vld [vmem:[%s5427] sm:$0xf]
    %v5429 = vld [vmem:[%s5427 + $0x4] sm:$0xf]
    %v5430 = vld [vmem:[%s5427 + $0x8] sm:$0xf]
    %v5431 = vld [vmem:[%s5427 + $0xc] sm:$0xf]
    %v5432 = vld [vmem:[%s5427 + $0x10] sm:$0xf]
    %v5433 = vld [vmem:[%s5427 + $0x14] sm:$0xf]
    %v5434 = vld [vmem:[%s5427 + $0x18] sm:$0xf]
    %v5435 = vld [vmem:[%s5427 + $0x1c] sm:$0xf]
    %v5436 = vld [vmem:[%s5427 + $0x20] sm:$0xf]
    %v5437 = vld [vmem:[%s5427 + $0x24] sm:$0xf]
    %v5438 = vld [vmem:[%s5427 + $0x28] sm:$0xf]
    %v5439 = vld [vmem:[%s5427 + $0x2c] sm:$0xf]
    %v5440 = vld [vmem:[%s5427 + $0x30] sm:$0xf]
    %v5441 = vld [vmem:[%s5427 + $0x34] sm:$0xf]
    %v5442 = vld [vmem:[%s5427 + $0x38] sm:$0xf]
    %v5443 = vld [vmem:[%s5427 + $0x3c] sm:$0xf]
    %v5444 = vunpack.c.l.b16 %v5056
    %v5445 = vunpack.c.l.b16 %v5066
    %v5446 = vunpack.c.l.b16 %v5080
    %v5447 = vunpack.c.l.b16 %v5090
    %v5448 = vunpack.c.l.b16 %v5104
    %v5449 = vunpack.c.l.b16 %v5114
    %v5450 = vunpack.c.l.b16 %v5128
    %v5451 = vunpack.c.l.b16 %v5138
    %v5452 = vunpack.c.l.b16 %v5152
    %v5453 = vunpack.c.l.b16 %v5162
    %v5454 = vunpack.c.l.b16 %v5176
    %v5455 = vunpack.c.l.b16 %v5186
    %v5456 = vunpack.c.l.b16 %v5200
    %v5457 = vunpack.c.l.b16 %v5210
    %v5458 = vunpack.c.l.b16 %v5224
    %v5459 = vunpack.c.l.b16 %v5234
    %v5460 = vunpack.c.l.b16 %v5248
    %v5461 = vunpack.c.l.b16 %v5258
    %v5462 = vunpack.c.l.b16 %v5272
    %v5463 = vunpack.c.l.b16 %v5282
    %v5464 = vunpack.c.l.b16 %v5296
    %v5465 = vunpack.c.l.b16 %v5306
    %v5466 = vunpack.c.l.b16 %v5320
    %v5467 = vunpack.c.l.b16 %v5330
    %v5468 = vunpack.c.l.b16 %v5344
    %v5469 = vunpack.c.l.b16 %v5354
    %v5470 = vunpack.c.l.b16 %v5368
    %v5471 = vunpack.c.l.b16 %v5378
    %v5472 = vunpack.c.l.b16 %v5392
    %v5473 = vunpack.c.l.b16 %v5402
    %v5474 = vunpack.c.l.b16 %v5416
    %v5475 = vunpack.c.l.b16 %v5426
    %v5476 = vpack.c.b16 %v5445, %v5444
    %v5477 = vpack.c.b16 %v5447, %v5446
    %v5478 = vpack.c.b16 %v5449, %v5448
    %v5479 = vpack.c.b16 %v5451, %v5450
    %v5480 = vpack.c.b16 %v5453, %v5452
    %v5481 = vpack.c.b16 %v5455, %v5454
    %v5482 = vpack.c.b16 %v5457, %v5456
    %v5483 = vpack.c.b16 %v5459, %v5458
    %v5484 = vpack.c.b16 %v5461, %v5460
    %v5485 = vpack.c.b16 %v5463, %v5462
    %v5486 = vpack.c.b16 %v5465, %v5464
    %v5487 = vpack.c.b16 %v5467, %v5466
    %v5488 = vpack.c.b16 %v5469, %v5468
    %v5489 = vpack.c.b16 %v5471, %v5470
    %v5490 = vpack.c.b16 %v5473, %v5472
    %v5491 = vpack.c.b16 %v5475, %v5474
    %v5524 = vunpack.c.l.b16 %v5428
    %v5525 = vunpack.c.l.b16 %v5429
    %v5526 = vunpack.c.l.b16 %v5430
    %v5527 = vunpack.c.l.b16 %v5431
    %v5528 = vunpack.c.l.b16 %v5432
    %v5529 = vunpack.c.l.b16 %v5433
    %v5530 = vunpack.c.l.b16 %v5434
    %v5531 = vunpack.c.l.b16 %v5435
    %v5532 = vunpack.c.l.b16 %v5436
    %v5533 = vunpack.c.l.b16 %v5437
    %v5534 = vunpack.c.l.b16 %v5438
    %v5535 = vunpack.c.l.b16 %v5439
    %v5536 = vunpack.c.l.b16 %v5440
    %v5537 = vunpack.c.l.b16 %v5441
    %v5538 = vunpack.c.l.b16 %v5442
    %v5539 = vunpack.c.l.b16 %v5443
    %v5540 = vpack.c.b16 %v5525, %v5524
    %v5541 = vpack.c.b16 %v5527, %v5526
    %v5542 = vpack.c.b16 %v5529, %v5528
    %v5543 = vpack.c.b16 %v5531, %v5530
    %v5544 = vpack.c.b16 %v5533, %v5532
    %v5545 = vpack.c.b16 %v5535, %v5534
    %v5546 = vpack.c.b16 %v5537, %v5536
    %v5547 = vpack.c.b16 %v5539, %v5538
    %5556 = vmatpush.bf16.msra.mxu0 %v5547
    %5557 = vmatpush.bf16.msra.mxu0 %v5546
    %5558 = vmatpush.bf16.msra.mxu0 %v5545
    %5559 = vmatpush.bf16.msra.mxu0 %v5544
    %5560 = vmatpush.bf16.msra.mxu0 %v5543
    %5561 = vmatpush.bf16.msra.mxu0 %v5542
    %5562 = vmatpush.bf16.msra.mxu0 %v5541
    %5563 = vmatpush.bf16.msra.mxu0 %v5540
    %5564 = vmatmul.bf16.gmra.mxu0 %v5476
    %v5565 = vpop.f32.mrf.mxu0
    %v5566 = vadd.f32 0.0, %v5565
    %v5567 = vpop.f32.mrf.mxu0
    %5568 = vmatmul.bf16.gmra.mxu0 %v5477
    %v5569 = vpop.f32.mrf.mxu0
    %v5570 = vadd.f32 0.0, %v5569
    %v5571 = vpop.f32.mrf.mxu0
    %5572 = vmatmul.bf16.gmra.mxu0 %v5478
    %v5573 = vpop.f32.mrf.mxu0
    %v5574 = vadd.f32 0.0, %v5573
    %v5575 = vpop.f32.mrf.mxu0
    %5576 = vmatmul.bf16.gmra.mxu0 %v5479
    %v5577 = vpop.f32.mrf.mxu0
    %v5578 = vadd.f32 0.0, %v5577
    %v5579 = vpop.f32.mrf.mxu0
    %5580 = vmatmul.bf16.gmra.mxu0 %v5480
    %v5581 = vpop.f32.mrf.mxu0
    %v5582 = vadd.f32 0.0, %v5581
    %v5583 = vpop.f32.mrf.mxu0
    %5584 = vmatmul.bf16.gmra.mxu0 %v5481
    %v5585 = vpop.f32.mrf.mxu0
    %v5586 = vadd.f32 0.0, %v5585
    %v5587 = vpop.f32.mrf.mxu0
    %5588 = vmatmul.bf16.gmra.mxu0 %v5482
    %v5589 = vpop.f32.mrf.mxu0
    %v5590 = vadd.f32 0.0, %v5589
    %v5591 = vpop.f32.mrf.mxu0
    %5592 = vmatmul.bf16.gmra.mxu0 %v5483
    %v5593 = vpop.f32.mrf.mxu0
    %v5594 = vadd.f32 0.0, %v5593
    %v5595 = vpop.f32.mrf.mxu0
    %5596 = vmatmul.bf16.gmra.mxu0 %v5484
    %v5597 = vpop.f32.mrf.mxu0
    %v5598 = vadd.f32 0.0, %v5597
    %v5599 = vpop.f32.mrf.mxu0
    %5600 = vmatmul.bf16.gmra.mxu0 %v5485
    %v5601 = vpop.f32.mrf.mxu0
    %v5602 = vadd.f32 0.0, %v5601
    %v5603 = vpop.f32.mrf.mxu0
    %5604 = vmatmul.bf16.gmra.mxu0 %v5486
    %v5605 = vpop.f32.mrf.mxu0
    %v5606 = vadd.f32 0.0, %v5605
    %v5607 = vpop.f32.mrf.mxu0
    %5608 = vmatmul.bf16.gmra.mxu0 %v5487
    %v5609 = vpop.f32.mrf.mxu0
    %v5610 = vadd.f32 0.0, %v5609
    %v5611 = vpop.f32.mrf.mxu0
    %5612 = vmatmul.bf16.gmra.mxu0 %v5488
    %v5613 = vpop.f32.mrf.mxu0
    %v5614 = vadd.f32 0.0, %v5613
    %v5615 = vpop.f32.mrf.mxu0
    %5616 = vmatmul.bf16.gmra.mxu0 %v5489
    %v5617 = vpop.f32.mrf.mxu0
    %v5618 = vadd.f32 0.0, %v5617
    %v5619 = vpop.f32.mrf.mxu0
    %5620 = vmatmul.bf16.gmra.mxu0 %v5490
    %v5621 = vpop.f32.mrf.mxu0
    %v5622 = vadd.f32 0.0, %v5621
    %v5623 = vpop.f32.mrf.mxu0
    %5624 = vmatmul.bf16.gmra.mxu0 %v5491
    %v5625 = vpop.f32.mrf.mxu0
    %v5626 = vadd.f32 0.0, %v5625
    %v5627 = vpop.f32.mrf.mxu0
    %5628 = vdwg.mxu0
    %v5661 = vunpack.c.l.b16 %v4978
    %v5662 = vunpack.c.l.b16 %v4979
    %v5663 = vunpack.c.l.b16 %v4980
    %v5664 = vunpack.c.l.b16 %v4981
    %v5665 = vunpack.c.l.b16 %v4982
    %v5666 = vunpack.c.l.b16 %v4983
    %v5667 = vunpack.c.l.b16 %v4984
    %v5668 = vunpack.c.l.b16 %v4985
    %v5669 = vunpack.c.l.b16 %v4986
    %v5670 = vunpack.c.l.b16 %v4987
    %v5671 = vunpack.c.l.b16 %v4988
    %v5672 = vunpack.c.l.b16 %v4989
    %v5673 = vunpack.c.l.b16 %v4990
    %v5674 = vunpack.c.l.b16 %v4991
    %v5675 = vunpack.c.l.b16 %v4992
    %v5676 = vunpack.c.l.b16 %v4993
    %v5677 = vunpack.c.l.b16 %v4994
    %v5678 = vunpack.c.l.b16 %v4995
    %v5679 = vunpack.c.l.b16 %v4996
    %v5680 = vunpack.c.l.b16 %v4997
    %v5681 = vunpack.c.l.b16 %v4998
    %v5682 = vunpack.c.l.b16 %v4999
    %v5683 = vunpack.c.l.b16 %v5000
    %v5684 = vunpack.c.l.b16 %v5001
    %v5685 = vunpack.c.l.b16 %v5002
    %v5686 = vunpack.c.l.b16 %v5003
    %v5687 = vunpack.c.l.b16 %v5004
    %v5688 = vunpack.c.l.b16 %v5005
    %v5689 = vunpack.c.l.b16 %v5006
    %v5690 = vunpack.c.l.b16 %v5007
    %v5691 = vunpack.c.l.b16 %v5008
    %v5692 = vunpack.c.l.b16 %v5009
    %v5693 = vpack.c.b16 %v5662, %v5661
    %v5694 = vpack.c.b16 %v5664, %v5663
    %v5695 = vpack.c.b16 %v5666, %v5665
    %v5696 = vpack.c.b16 %v5668, %v5667
    %v5697 = vpack.c.b16 %v5670, %v5669
    %v5698 = vpack.c.b16 %v5672, %v5671
    %v5699 = vpack.c.b16 %v5674, %v5673
    %v5700 = vpack.c.b16 %v5676, %v5675
    %v5701 = vpack.c.b16 %v5678, %v5677
    %v5702 = vpack.c.b16 %v5680, %v5679
    %v5703 = vpack.c.b16 %v5682, %v5681
    %v5704 = vpack.c.b16 %v5684, %v5683
    %v5705 = vpack.c.b16 %v5686, %v5685
    %v5706 = vpack.c.b16 %v5688, %v5687
    %v5707 = vpack.c.b16 %v5690, %v5689
    %v5708 = vpack.c.b16 %v5692, %v5691
    %v5741 = vunpack.c.l.b16 %v5011
    %v5742 = vunpack.c.l.b16 %v5012
    %v5743 = vunpack.c.l.b16 %v5013
    %v5744 = vunpack.c.l.b16 %v5014
    %v5745 = vunpack.c.l.b16 %v5015
    %v5746 = vunpack.c.l.b16 %v5016
    %v5747 = vunpack.c.l.b16 %v5017
    %v5748 = vunpack.c.l.b16 %v5018
    %v5749 = vunpack.c.l.b16 %v5019
    %v5750 = vunpack.c.l.b16 %v5020
    %v5751 = vunpack.c.l.b16 %v5021
    %v5752 = vunpack.c.l.b16 %v5022
    %v5753 = vunpack.c.l.b16 %v5023
    %v5754 = vunpack.c.l.b16 %v5024
    %v5755 = vunpack.c.l.b16 %v5025
    %v5756 = vunpack.c.l.b16 %v5026
    %v5757 = vpack.c.b16 %v5742, %v5741
    %v5758 = vpack.c.b16 %v5744, %v5743
    %v5759 = vpack.c.b16 %v5746, %v5745
    %v5760 = vpack.c.b16 %v5748, %v5747
    %v5761 = vpack.c.b16 %v5750, %v5749
    %v5762 = vpack.c.b16 %v5752, %v5751
    %v5763 = vpack.c.b16 %v5754, %v5753
    %v5764 = vpack.c.b16 %v5756, %v5755
    %5773 = vmatpush.bf16.msra.mxu0 %v5764
    %5774 = vmatpush.bf16.msra.mxu0 %v5763
    %5775 = vmatpush.bf16.msra.mxu0 %v5762
    %5776 = vmatpush.bf16.msra.mxu0 %v5761
    %5777 = vmatpush.bf16.msra.mxu0 %v5760
    %5778 = vmatpush.bf16.msra.mxu0 %v5759
    %5779 = vmatpush.bf16.msra.mxu0 %v5758
    %5780 = vmatpush.bf16.msra.mxu0 %v5757
    %5781 = vmatmul.bf16.gmra.mxu0 %v5693
    %v5782 = vpop.f32.mrf.mxu0
    %v5783 = vadd.f32 %v5566, %v5782
    %v5784 = vpop.f32.mrf.mxu0
    %5785 = vmatmul.bf16.gmra.mxu0 %v5694
    %v5786 = vpop.f32.mrf.mxu0
    %v5787 = vadd.f32 %v5570, %v5786
    %v5788 = vpop.f32.mrf.mxu0
    %5789 = vmatmul.bf16.gmra.mxu0 %v5695
    %v5790 = vpop.f32.mrf.mxu0
    %v5791 = vadd.f32 %v5574, %v5790
    %v5792 = vpop.f32.mrf.mxu0
    %5793 = vmatmul.bf16.gmra.mxu0 %v5696
    %v5794 = vpop.f32.mrf.mxu0
    %v5795 = vadd.f32 %v5578, %v5794
    %v5796 = vpop.f32.mrf.mxu0
    %5797 = vmatmul.bf16.gmra.mxu0 %v5697
    %v5798 = vpop.f32.mrf.mxu0
    %v5799 = vadd.f32 %v5582, %v5798
    %v5800 = vpop.f32.mrf.mxu0
    %5801 = vmatmul.bf16.gmra.mxu0 %v5698
    %v5802 = vpop.f32.mrf.mxu0
    %v5803 = vadd.f32 %v5586, %v5802
    %v5804 = vpop.f32.mrf.mxu0
    %5805 = vmatmul.bf16.gmra.mxu0 %v5699
    %v5806 = vpop.f32.mrf.mxu0
    %v5807 = vadd.f32 %v5590, %v5806
    %v5808 = vpop.f32.mrf.mxu0
    %5809 = vmatmul.bf16.gmra.mxu0 %v5700
    %v5810 = vpop.f32.mrf.mxu0
    %v5811 = vadd.f32 %v5594, %v5810
    %v5812 = vpop.f32.mrf.mxu0
    %5813 = vmatmul.bf16.gmra.mxu0 %v5701
    %v5814 = vpop.f32.mrf.mxu0
    %v5815 = vadd.f32 %v5598, %v5814
    %v5816 = vpop.f32.mrf.mxu0
    %5817 = vmatmul.bf16.gmra.mxu0 %v5702
    %v5818 = vpop.f32.mrf.mxu0
    %v5819 = vadd.f32 %v5602, %v5818
    %v5820 = vpop.f32.mrf.mxu0
    %5821 = vmatmul.bf16.gmra.mxu0 %v5703
    %v5822 = vpop.f32.mrf.mxu0
    %v5823 = vadd.f32 %v5606, %v5822
    %v5824 = vpop.f32.mrf.mxu0
    %5825 = vmatmul.bf16.gmra.mxu0 %v5704
    %v5826 = vpop.f32.mrf.mxu0
    %v5827 = vadd.f32 %v5610, %v5826
    %v5828 = vpop.f32.mrf.mxu0
    %5829 = vmatmul.bf16.gmra.mxu0 %v5705
    %v5830 = vpop.f32.mrf.mxu0
    %v5831 = vadd.f32 %v5614, %v5830
    %v5832 = vpop.f32.mrf.mxu0
    %5833 = vmatmul.bf16.gmra.mxu0 %v5706
    %v5834 = vpop.f32.mrf.mxu0
    %v5835 = vadd.f32 %v5618, %v5834
    %v5836 = vpop.f32.mrf.mxu0
    %5837 = vmatmul.bf16.gmra.mxu0 %v5707
    %v5838 = vpop.f32.mrf.mxu0
    %v5839 = vadd.f32 %v5622, %v5838
    %v5840 = vpop.f32.mrf.mxu0
    %5841 = vmatmul.bf16.gmra.mxu0 %v5708
    %v5842 = vpop.f32.mrf.mxu0
    %v5843 = vadd.f32 %v5626, %v5842
    %v5844 = vpop.f32.mrf.mxu0
    %5845 = vdwg.mxu0
    %v5846 = vld [vmem:[#allocation2] sm:$0xe]
    %v5847 = vld [vmem:[#allocation2 + $0xc] sm:$0xe]
    %v5848 = vld [vmem:[#allocation2 + $0x18] sm:$0xe]
    %v5849 = vld [vmem:[#allocation2 + $0x24] sm:$0xe]
    %v5850 = vld [vmem:[#allocation2 + $0x30] sm:$0xe]
    %v5851 = vld [vmem:[#allocation2 + $0x3c] sm:$0xe]
    %v5852 = vld [vmem:[#allocation2 + $0x48] sm:$0xe]
    %v5853 = vld [vmem:[#allocation2 + $0x54] sm:$0xe]
    %v5854 = vld [vmem:[#allocation2 + $0x60] sm:$0xe]
    %v5855 = vld [vmem:[#allocation2 + $0x6c] sm:$0xe]
    %v5856 = vld [vmem:[#allocation2 + $0x78] sm:$0xe]
    %v5857 = vld [vmem:[#allocation2 + $0x84] sm:$0xe]
    %v5858 = vld [vmem:[#allocation2 + $0x90] sm:$0xe]
    %v5859 = vld [vmem:[#allocation2 + $0x9c] sm:$0xe]
    %v5860 = vld [vmem:[#allocation2 + $0xa8] sm:$0xe]
    %v5861 = vld [vmem:[#allocation2 + $0xb4] sm:$0xe]
    %v5894 = vrot.slane %v5846, 5
    %v5895 = vrot.slane %v5894, 4
    %v5896 = vrot.slane %v4979, 5
    %v5897 = vsel %vm1224, %v5895, %v5896
    %v5898 = vrot.slane %v5896, 4
    %v5899 = vrot.slane %v5027, 5
    %v5900 = vsel %vm1224, %v5898, %v5899
    %v5901 = vrot.slane %v5847, 5
    %v5902 = vrot.slane %v5901, 4
    %v5903 = vrot.slane %v4981, 5
    %v5904 = vsel %vm1224, %v5902, %v5903
    %v5905 = vrot.slane %v5903, 4
    %v5906 = vrot.slane %v5028, 5
    %v5907 = vsel %vm1224, %v5905, %v5906
    %v5908 = vrot.slane %v5848, 5
    %v5909 = vrot.slane %v5908, 4
    %v5910 = vrot.slane %v4983, 5
    %v5911 = vsel %vm1224, %v5909, %v5910
    %v5912 = vrot.slane %v5910, 4
    %v5913 = vrot.slane %v5029, 5
    %v5914 = vsel %vm1224, %v5912, %v5913
    %v5915 = vrot.slane %v5849, 5
    %v5916 = vrot.slane %v5915, 4
    %v5917 = vrot.slane %v4985, 5
    %v5918 = vsel %vm1224, %v5916, %v5917
    %v5919 = vrot.slane %v5917, 4
    %v5920 = vrot.slane %v5030, 5
    %v5921 = vsel %vm1224, %v5919, %v5920
    %v5922 = vrot.slane %v5850, 5
    %v5923 = vrot.slane %v5922, 4
    %v5924 = vrot.slane %v4987, 5
    %v5925 = vsel %vm1224, %v5923, %v5924
    %v5926 = vrot.slane %v5924, 4
    %v5927 = vrot.slane %v5031, 5
    %v5928 = vsel %vm1224, %v5926, %v5927
    %v5929 = vrot.slane %v5851, 5
    %v5930 = vrot.slane %v5929, 4
    %v5931 = vrot.slane %v4989, 5
    %v5932 = vsel %vm1224, %v5930, %v5931
    %v5933 = vrot.slane %v5931, 4
    %v5934 = vrot.slane %v5032, 5
    %v5935 = vsel %vm1224, %v5933, %v5934
    %v5936 = vrot.slane %v5852, 5
    %v5937 = vrot.slane %v5936, 4
    %v5938 = vrot.slane %v4991, 5
    %v5939 = vsel %vm1224, %v5937, %v5938
    %v5940 = vrot.slane %v5938, 4
    %v5941 = vrot.slane %v5033, 5
    %v5942 = vsel %vm1224, %v5940, %v5941
    %v5943 = vrot.slane %v5853, 5
    %v5944 = vrot.slane %v5943, 4
    %v5945 = vrot.slane %v4993, 5
    %v5946 = vsel %vm1224, %v5944, %v5945
    %v5947 = vrot.slane %v5945, 4
    %v5948 = vrot.slane %v5034, 5
    %v5949 = vsel %vm1224, %v5947, %v5948
    %v5950 = vrot.slane %v5854, 5
    %v5951 = vrot.slane %v5950, 4
    %v5952 = vrot.slane %v4995, 5
    %v5953 = vsel %vm1224, %v5951, %v5952
    %v5954 = vrot.slane %v5952, 4
    %v5955 = vrot.slane %v5035, 5
    %v5956 = vsel %vm1224, %v5954, %v5955
    %v5957 = vrot.slane %v5855, 5
    %v5958 = vrot.slane %v5957, 4
    %v5959 = vrot.slane %v4997, 5
    %v5960 = vsel %vm1224, %v5958, %v5959
    %v5961 = vrot.slane %v5959, 4
    %v5962 = vrot.slane %v5036, 5
    %v5963 = vsel %vm1224, %v5961, %v5962
    %v5964 = vrot.slane %v5856, 5
    %v5965 = vrot.slane %v5964, 4
    %v5966 = vrot.slane %v4999, 5
    %v5967 = vsel %vm1224, %v5965, %v5966
    %v5968 = vrot.slane %v5966, 4
    %v5969 = vrot.slane %v5037, 5
    %v5970 = vsel %vm1224, %v5968, %v5969
    %v5971 = vrot.slane %v5857, 5
    %v5972 = vrot.slane %v5971, 4
    %v5973 = vrot.slane %v5001, 5
    %v5974 = vsel %vm1224, %v5972, %v5973
    %v5975 = vrot.slane %v5973, 4
    %v5976 = vrot.slane %v5038, 5
    %v5977 = vsel %vm1224, %v5975, %v5976
    %v5978 = vrot.slane %v5858, 5
    %v5979 = vrot.slane %v5978, 4
    %v5980 = vrot.slane %v5003, 5
    %v5981 = vsel %vm1224, %v5979, %v5980
    %v5982 = vrot.slane %v5980, 4
    %v5983 = vrot.slane %v5039, 5
    %v5984 = vsel %vm1224, %v5982, %v5983
    %v5985 = vrot.slane %v5859, 5
    %v5986 = vrot.slane %v5985, 4
    %v5987 = vrot.slane %v5005, 5
    %v5988 = vsel %vm1224, %v5986, %v5987
    %v5989 = vrot.slane %v5987, 4
    %v5990 = vrot.slane %v5040, 5
    %v5991 = vsel %vm1224, %v5989, %v5990
    %v5992 = vrot.slane %v5860, 5
    %v5993 = vrot.slane %v5992, 4
    %v5994 = vrot.slane %v5007, 5
    %v5995 = vsel %vm1224, %v5993, %v5994
    %v5996 = vrot.slane %v5994, 4
    %v5997 = vrot.slane %v5041, 5
    %v5998 = vsel %vm1224, %v5996, %v5997
    %v5999 = vrot.slane %v5861, 5
    %v6000 = vrot.slane %v5999, 4
    %v6001 = vrot.slane %v5009, 5
    %v6002 = vsel %vm1224, %v6000, %v6001
    %v6003 = vrot.slane %v6001, 4
    %v6004 = vrot.slane %v5042, 5
    %v6005 = vsel %vm1224, %v6003, %v6004
    %s6006 = scalar_lea.vmem [#allocation7], 704
    %v6007 = vld [vmem:[%s6006] sm:$0xf]
    %v6008 = vld [vmem:[%s6006 + $0x4] sm:$0xf]
    %v6009 = vld [vmem:[%s6006 + $0x8] sm:$0xf]
    %v6010 = vld [vmem:[%s6006 + $0xc] sm:$0xf]
    %v6011 = vld [vmem:[%s6006 + $0x10] sm:$0xf]
    %v6012 = vld [vmem:[%s6006 + $0x14] sm:$0xf]
    %v6013 = vld [vmem:[%s6006 + $0x18] sm:$0xf]
    %v6014 = vld [vmem:[%s6006 + $0x1c] sm:$0xf]
    %v6015 = vld [vmem:[%s6006 + $0x20] sm:$0xf]
    %v6016 = vld [vmem:[%s6006 + $0x24] sm:$0xf]
    %v6017 = vld [vmem:[%s6006 + $0x28] sm:$0xf]
    %v6018 = vld [vmem:[%s6006 + $0x2c] sm:$0xf]
    %v6019 = vld [vmem:[%s6006 + $0x30] sm:$0xf]
    %v6020 = vld [vmem:[%s6006 + $0x34] sm:$0xf]
    %v6021 = vld [vmem:[%s6006 + $0x38] sm:$0xf]
    %v6022 = vld [vmem:[%s6006 + $0x3c] sm:$0xf]
    %v6023 = vunpack.c.l.b16 %v5897
    %v6024 = vunpack.c.l.b16 %v5900
    %v6025 = vunpack.c.l.b16 %v5904
    %v6026 = vunpack.c.l.b16 %v5907
    %v6027 = vunpack.c.l.b16 %v5911
    %v6028 = vunpack.c.l.b16 %v5914
    %v6029 = vunpack.c.l.b16 %v5918
    %v6030 = vunpack.c.l.b16 %v5921
    %v6031 = vunpack.c.l.b16 %v5925
    %v6032 = vunpack.c.l.b16 %v5928
    %v6033 = vunpack.c.l.b16 %v5932
    %v6034 = vunpack.c.l.b16 %v5935
    %v6035 = vunpack.c.l.b16 %v5939
    %v6036 = vunpack.c.l.b16 %v5942
    %v6037 = vunpack.c.l.b16 %v5946
    %v6038 = vunpack.c.l.b16 %v5949
    %v6039 = vunpack.c.l.b16 %v5953
    %v6040 = vunpack.c.l.b16 %v5956
    %v6041 = vunpack.c.l.b16 %v5960
    %v6042 = vunpack.c.l.b16 %v5963
    %v6043 = vunpack.c.l.b16 %v5967
    %v6044 = vunpack.c.l.b16 %v5970
    %v6045 = vunpack.c.l.b16 %v5974
    %v6046 = vunpack.c.l.b16 %v5977
    %v6047 = vunpack.c.l.b16 %v5981
    %v6048 = vunpack.c.l.b16 %v5984
    %v6049 = vunpack.c.l.b16 %v5988
    %v6050 = vunpack.c.l.b16 %v5991
    %v6051 = vunpack.c.l.b16 %v5995
    %v6052 = vunpack.c.l.b16 %v5998
    %v6053 = vunpack.c.l.b16 %v6002
    %v6054 = vunpack.c.l.b16 %v6005
    %v6055 = vpack.c.b16 %v6024, %v6023
    %v6056 = vpack.c.b16 %v6026, %v6025
    %v6057 = vpack.c.b16 %v6028, %v6027
    %v6058 = vpack.c.b16 %v6030, %v6029
    %v6059 = vpack.c.b16 %v6032, %v6031
    %v6060 = vpack.c.b16 %v6034, %v6033
    %v6061 = vpack.c.b16 %v6036, %v6035
    %v6062 = vpack.c.b16 %v6038, %v6037
    %v6063 = vpack.c.b16 %v6040, %v6039
    %v6064 = vpack.c.b16 %v6042, %v6041
    %v6065 = vpack.c.b16 %v6044, %v6043
    %v6066 = vpack.c.b16 %v6046, %v6045
    %v6067 = vpack.c.b16 %v6048, %v6047
    %v6068 = vpack.c.b16 %v6050, %v6049
    %v6069 = vpack.c.b16 %v6052, %v6051
    %v6070 = vpack.c.b16 %v6054, %v6053
    %v6103 = vunpack.c.l.b16 %v6007
    %v6104 = vunpack.c.l.b16 %v6008
    %v6105 = vunpack.c.l.b16 %v6009
    %v6106 = vunpack.c.l.b16 %v6010
    %v6107 = vunpack.c.l.b16 %v6011
    %v6108 = vunpack.c.l.b16 %v6012
    %v6109 = vunpack.c.l.b16 %v6013
    %v6110 = vunpack.c.l.b16 %v6014
    %v6111 = vunpack.c.l.b16 %v6015
    %v6112 = vunpack.c.l.b16 %v6016
    %v6113 = vunpack.c.l.b16 %v6017
    %v6114 = vunpack.c.l.b16 %v6018
    %v6115 = vunpack.c.l.b16 %v6019
    %v6116 = vunpack.c.l.b16 %v6020
    %v6117 = vunpack.c.l.b16 %v6021
    %v6118 = vunpack.c.l.b16 %v6022
    %v6119 = vpack.c.b16 %v6104, %v6103
    %v6120 = vpack.c.b16 %v6106, %v6105
    %v6121 = vpack.c.b16 %v6108, %v6107
    %v6122 = vpack.c.b16 %v6110, %v6109
    %v6123 = vpack.c.b16 %v6112, %v6111
    %v6124 = vpack.c.b16 %v6114, %v6113
    %v6125 = vpack.c.b16 %v6116, %v6115
    %v6126 = vpack.c.b16 %v6118, %v6117
    %6135 = vmatpush.bf16.msra.mxu0 %v6126
    %6136 = vmatpush.bf16.msra.mxu0 %v6125
    %6137 = vmatpush.bf16.msra.mxu0 %v6124
    %6138 = vmatpush.bf16.msra.mxu0 %v6123
    %6139 = vmatpush.bf16.msra.mxu0 %v6122
    %6140 = vmatpush.bf16.msra.mxu0 %v6121
    %6141 = vmatpush.bf16.msra.mxu0 %v6120
    %6142 = vmatpush.bf16.msra.mxu0 %v6119
    %6143 = vmatmul.bf16.gmra.mxu0 %v6055
    %v6144 = vpop.f32.mrf.mxu0
    %v6145 = vadd.f32 0.0, %v6144
    %v6146 = vpop.f32.mrf.mxu0
    %6147 = vmatmul.bf16.gmra.mxu0 %v6056
    %v6148 = vpop.f32.mrf.mxu0
    %v6149 = vadd.f32 0.0, %v6148
    %v6150 = vpop.f32.mrf.mxu0
    %6151 = vmatmul.bf16.gmra.mxu0 %v6057
    %v6152 = vpop.f32.mrf.mxu0
    %v6153 = vadd.f32 0.0, %v6152
    %v6154 = vpop.f32.mrf.mxu0
    %6155 = vmatmul.bf16.gmra.mxu0 %v6058
    %v6156 = vpop.f32.mrf.mxu0
    %v6157 = vadd.f32 0.0, %v6156
    %v6158 = vpop.f32.mrf.mxu0
    %6159 = vmatmul.bf16.gmra.mxu0 %v6059
    %v6160 = vpop.f32.mrf.mxu0
    %v6161 = vadd.f32 0.0, %v6160
    %v6162 = vpop.f32.mrf.mxu0
    %6163 = vmatmul.bf16.gmra.mxu0 %v6060
    %v6164 = vpop.f32.mrf.mxu0
    %v6165 = vadd.f32 0.0, %v6164
    %v6166 = vpop.f32.mrf.mxu0
    %6167 = vmatmul.bf16.gmra.mxu0 %v6061
    %v6168 = vpop.f32.mrf.mxu0
    %v6169 = vadd.f32 0.0, %v6168
    %v6170 = vpop.f32.mrf.mxu0
    %6171 = vmatmul.bf16.gmra.mxu0 %v6062
    %v6172 = vpop.f32.mrf.mxu0
    %v6173 = vadd.f32 0.0, %v6172
    %v6174 = vpop.f32.mrf.mxu0
    %6175 = vmatmul.bf16.gmra.mxu0 %v6063
    %v6176 = vpop.f32.mrf.mxu0
    %v6177 = vadd.f32 0.0, %v6176
    %v6178 = vpop.f32.mrf.mxu0
    %6179 = vmatmul.bf16.gmra.mxu0 %v6064
    %v6180 = vpop.f32.mrf.mxu0
    %v6181 = vadd.f32 0.0, %v6180
    %v6182 = vpop.f32.mrf.mxu0
    %6183 = vmatmul.bf16.gmra.mxu0 %v6065
    %v6184 = vpop.f32.mrf.mxu0
    %v6185 = vadd.f32 0.0, %v6184
    %v6186 = vpop.f32.mrf.mxu0
    %6187 = vmatmul.bf16.gmra.mxu0 %v6066
    %v6188 = vpop.f32.mrf.mxu0
    %v6189 = vadd.f32 0.0, %v6188
    %v6190 = vpop.f32.mrf.mxu0
    %6191 = vmatmul.bf16.gmra.mxu0 %v6067
    %v6192 = vpop.f32.mrf.mxu0
    %v6193 = vadd.f32 0.0, %v6192
    %v6194 = vpop.f32.mrf.mxu0
    %6195 = vmatmul.bf16.gmra.mxu0 %v6068
    %v6196 = vpop.f32.mrf.mxu0
    %v6197 = vadd.f32 0.0, %v6196
    %v6198 = vpop.f32.mrf.mxu0
    %6199 = vmatmul.bf16.gmra.mxu0 %v6069
    %v6200 = vpop.f32.mrf.mxu0
    %v6201 = vadd.f32 0.0, %v6200
    %v6202 = vpop.f32.mrf.mxu0
    %6203 = vmatmul.bf16.gmra.mxu0 %v6070
    %v6204 = vpop.f32.mrf.mxu0
    %v6205 = vadd.f32 0.0, %v6204
    %v6206 = vpop.f32.mrf.mxu0
    %6207 = vdwg.mxu0
    %v6208 = vadd.f32 %v5783, %v6145
    %v6209 = vadd.f32 %v5787, %v6149
    %v6210 = vadd.f32 %v5791, %v6153
    %v6211 = vadd.f32 %v5795, %v6157
    %v6212 = vadd.f32 %v5799, %v6161
    %v6213 = vadd.f32 %v5803, %v6165
    %v6214 = vadd.f32 %v5807, %v6169
    %v6215 = vadd.f32 %v5811, %v6173
    %v6216 = vadd.f32 %v5815, %v6177
    %v6217 = vadd.f32 %v5819, %v6181
    %v6218 = vadd.f32 %v5823, %v6185
    %v6219 = vadd.f32 %v5827, %v6189
    %v6220 = vadd.f32 %v5831, %v6193
    %v6221 = vadd.f32 %v5835, %v6197
    %v6222 = vadd.f32 %v5839, %v6201
    %v6223 = vadd.f32 %v5843, %v6205
    %v6224 = vld [vmem:[#allocation9 + $0x3] sm:$0x1]
    %v6225 = vperm.slane %v6224, 0
    %v6226 = vadd.f32 %v6208, %v6225
    %v6227 = vadd.f32 %v6209, %v6225
    %v6228 = vadd.f32 %v6210, %v6225
    %v6229 = vadd.f32 %v6211, %v6225
    %v6230 = vadd.f32 %v6212, %v6225
    %v6231 = vadd.f32 %v6213, %v6225
    %v6232 = vadd.f32 %v6214, %v6225
    %v6233 = vadd.f32 %v6215, %v6225
    %v6234 = vadd.f32 %v6216, %v6225
    %v6235 = vadd.f32 %v6217, %v6225
    %v6236 = vadd.f32 %v6218, %v6225
    %v6237 = vadd.f32 %v6219, %v6225
    %v6238 = vadd.f32 %v6220, %v6225
    %v6239 = vadd.f32 %v6221, %v6225
    %v6240 = vadd.f32 %v6222, %v6225
    %v6241 = vadd.f32 %v6223, %v6225
    %v6242 = vmax.f32 %v6226, 0.0
    %v6243 = vmax.f32 %v6227, 0.0
    %v6244 = vmax.f32 %v6228, 0.0
    %v6245 = vmax.f32 %v6229, 0.0
    %v6246 = vmax.f32 %v6230, 0.0
    %v6247 = vmax.f32 %v6231, 0.0
    %v6248 = vmax.f32 %v6232, 0.0
    %v6249 = vmax.f32 %v6233, 0.0
    %v6250 = vmax.f32 %v6234, 0.0
    %v6251 = vmax.f32 %v6235, 0.0
    %v6252 = vmax.f32 %v6236, 0.0
    %v6253 = vmax.f32 %v6237, 0.0
    %v6254 = vmax.f32 %v6238, 0.0
    %v6255 = vmax.f32 %v6239, 0.0
    %v6256 = vmax.f32 %v6240, 0.0
    %v6257 = vmax.f32 %v6241, 0.0
    %vm6258 = vcmask 1046528
    %v6259 = vsel %vm6258, %v6242, -inf
    %v6260 = vrot.slane %v6259, 4
    %v6261 = vmax.f32 %v6259, %v6260
    %v6262 = vrot.slane %v6261, 2
    %v6263 = vmax.f32 %v6261, %v6262
    %v6264 = vrot.slane %v6263, 1
    %v6265 = vmax.f32 %v6263, %v6264
    %v6266 = vsel %vm6258, %v6243, -inf
    %v6267 = vrot.slane %v6266, 4
    %v6268 = vmax.f32 %v6266, %v6267
    %v6269 = vrot.slane %v6268, 2
    %v6270 = vmax.f32 %v6268, %v6269
    %v6271 = vrot.slane %v6270, 1
    %v6272 = vmax.f32 %v6270, %v6271
    %v6273 = vsel %vm6258, %v6244, -inf
    %v6274 = vrot.slane %v6273, 4
    %v6275 = vmax.f32 %v6273, %v6274
    %v6276 = vrot.slane %v6275, 2
    %v6277 = vmax.f32 %v6275, %v6276
    %v6278 = vrot.slane %v6277, 1
    %v6279 = vmax.f32 %v6277, %v6278
    %v6280 = vsel %vm6258, %v6245, -inf
    %v6281 = vrot.slane %v6280, 4
    %v6282 = vmax.f32 %v6280, %v6281
    %v6283 = vrot.slane %v6282, 2
    %v6284 = vmax.f32 %v6282, %v6283
    %v6285 = vrot.slane %v6284, 1
    %v6286 = vmax.f32 %v6284, %v6285
    %v6287 = vsel %vm6258, %v6246, -inf
    %v6288 = vrot.slane %v6287, 4
    %v6289 = vmax.f32 %v6287, %v6288
    %v6290 = vrot.slane %v6289, 2
    %v6291 = vmax.f32 %v6289, %v6290
    %v6292 = vrot.slane %v6291, 1
    %v6293 = vmax.f32 %v6291, %v6292
    %v6294 = vsel %vm6258, %v6247, -inf
    %v6295 = vrot.slane %v6294, 4
    %v6296 = vmax.f32 %v6294, %v6295
    %v6297 = vrot.slane %v6296, 2
    %v6298 = vmax.f32 %v6296, %v6297
    %v6299 = vrot.slane %v6298, 1
    %v6300 = vmax.f32 %v6298, %v6299
    %v6301 = vsel %vm6258, %v6248, -inf
    %v6302 = vrot.slane %v6301, 4
    %v6303 = vmax.f32 %v6301, %v6302
    %v6304 = vrot.slane %v6303, 2
    %v6305 = vmax.f32 %v6303, %v6304
    %v6306 = vrot.slane %v6305, 1
    %v6307 = vmax.f32 %v6305, %v6306
    %v6308 = vsel %vm6258, %v6249, -inf
    %v6309 = vrot.slane %v6308, 4
    %v6310 = vmax.f32 %v6308, %v6309
    %v6311 = vrot.slane %v6310, 2
    %v6312 = vmax.f32 %v6310, %v6311
    %v6313 = vrot.slane %v6312, 1
    %v6314 = vmax.f32 %v6312, %v6313
    %v6315 = vsel %vm6258, %v6250, -inf
    %v6316 = vrot.slane %v6315, 4
    %v6317 = vmax.f32 %v6315, %v6316
    %v6318 = vrot.slane %v6317, 2
    %v6319 = vmax.f32 %v6317, %v6318
    %v6320 = vrot.slane %v6319, 1
    %v6321 = vmax.f32 %v6319, %v6320
    %v6322 = vsel %vm6258, %v6251, -inf
    %v6323 = vrot.slane %v6322, 4
    %v6324 = vmax.f32 %v6322, %v6323
    %v6325 = vrot.slane %v6324, 2
    %v6326 = vmax.f32 %v6324, %v6325
    %v6327 = vrot.slane %v6326, 1
    %v6328 = vmax.f32 %v6326, %v6327
    %v6329 = vsel %vm6258, %v6252, -inf
    %v6330 = vrot.slane %v6329, 4
    %v6331 = vmax.f32 %v6329, %v6330
    %v6332 = vrot.slane %v6331, 2
    %v6333 = vmax.f32 %v6331, %v6332
    %v6334 = vrot.slane %v6333, 1
    %v6335 = vmax.f32 %v6333, %v6334
    %v6336 = vsel %vm6258, %v6253, -inf
    %v6337 = vrot.slane %v6336, 4
    %v6338 = vmax.f32 %v6336, %v6337
    %v6339 = vrot.slane %v6338, 2
    %v6340 = vmax.f32 %v6338, %v6339
    %v6341 = vrot.slane %v6340, 1
    %v6342 = vmax.f32 %v6340, %v6341
    %v6343 = vsel %vm6258, %v6254, -inf
    %v6344 = vrot.slane %v6343, 4
    %v6345 = vmax.f32 %v6343, %v6344
    %v6346 = vrot.slane %v6345, 2
    %v6347 = vmax.f32 %v6345, %v6346
    %v6348 = vrot.slane %v6347, 1
    %v6349 = vmax.f32 %v6347, %v6348
    %v6350 = vsel %vm6258, %v6255, -inf
    %v6351 = vrot.slane %v6350, 4
    %v6352 = vmax.f32 %v6350, %v6351
    %v6353 = vrot.slane %v6352, 2
    %v6354 = vmax.f32 %v6352, %v6353
    %v6355 = vrot.slane %v6354, 1
    %v6356 = vmax.f32 %v6354, %v6355
    %v6357 = vsel %vm6258, %v6256, -inf
    %v6358 = vrot.slane %v6357, 4
    %v6359 = vmax.f32 %v6357, %v6358
    %v6360 = vrot.slane %v6359, 2
    %v6361 = vmax.f32 %v6359, %v6360
    %v6362 = vrot.slane %v6361, 1
    %v6363 = vmax.f32 %v6361, %v6362
    %v6364 = vsel %vm6258, %v6257, -inf
    %v6365 = vrot.slane %v6364, 4
    %v6366 = vmax.f32 %v6364, %v6365
    %v6367 = vrot.slane %v6366, 2
    %v6368 = vmax.f32 %v6366, %v6367
    %v6369 = vrot.slane %v6368, 1
    %v6370 = vmax.f32 %v6368, %v6369
    %v6371 = vpack.c.bf16 %v6265, %v6265
    %v6372 = vpack.c.bf16 %v6272, %v6272
    %v6373 = vpack.c.bf16 %v6279, %v6279
    %v6374 = vpack.c.bf16 %v6286, %v6286
    %v6375 = vpack.c.bf16 %v6293, %v6293
    %v6376 = vpack.c.bf16 %v6300, %v6300
    %v6377 = vpack.c.bf16 %v6307, %v6307
    %v6378 = vpack.c.bf16 %v6314, %v6314
    %v6379 = vpack.c.bf16 %v6321, %v6321
    %v6380 = vpack.c.bf16 %v6328, %v6328
    %v6381 = vpack.c.bf16 %v6335, %v6335
    %v6382 = vpack.c.bf16 %v6342, %v6342
    %v6383 = vpack.c.bf16 %v6349, %v6349
    %v6384 = vpack.c.bf16 %v6356, %v6356
    %v6385 = vpack.c.bf16 %v6363, %v6363
    %v6386 = vpack.c.bf16 %v6370, %v6370
    %v6387 = vld [vmem:[#allocation10] sm:$0xff]
    %v6388 = vld [vmem:[#allocation10 + $0x8] sm:$0xff]
    %v6389 = vld [vmem:[#allocation10 + $0x10] sm:$0xff]
    %v6390 = vld [vmem:[#allocation10 + $0x18] sm:$0xff]
    %v6391 = vld [vmem:[#allocation10 + $0x20] sm:$0xff]
    %v6392 = vld [vmem:[#allocation10 + $0x28] sm:$0xff]
    %v6393 = vld [vmem:[#allocation10 + $0x30] sm:$0xff]
    %v6394 = vld [vmem:[#allocation10 + $0x38] sm:$0xff]
    %v6395 = vld [vmem:[#allocation10 + $0x40] sm:$0xff]
    %v6396 = vld [vmem:[#allocation10 + $0x48] sm:$0xff]
    %v6397 = vld [vmem:[#allocation10 + $0x50] sm:$0xff]
    %v6398 = vld [vmem:[#allocation10 + $0x58] sm:$0xff]
    %v6399 = vld [vmem:[#allocation10 + $0x60] sm:$0xff]
    %v6400 = vld [vmem:[#allocation10 + $0x68] sm:$0xff]
    %v6401 = vld [vmem:[#allocation10 + $0x70] sm:$0xff]
    %v6402 = vld [vmem:[#allocation10 + $0x78] sm:$0xff]
    %v6403 = vld [vmem:[#allocation10 + $0x80] sm:$0xff]
    %v6404 = vld [vmem:[#allocation10 + $0x88] sm:$0xff]
    %v6405 = vld [vmem:[#allocation10 + $0x90] sm:$0xff]
    %v6406 = vld [vmem:[#allocation10 + $0x98] sm:$0xff]
    %v6407 = vld [vmem:[#allocation10 + $0xa0] sm:$0xff]
    %v6408 = vld [vmem:[#allocation10 + $0xa8] sm:$0xff]
    %v6409 = vld [vmem:[#allocation10 + $0xb0] sm:$0xff]
    %v6410 = vld [vmem:[#allocation10 + $0xb8] sm:$0xff]
    %v6411 = vld [vmem:[#allocation10 + $0xc0] sm:$0xff]
    %v6412 = vld [vmem:[#allocation10 + $0xc8] sm:$0xff]
    %v6413 = vld [vmem:[#allocation10 + $0xd0] sm:$0xff]
    %v6414 = vld [vmem:[#allocation10 + $0xd8] sm:$0xff]
    %v6415 = vld [vmem:[#allocation10 + $0xe0] sm:$0xff]
    %v6416 = vld [vmem:[#allocation10 + $0xe8] sm:$0xff]
    %v6417 = vld [vmem:[#allocation10 + $0xf0] sm:$0xff]
    %v6418 = vld [vmem:[#allocation10 + $0xf8] sm:$0xff]
    %v6419 = vld [vmem:[#allocation12] sm:$0xf]
    %v6421 = vperm.slane %v6419, 0
    %v6422 = vperm.slane %v6419, 1
    %v6423 = vperm.slane %v6419, 2
    %v6424 = vperm.slane %v6419, 3
    %v6445 = vunpack.c.l.b16 %v6371
    %v6446 = vunpack.c.l.b16 %v6372
    %v6447 = vunpack.c.l.b16 %v6373
    %v6448 = vunpack.c.l.b16 %v6374
    %v6449 = vunpack.c.l.b16 %v6375
    %v6450 = vunpack.c.l.b16 %v6376
    %v6451 = vunpack.c.l.b16 %v6377
    %v6452 = vunpack.c.l.b16 %v6378
    %v6453 = vunpack.c.l.b16 %v6379
    %v6454 = vunpack.c.l.b16 %v6380
    %v6455 = vunpack.c.l.b16 %v6381
    %v6456 = vunpack.c.l.b16 %v6382
    %v6457 = vunpack.c.l.b16 %v6383
    %v6458 = vunpack.c.l.b16 %v6384
    %v6459 = vunpack.c.l.b16 %v6385
    %v6460 = vunpack.c.l.b16 %v6386
    %vm6461 = vcmask 1041409
    %v6462 = vsel %vm6461, %v6446, %v6445
    %vm6463 = vcmask 1042434
    %v6464 = vsel %vm6463, %v6447, %v6462
    %vm6465 = vcmask 1043459
    %v6466 = vsel %vm6465, %v6448, %v6464
    %vm6467 = vcmask 1044484
    %v6468 = vsel %vm6467, %v6449, %v6466
    %vm6469 = vcmask 1045509
    %v6470 = vsel %vm6469, %v6450, %v6468
    %vm6471 = vcmask 1046534
    %v6472 = vsel %vm6471, %v6451, %v6470
    %vm6473 = vcmask 1047559
    %v6474 = vsel %vm6473, %v6452, %v6472
    %v6475 = vsel %vm6461, %v6454, %v6453
    %v6476 = vsel %vm6463, %v6455, %v6475
    %v6477 = vsel %vm6465, %v6456, %v6476
    %v6478 = vsel %vm6467, %v6457, %v6477
    %v6479 = vsel %vm6469, %v6458, %v6478
    %v6480 = vsel %vm6471, %v6459, %v6479
    %v6481 = vsel %vm6473, %v6460, %v6480
    %v6482 = vpack.c.b16 %v6481, %v6474
    %v6516 = vunpack.c.l.b16 %v6387
    %v6517 = vunpack.c.h.b16 %v6387
    %v6518 = vunpack.c.l.b16 %v6388
    %v6519 = vunpack.c.h.b16 %v6388
    %v6520 = vunpack.c.l.b16 %v6389
    %v6521 = vunpack.c.h.b16 %v6389
    %v6522 = vunpack.c.l.b16 %v6390
    %v6523 = vunpack.c.h.b16 %v6390
    %v6524 = vunpack.c.l.b16 %v6391
    %v6525 = vunpack.c.h.b16 %v6391
    %v6526 = vunpack.c.l.b16 %v6392
    %v6527 = vunpack.c.h.b16 %v6392
    %v6528 = vunpack.c.l.b16 %v6393
    %v6529 = vunpack.c.h.b16 %v6393
    %v6530 = vunpack.c.l.b16 %v6394
    %v6531 = vunpack.c.h.b16 %v6394
    %v6532 = vunpack.c.l.b16 %v6395
    %v6533 = vunpack.c.h.b16 %v6395
    %v6534 = vunpack.c.l.b16 %v6396
    %v6535 = vunpack.c.h.b16 %v6396
    %v6536 = vunpack.c.l.b16 %v6397
    %v6537 = vunpack.c.h.b16 %v6397
    %v6538 = vunpack.c.l.b16 %v6398
    %v6539 = vunpack.c.h.b16 %v6398
    %v6540 = vunpack.c.l.b16 %v6399
    %v6541 = vunpack.c.h.b16 %v6399
    %v6542 = vunpack.c.l.b16 %v6400
    %v6543 = vunpack.c.h.b16 %v6400
    %v6544 = vunpack.c.l.b16 %v6401
    %v6545 = vunpack.c.h.b16 %v6401
    %v6546 = vunpack.c.l.b16 %v6402
    %v6547 = vunpack.c.h.b16 %v6402
    %v6548 = vunpack.c.l.b16 %v6403
    %v6549 = vunpack.c.h.b16 %v6403
    %v6550 = vunpack.c.l.b16 %v6404
    %v6551 = vunpack.c.h.b16 %v6404
    %v6552 = vunpack.c.l.b16 %v6405
    %v6553 = vunpack.c.h.b16 %v6405
    %v6554 = vunpack.c.l.b16 %v6406
    %v6555 = vunpack.c.h.b16 %v6406
    %v6556 = vunpack.c.l.b16 %v6407
    %v6557 = vunpack.c.h.b16 %v6407
    %v6558 = vunpack.c.l.b16 %v6408
    %v6559 = vunpack.c.h.b16 %v6408
    %v6560 = vunpack.c.l.b16 %v6409
    %v6561 = vunpack.c.h.b16 %v6409
    %v6562 = vunpack.c.l.b16 %v6410
    %v6563 = vunpack.c.h.b16 %v6410
    %v6564 = vunpack.c.l.b16 %v6411
    %v6565 = vunpack.c.h.b16 %v6411
    %v6566 = vunpack.c.l.b16 %v6412
    %v6567 = vunpack.c.h.b16 %v6412
    %v6568 = vunpack.c.l.b16 %v6413
    %v6569 = vunpack.c.h.b16 %v6413
    %v6570 = vunpack.c.l.b16 %v6414
    %v6571 = vunpack.c.h.b16 %v6414
    %v6572 = vunpack.c.l.b16 %v6415
    %v6573 = vunpack.c.h.b16 %v6415
    %v6574 = vunpack.c.l.b16 %v6416
    %v6575 = vunpack.c.h.b16 %v6416
    %v6576 = vunpack.c.l.b16 %v6417
    %v6577 = vunpack.c.h.b16 %v6417
    %v6578 = vunpack.c.l.b16 %v6418
    %v6579 = vunpack.c.h.b16 %v6418
    %v6580 = vpack.c.b16 %v6520, %v6516
    %v6581 = vpack.c.b16 %v6521, %v6517
    %v6582 = vpack.c.b16 %v6522, %v6518
    %v6583 = vpack.c.b16 %v6523, %v6519
    %v6584 = vpack.c.b16 %v6528, %v6524
    %v6585 = vpack.c.b16 %v6529, %v6525
    %v6586 = vpack.c.b16 %v6530, %v6526
    %v6587 = vpack.c.b16 %v6531, %v6527
    %v6588 = vpack.c.b16 %v6536, %v6532
    %v6589 = vpack.c.b16 %v6537, %v6533
    %v6590 = vpack.c.b16 %v6538, %v6534
    %v6591 = vpack.c.b16 %v6539, %v6535
    %v6592 = vpack.c.b16 %v6544, %v6540
    %v6593 = vpack.c.b16 %v6545, %v6541
    %v6594 = vpack.c.b16 %v6546, %v6542
    %v6595 = vpack.c.b16 %v6547, %v6543
    %v6596 = vpack.c.b16 %v6552, %v6548
    %v6597 = vpack.c.b16 %v6553, %v6549
    %v6598 = vpack.c.b16 %v6554, %v6550
    %v6599 = vpack.c.b16 %v6555, %v6551
    %v6600 = vpack.c.b16 %v6560, %v6556
    %v6601 = vpack.c.b16 %v6561, %v6557
    %v6602 = vpack.c.b16 %v6562, %v6558
    %v6603 = vpack.c.b16 %v6563, %v6559
    %v6604 = vpack.c.b16 %v6568, %v6564
    %v6605 = vpack.c.b16 %v6569, %v6565
    %v6606 = vpack.c.b16 %v6570, %v6566
    %v6607 = vpack.c.b16 %v6571, %v6567
    %v6608 = vpack.c.b16 %v6576, %v6572
    %v6609 = vpack.c.b16 %v6577, %v6573
    %v6610 = vpack.c.b16 %v6578, %v6574
    %v6611 = vpack.c.b16 %v6579, %v6575
    %6644 = vmatpush.bf16.msra.mxu0 %v6608
    %6645 = vmatpush.bf16.msra.mxu0 %v6604
    %6646 = vmatpush.bf16.msra.mxu0 %v6600
    %6647 = vmatpush.bf16.msra.mxu0 %v6596
    %6648 = vmatpush.bf16.msra.mxu0 %v6592
    %6649 = vmatpush.bf16.msra.mxu0 %v6588
    %6650 = vmatpush.bf16.msra.mxu0 %v6584
    %6651 = vmatpush.bf16.msra.mxu0 %v6580
    %6652 = vmatmul.bf16.gmra.mxu0 %v6482
    %v6653 = vpop.f32.mrf.mxu0
    %v6654 = vadd.f32 %v6421, %v6653
    %v6655 = vpop.f32.mrf.mxu0
    %v6656 = vadd.f32 %v6421, %v6655
    %6657 = vdwg.mxu0
    %6658 = vmatpush.bf16.msra.mxu0 %v6609
    %6659 = vmatpush.bf16.msra.mxu0 %v6605
    %6660 = vmatpush.bf16.msra.mxu0 %v6601
    %6661 = vmatpush.bf16.msra.mxu0 %v6597
    %6662 = vmatpush.bf16.msra.mxu0 %v6593
    %6663 = vmatpush.bf16.msra.mxu0 %v6589
    %6664 = vmatpush.bf16.msra.mxu0 %v6585
    %6665 = vmatpush.bf16.msra.mxu0 %v6581
    %6666 = vmatmul.bf16.gmra.mxu0 %v6482
    %v6667 = vpop.f32.mrf.mxu0
    %v6668 = vadd.f32 %v6422, %v6667
    %v6669 = vpop.f32.mrf.mxu0
    %v6670 = vadd.f32 %v6422, %v6669
    %6671 = vdwg.mxu0
    %6672 = vmatpush.bf16.msra.mxu0 %v6610
    %6673 = vmatpush.bf16.msra.mxu0 %v6606
    %6674 = vmatpush.bf16.msra.mxu0 %v6602
    %6675 = vmatpush.bf16.msra.mxu0 %v6598
    %6676 = vmatpush.bf16.msra.mxu0 %v6594
    %6677 = vmatpush.bf16.msra.mxu0 %v6590
    %6678 = vmatpush.bf16.msra.mxu0 %v6586
    %6679 = vmatpush.bf16.msra.mxu0 %v6582
    %6680 = vmatmul.bf16.gmra.mxu0 %v6482
    %v6681 = vpop.f32.mrf.mxu0
    %v6682 = vadd.f32 %v6423, %v6681
    %v6683 = vpop.f32.mrf.mxu0
    %v6684 = vadd.f32 %v6423, %v6683
    %6685 = vdwg.mxu0
    %6686 = vmatpush.bf16.msra.mxu0 %v6611
    %6687 = vmatpush.bf16.msra.mxu0 %v6607
    %6688 = vmatpush.bf16.msra.mxu0 %v6603
    %6689 = vmatpush.bf16.msra.mxu0 %v6599
    %6690 = vmatpush.bf16.msra.mxu0 %v6595
    %6691 = vmatpush.bf16.msra.mxu0 %v6591
    %6692 = vmatpush.bf16.msra.mxu0 %v6587
    %6693 = vmatpush.bf16.msra.mxu0 %v6583
    %6694 = vmatmul.bf16.gmra.mxu0 %v6482
    %v6695 = vpop.f32.mrf.mxu0
    %v6696 = vadd.f32 %v6424, %v6695
    %v6697 = vpop.f32.mrf.mxu0
    %v6698 = vadd.f32 %v6424, %v6697
    %6699 = vdwg.mxu0
    %v6700 = vtanh.pop %v6654
    %v6701 = vtanh.pop %v6668
    %v6702 = vtanh.pop %v6682
    %v6703 = vtanh.pop %v6696
    %v6704 = vtanh.pop %v6656
    %v6705 = vtanh.pop %v6670
    %v6706 = vtanh.pop %v6684
    %v6707 = vtanh.pop %v6698
    %v6708 = vpack.c.bf16 %v6701, %v6700
    %v6709 = vpack.c.bf16 %v6703, %v6702
    %v6710 = vpack.c.bf16 %v6705, %v6704
    %v6711 = vpack.c.bf16 %v6707, %v6706
    %6712 = vst [vmem:[#allocation13] sm:$0xff] %v6708
    %6713 = vst [vmem:[#allocation13 + $0x8] sm:$0xff] %v6709
    %6714 = vst [vmem:[#allocation13 + $0x10] sm:$0xff] %v6710
    %6715 = vst [vmem:[#allocation13 + $0x18] sm:$0xff] %v6711
    // Predicated region
    $region42: #{tpu_custom_call.1} parent=1 // pred_check
      _
    $region43: #{tpu_custom_call.1} parent=1 // pred_check_branch
      %6717 = sbr.rel (0) target = $region45
    $region44: #{tpu_custom_call.1} parent=1 // pred_region
      %6719 = vsyncadd [#allocation6], 0
      %s6720 = sshll.u32 [#allocation13], 4
      %s6721 = int_to_ptr.vmem [resolvable:$true] %s6720
      %s6722 = sshll.u32 %s5, 4
      %s6723 = int_to_ptr.hbm [resolvable:$true] %s6722
      %6728 = dma.vmem_to_hbm [thread:$0]  %s6721, 512, %s6723, [#allocation6], 256, 256, 16
    $region45: #{tpu_custom_call.1} parent=1 // pred_fallthru
      _
    // Predicated region
    $region46: #{tpu_custom_call.1} parent=1 // pred_check
      _
    $region47: #{tpu_custom_call.1} parent=1 // pred_check_branch
      %6730 = sbr.rel (0) target = $region49
    $region48: #{tpu_custom_call.1} parent=1 // pred_region
      %6732 = dma.done [#allocation6], 512
    $region49: #{tpu_custom_call.1} parent=1 // pred_fallthru
      _
    %6733 = vsyncpa [#allocation5], 1
    %6734 = vsyncpa [#allocation8], 1
    %6735 = vsyncpa [#allocation11], 1
    %6736 = vsyncpa [#allocation6], 1

</llo_original>
